<compile_context>
chip_gen: v7x
topology: tpu7x:2x2x1
jax: 0.10.0
libtpu: 0.0.40
codegen_flags: <defaults>
</compile_context>

<pallas_src>
import jax
import jax.numpy as jnp
from jax.experimental import pallas as pl
from jax.experimental.pallas import tpu as pltpu


def _round_up(x, m):
    return (x + m - 1) // m * m


def _row_tiling(m, max_tile):
    """Pick a row tile (multiple of 8) and the padded row count it divides."""
    tile = min(max_tile, _round_up(m, 8))
    return tile, _round_up(m, tile)


# ---------------------------------------------------------------------------
# Fused conv (im2col matmul) + bias + ReLU + 2x2 max-pool kernel.
# ---------------------------------------------------------------------------
def _conv_relu_pool_kernel(p00_ref, p01_ref, p10_ref, p11_ref, w_ref, b_ref, o_ref):
    w = w_ref[...]
    b = b_ref[...]

    def conv_relu(p_ref):
        y = jnp.dot(p_ref[...], w, preferred_element_type=jnp.float32) + b
        return jnp.maximum(y, 0.0)

    pooled = jnp.maximum(jnp.maximum(conv_relu(p00_ref), conv_relu(p01_ref)),
                         jnp.maximum(conv_relu(p10_ref), conv_relu(p11_ref)))
    o_ref[...] = pooled.astype(o_ref.dtype)


def conv2d_relu_pool(x, w2d, b2d, kh, kw, *, max_tile=1024):
    """VALID conv (stride 1) + ReLU + MaxPool(2,2), channels-last.

    x   : (N, H, W, Cin)
    w2d : (kh*kw*Cin, Cout), rows ordered (kh, kw, Cin) -- see prepare_params.
    b2d : (1, Cout) float32
    returns (N, Hp, Wp, Cout) in x.dtype, Hp=(H-kh+1)//2, Wp=(W-kw+1)//2.
    """
    N, H, W, Cin = x.shape
    K, Cout = w2d.shape
    Ho, Wo = H - kh + 1, W - kw + 1
    Hp, Wp = Ho // 2, Wo // 2
    M = N * Hp * Wp

    def patches(di, dj):
        # im2col restricted to conv positions (2*ph+di, 2*pw+dj): one patch
        # matrix per pool-window offset; feature order (kh, kw, Cin).
        cols = [x[:, di + i: di + i + 2 * Hp: 2, dj + j: dj + j + 2 * Wp: 2, :]
                for i in range(kh) for j in range(kw)]
        return jnp.concatenate(cols, axis=-1).reshape(M, K)

    p = [patches(di, dj) for di in (0, 1) for dj in (0, 1)]

    tile, m_pad = _row_tiling(M, max_tile)
    if m_pad != M:
        p = [jnp.pad(q, ((0, m_pad - M), (0, 0))) for q in p]

    row_spec = pl.BlockSpec((tile, K), lambda i: (i, 0))
    out = pl.pallas_call(
        _conv_relu_pool_kernel,
        out_shape=jax.ShapeDtypeStruct((m_pad, Cout), x.dtype),
        grid=(m_pad // tile,),
        in_specs=[row_spec, row_spec, row_spec, row_spec,
                  pl.BlockSpec((K, Cout), lambda i: (0, 0)),
                  pl.BlockSpec((1, Cout), lambda i: (0, 0))],
        out_specs=pl.BlockSpec((tile, Cout), lambda i: (i, 0)),
        compiler_params=pltpu.CompilerParams(
            dimension_semantics=("parallel",)),
    )(*p, w2d, b2d)
    return out[:M].reshape(N, Hp, Wp, Cout)


# ---------------------------------------------------------------------------
# Fused fc1(ReLU) -> fc2(ReLU) -> fc3 kernel (all weights VMEM-resident).
# ---------------------------------------------------------------------------
def _fc_stack_kernel(x_ref, w1_ref, b1_ref, w2_ref, b2_ref, w3_ref, b3_ref, o_ref):
    h = jnp.dot(x_ref[...], w1_ref[...], preferred_element_type=jnp.float32) + b1_ref[...]
    h = jnp.maximum(h, 0.0).astype(w2_ref.dtype)
    h = jnp.dot(h, w2_ref[...], preferred_element_type=jnp.float32) + b2_ref[...]
    h = jnp.maximum(h, 0.0).astype(w3_ref.dtype)
    y = jnp.dot(h, w3_ref[...], preferred_element_type=jnp.float32) + b3_ref[...]
    o_ref[...] = y.astype(o_ref.dtype)


def fc_stack(x, w1, b1, w2, b2, w3, b3, *, max_tile=512):
    M, K = x.shape
    n_out = w3.shape[1]
    tile, m_pad = _row_tiling(M, max_tile)
    if m_pad != M:
        x = jnp.pad(x, ((0, m_pad - M), (0, 0)))

    def full(a):
        return pl.BlockSpec(a.shape, lambda i: (0,) * a.ndim)

    out = pl.pallas_call(
        _fc_stack_kernel,
        out_shape=jax.ShapeDtypeStruct((m_pad, n_out), jnp.float32),
        grid=(m_pad // tile,),
        in_specs=[pl.BlockSpec((tile, K), lambda i: (i, 0)),
                  full(w1), full(b1), full(w2), full(b2), full(w3), full(b3)],
        out_specs=pl.BlockSpec((tile, n_out), lambda i: (i, 0)),
        compiler_params=pltpu.CompilerParams(
            dimension_semantics=("parallel",)),
    )(x, w1, b1, w2, b2, w3, b3)
    return out[:M]


# ---------------------------------------------------------------------------
# Parameters.
# ---------------------------------------------------------------------------
def init_params(key):
    """PyTorch-layout params, PyTorch-default U(-1/sqrt(fan_in)) init."""
    def u(k, shape, fan_in):
        bound = 1.0 / jnp.sqrt(jnp.float32(fan_in))
        return jax.random.uniform(k, shape, jnp.float32, -bound, bound)

    ks = jax.random.split(key, 10)
    return {
        "conv1_w": u(ks[0], (6, 3, 5, 5), 3 * 25),
        "conv1_b": u(ks[1], (6,), 3 * 25),
        "conv2_w": u(ks[2], (16, 6, 5, 5), 6 * 25),
        "conv2_b": u(ks[3], (16,), 6 * 25),
        "fc1_w": u(ks[4], (120, 400), 400),
        "fc1_b": u(ks[5], (120,), 400),
        "fc2_w": u(ks[6], (84, 120), 120),
        "fc2_b": u(ks[7], (84,), 120),
        "fc3_w": u(ks[8], (10, 84), 84),
        "fc3_b": u(ks[9], (10,), 84),
    }


def prepare_params(p, compute_dtype=jnp.bfloat16):
    """One-time conversion of PyTorch-layout weights into kernel-ready layout.

    * conv weights (Cout, Cin, kh, kw) -> (kh*kw*Cin, Cout), matching the
      channels-last im2col feature order used by conv2d_relu_pool.
    * fc1 columns permuted from PyTorch's (C, H, W) flatten order to the
      channels-last (H, W, C) flatten order produced by the conv stack.
    * all FC weights pre-transposed to (in, out); biases pre-shaped (1, out) f32.
    """
    def conv_w(w):
        cout, cin, kh, kw = w.shape
        return (w.transpose(2, 3, 1, 0).reshape(kh * kw * cin, cout)
                .astype(compute_dtype))

    def bias(b):
        return b.reshape(1, -1).astype(jnp.float32)

    fc1_w = (p["fc1_w"].reshape(120, 16, 5, 5).transpose(0, 2, 3, 1)
             .reshape(120, 400))
    return {
        "conv1_w": conv_w(p["conv1_w"]), "conv1_b": bias(p["conv1_b"]),
        "conv2_w": conv_w(p["conv2_w"]), "conv2_b": bias(p["conv2_b"]),
        "fc1_w": fc1_w.T.astype(compute_dtype), "fc1_b": bias(p["fc1_b"]),
        "fc2_w": p["fc2_w"].T.astype(compute_dtype), "fc2_b": bias(p["fc2_b"]),
        "fc3_w": p["fc3_w"].T.astype(compute_dtype), "fc3_b": bias(p["fc3_b"]),
    }


@jax.jit
def net_forward(kp, x_nchw):
    """x_nchw: (N, 3, 32, 32) float32 (PyTorch layout) -> logits (N, 10) f32."""
    x = x_nchw.transpose(0, 2, 3, 1).astype(kp["conv1_w"].dtype)   # NHWC, bf16
    x = conv2d_relu_pool(x, kp["conv1_w"], kp["conv1_b"], 5, 5)    # (N, 14, 14, 6)
    x = conv2d_relu_pool(x, kp["conv2_w"], kp["conv2_b"], 5, 5)    # (N, 5, 5, 16)
    x = x.reshape(x.shape[0], 5 * 5 * 16)                          # channels-last flatten
    return fc_stack(x, kp["fc1_w"], kp["fc1_b"],
                    kp["fc2_w"], kp["fc2_b"],
                    kp["fc3_w"], kp["fc3_b"])                      # (N, 10) f32


if __name__ == "__main__":
    key = jax.random.PRNGKey(0)
    pkey, xkey = jax.random.split(key)
    params = prepare_params(init_params(pkey), compute_dtype=jnp.bfloat16)
    # The module's conv/pool stack implies 3x32x32 inputs (16*5*5 flatten).
    x = jax.random.normal(xkey, (2, 3, 32, 32), jnp.float32)
    out = jax.block_until_ready(net_forward(params, x))
    assert out.shape == (2, 10) and out.dtype == jnp.float32
    print("KERNEL_OK")
</pallas_src>

<mosaic_0001>
module attributes {stable_mosaic.version = 11 : i64} {
  func.func @_conv_relu_pool_kernel(%arg0: i32, %arg1: memref<392x75xbf16, #tpu.memory_space<vmem>>, %arg2: memref<392x75xbf16, #tpu.memory_space<vmem>>, %arg3: memref<392x75xbf16, #tpu.memory_space<vmem>>, %arg4: memref<392x75xbf16, #tpu.memory_space<vmem>>, %arg5: memref<75x6xbf16, #tpu.memory_space<vmem>>, %arg6: memref<1x6xf32, #tpu.memory_space<vmem>>, %arg7: memref<392x6xbf16, #tpu.memory_space<vmem>>) attributes {dimension_semantics = [#tpu.dimension_semantics<parallel>], iteration_bounds = array<i64: 1>, scalar_prefetch = 0 : i64, scratch_operands = 0 : i64, tpu.core_type = #tpu.core_type<tc>, window_params = [{transform_indices = @transform_0, window_bounds = array<i64: 392, 75>}, {transform_indices = @transform_1, window_bounds = array<i64: 392, 75>}, {transform_indices = @transform_2, window_bounds = array<i64: 392, 75>}, {transform_indices = @transform_3, window_bounds = array<i64: 392, 75>}, {pipeline_mode = #tpu.pipeline_mode<synchronous>, transform_indices = @transform_4, window_bounds = array<i64: 75, 6>}, {pipeline_mode = #tpu.pipeline_mode<synchronous>, transform_indices = @transform_5, window_bounds = array<i64: 1, 6>}, {transform_indices = @transform_6, window_bounds = array<i64: 392, 6>}]} {
    %c0 = arith.constant 0 : index
    %c0_0 = arith.constant 0 : index
    %0 = vector.load %arg5[%c0, %c0_0] : memref<75x6xbf16, #tpu.memory_space<vmem>>, vector<75x6xbf16>
    %c0_1 = arith.constant 0 : index
    %c0_2 = arith.constant 0 : index
    %1 = vector.load %arg6[%c0_1, %c0_2] : memref<1x6xf32, #tpu.memory_space<vmem>>, vector<1x6xf32>
    %c0_3 = arith.constant 0 : index
    %c0_4 = arith.constant 0 : index
    %2 = vector.load %arg1[%c0_3, %c0_4] : memref<392x75xbf16, #tpu.memory_space<vmem>>, vector<392x75xbf16>
    %cst = arith.constant dense<0.000000e+00> : vector<392x6xf32>
    %3 = tpu.matmul %2, %0, %cst {dimension_numbers = #tpu.dot_dimension_numbers<[1], [0], [0], [1], [0, 0, 1, 1], [], []>} : vector<392x75xbf16>, vector<75x6xbf16>, vector<392x6xf32> -> vector<392x6xf32>
    %4 = vector.broadcast %1 : vector<1x6xf32> to vector<392x6xf32>
    %5 = arith.addf %3, %4 : vector<392x6xf32>
    %cst_5 = arith.constant 0.000000e+00 : f32
    %6 = vector.broadcast %cst_5 : f32 to vector<392x6xf32>
    %7 = arith.maximumf %5, %6 : vector<392x6xf32>
    %c0_6 = arith.constant 0 : index
    %c0_7 = arith.constant 0 : index
    %8 = vector.load %arg2[%c0_6, %c0_7] : memref<392x75xbf16, #tpu.memory_space<vmem>>, vector<392x75xbf16>
    %cst_8 = arith.constant dense<0.000000e+00> : vector<392x6xf32>
    %9 = tpu.matmul %8, %0, %cst_8 {dimension_numbers = #tpu.dot_dimension_numbers<[1], [0], [0], [1], [0, 0, 1, 1], [], []>} : vector<392x75xbf16>, vector<75x6xbf16>, vector<392x6xf32> -> vector<392x6xf32>
    %10 = vector.broadcast %1 : vector<1x6xf32> to vector<392x6xf32>
    %11 = arith.addf %9, %10 : vector<392x6xf32>
    %cst_9 = arith.constant 0.000000e+00 : f32
    %12 = vector.broadcast %cst_9 : f32 to vector<392x6xf32>
    %13 = arith.maximumf %11, %12 : vector<392x6xf32>
    %14 = arith.maximumf %7, %13 : vector<392x6xf32>
    %c0_10 = arith.constant 0 : index
    %c0_11 = arith.constant 0 : index
    %15 = vector.load %arg3[%c0_10, %c0_11] : memref<392x75xbf16, #tpu.memory_space<vmem>>, vector<392x75xbf16>
    %cst_12 = arith.constant dense<0.000000e+00> : vector<392x6xf32>
    %16 = tpu.matmul %15, %0, %cst_12 {dimension_numbers = #tpu.dot_dimension_numbers<[1], [0], [0], [1], [0, 0, 1, 1], [], []>} : vector<392x75xbf16>, vector<75x6xbf16>, vector<392x6xf32> -> vector<392x6xf32>
    %17 = vector.broadcast %1 : vector<1x6xf32> to vector<392x6xf32>
    %18 = arith.addf %16, %17 : vector<392x6xf32>
    %cst_13 = arith.constant 0.000000e+00 : f32
    %19 = vector.broadcast %cst_13 : f32 to vector<392x6xf32>
    %20 = arith.maximumf %18, %19 : vector<392x6xf32>
    %c0_14 = arith.constant 0 : index
    %c0_15 = arith.constant 0 : index
    %21 = vector.load %arg4[%c0_14, %c0_15] : memref<392x75xbf16, #tpu.memory_space<vmem>>, vector<392x75xbf16>
    %cst_16 = arith.constant dense<0.000000e+00> : vector<392x6xf32>
    %22 = tpu.matmul %21, %0, %cst_16 {dimension_numbers = #tpu.dot_dimension_numbers<[1], [0], [0], [1], [0, 0, 1, 1], [], []>} : vector<392x75xbf16>, vector<75x6xbf16>, vector<392x6xf32> -> vector<392x6xf32>
    %23 = vector.broadcast %1 : vector<1x6xf32> to vector<392x6xf32>
    %24 = arith.addf %22, %23 : vector<392x6xf32>
    %cst_17 = arith.constant 0.000000e+00 : f32
    %25 = vector.broadcast %cst_17 : f32 to vector<392x6xf32>
    %26 = arith.maximumf %24, %25 : vector<392x6xf32>
    %27 = arith.maximumf %20, %26 : vector<392x6xf32>
    %28 = arith.maximumf %14, %27 : vector<392x6xf32>
    %29 = arith.truncf %28 : vector<392x6xf32> to vector<392x6xbf16>
    %c0_18 = arith.constant 0 : index
    %c0_19 = arith.constant 0 : index
    %30 = vector.load %arg7[%c0_18, %c0_19] : memref<392x6xbf16, #tpu.memory_space<vmem>>, vector<392x6xbf16>
    tpu.vector_store %arg7[%c0_18, %c0_19], %29 {strides = array<i32>} : memref<392x6xbf16, #tpu.memory_space<vmem>>, vector<392x6xbf16>,
    return
  }
  func.func @transform_0(%arg0: i32) -> (i32, i32) {
    %c0_i32 = arith.constant 0 : i32
    %c0_i32_0 = arith.constant 0 : i32
    return %arg0, %c0_i32 : i32, i32
  }
  func.func @transform_1(%arg0: i32) -> (i32, i32) {
    %c0_i32 = arith.constant 0 : i32
    %c0_i32_0 = arith.constant 0 : i32
    return %arg0, %c0_i32 : i32, i32
  }
  func.func @transform_2(%arg0: i32) -> (i32, i32) {
    %c0_i32 = arith.constant 0 : i32
    %c0_i32_0 = arith.constant 0 : i32
    return %arg0, %c0_i32 : i32, i32
  }
  func.func @transform_3(%arg0: i32) -> (i32, i32) {
    %c0_i32 = arith.constant 0 : i32
    %c0_i32_0 = arith.constant 0 : i32
    return %arg0, %c0_i32 : i32, i32
  }
  func.func @transform_4(%arg0: i32) -> (i32, i32) {
    %c0_i32 = arith.constant 0 : i32
    %c0_i32_0 = arith.constant 0 : i32
    %c0_i32_1 = arith.constant 0 : i32
    return %c0_i32, %c0_i32_0 : i32, i32
  }
  func.func @transform_5(%arg0: i32) -> (i32, i32) {
    %c0_i32 = arith.constant 0 : i32
    %c0_i32_0 = arith.constant 0 : i32
    %c0_i32_1 = arith.constant 0 : i32
    return %c0_i32, %c0_i32_0 : i32, i32
  }
  func.func @transform_6(%arg0: i32) -> (i32, i32) {
    %c0_i32 = arith.constant 0 : i32
    %c0_i32_0 = arith.constant 0 : i32
    return %arg0, %c0_i32 : i32, i32
  }
}

module attributes {stable_mosaic.version = 11 : i64} {
  func.func @_conv_relu_pool_kernel(%arg0: i32, %arg1: memref<56x150xbf16, #tpu.memory_space<vmem>>, %arg2: memref<56x150xbf16, #tpu.memory_space<vmem>>, %arg3: memref<56x150xbf16, #tpu.memory_space<vmem>>, %arg4: memref<56x150xbf16, #tpu.memory_space<vmem>>, %arg5: memref<150x16xbf16, #tpu.memory_space<vmem>>, %arg6: memref<1x16xf32, #tpu.memory_space<vmem>>, %arg7: memref<56x16xbf16, #tpu.memory_space<vmem>>) attributes {dimension_semantics = [#tpu.dimension_semantics<parallel>], iteration_bounds = array<i64: 1>, scalar_prefetch = 0 : i64, scratch_operands = 0 : i64, tpu.core_type = #tpu.core_type<tc>, window_params = [{transform_indices = @transform_0, window_bounds = array<i64: 56, 150>}, {transform_indices = @transform_1, window_bounds = array<i64: 56, 150>}, {transform_indices = @transform_2, window_bounds = array<i64: 56, 150>}, {transform_indices = @transform_3, window_bounds = array<i64: 56, 150>}, {pipeline_mode = #tpu.pipeline_mode<synchronous>, transform_indices = @transform_4, window_bounds = array<i64: 150, 16>}, {pipeline_mode = #tpu.pipeline_mode<synchronous>, transform_indices = @transform_5, window_bounds = array<i64: 1, 16>}, {transform_indices = @transform_6, window_bounds = array<i64: 56, 16>}]} {
    %c0 = arith.constant 0 : index
    %c0_0 = arith.constant 0 : index
    %0 = vector.load %arg5[%c0, %c0_0] : memref<150x16xbf16, #tpu.memory_space<vmem>>, vector<150x16xbf16>
    %c0_1 = arith.constant 0 : index
    %c0_2 = arith.constant 0 : index
    %1 = vector.load %arg6[%c0_1, %c0_2] : memref<1x16xf32, #tpu.memory_space<vmem>>, vector<1x16xf32>
    %c0_3 = arith.constant 0 : index
    %c0_4 = arith.constant 0 : index
    %2 = vector.load %arg1[%c0_3, %c0_4] : memref<56x150xbf16, #tpu.memory_space<vmem>>, vector<56x150xbf16>
    %cst = arith.constant dense<0.000000e+00> : vector<56x16xf32>
    %3 = tpu.matmul %2, %0, %cst {dimension_numbers = #tpu.dot_dimension_numbers<[1], [0], [0], [1], [0, 0, 1, 1], [], []>} : vector<56x150xbf16>, vector<150x16xbf16>, vector<56x16xf32> -> vector<56x16xf32>
    %4 = vector.broadcast %1 : vector<1x16xf32> to vector<56x16xf32>
    %5 = arith.addf %3, %4 : vector<56x16xf32>
    %cst_5 = arith.constant 0.000000e+00 : f32
    %6 = vector.broadcast %cst_5 : f32 to vector<56x16xf32>
    %7 = arith.maximumf %5, %6 : vector<56x16xf32>
    %c0_6 = arith.constant 0 : index
    %c0_7 = arith.constant 0 : index
    %8 = vector.load %arg2[%c0_6, %c0_7] : memref<56x150xbf16, #tpu.memory_space<vmem>>, vector<56x150xbf16>
    %cst_8 = arith.constant dense<0.000000e+00> : vector<56x16xf32>
    %9 = tpu.matmul %8, %0, %cst_8 {dimension_numbers = #tpu.dot_dimension_numbers<[1], [0], [0], [1], [0, 0, 1, 1], [], []>} : vector<56x150xbf16>, vector<150x16xbf16>, vector<56x16xf32> -> vector<56x16xf32>
    %10 = vector.broadcast %1 : vector<1x16xf32> to vector<56x16xf32>
    %11 = arith.addf %9, %10 : vector<56x16xf32>
    %cst_9 = arith.constant 0.000000e+00 : f32
    %12 = vector.broadcast %cst_9 : f32 to vector<56x16xf32>
    %13 = arith.maximumf %11, %12 : vector<56x16xf32>
    %14 = arith.maximumf %7, %13 : vector<56x16xf32>
    %c0_10 = arith.constant 0 : index
    %c0_11 = arith.constant 0 : index
    %15 = vector.load %arg3[%c0_10, %c0_11] : memref<56x150xbf16, #tpu.memory_space<vmem>>, vector<56x150xbf16>
    %cst_12 = arith.constant dense<0.000000e+00> : vector<56x16xf32>
    %16 = tpu.matmul %15, %0, %cst_12 {dimension_numbers = #tpu.dot_dimension_numbers<[1], [0], [0], [1], [0, 0, 1, 1], [], []>} : vector<56x150xbf16>, vector<150x16xbf16>, vector<56x16xf32> -> vector<56x16xf32>
    %17 = vector.broadcast %1 : vector<1x16xf32> to vector<56x16xf32>
    %18 = arith.addf %16, %17 : vector<56x16xf32>
    %cst_13 = arith.constant 0.000000e+00 : f32
    %19 = vector.broadcast %cst_13 : f32 to vector<56x16xf32>
    %20 = arith.maximumf %18, %19 : vector<56x16xf32>
    %c0_14 = arith.constant 0 : index
    %c0_15 = arith.constant 0 : index
    %21 = vector.load %arg4[%c0_14, %c0_15] : memref<56x150xbf16, #tpu.memory_space<vmem>>, vector<56x150xbf16>
    %cst_16 = arith.constant dense<0.000000e+00> : vector<56x16xf32>
    %22 = tpu.matmul %21, %0, %cst_16 {dimension_numbers = #tpu.dot_dimension_numbers<[1], [0], [0], [1], [0, 0, 1, 1], [], []>} : vector<56x150xbf16>, vector<150x16xbf16>, vector<56x16xf32> -> vector<56x16xf32>
    %23 = vector.broadcast %1 : vector<1x16xf32> to vector<56x16xf32>
    %24 = arith.addf %22, %23 : vector<56x16xf32>
    %cst_17 = arith.constant 0.000000e+00 : f32
    %25 = vector.broadcast %cst_17 : f32 to vector<56x16xf32>
    %26 = arith.maximumf %24, %25 : vector<56x16xf32>
    %27 = arith.maximumf %20, %26 : vector<56x16xf32>
    %28 = arith.maximumf %14, %27 : vector<56x16xf32>
    %29 = arith.truncf %28 : vector<56x16xf32> to vector<56x16xbf16>
    %c0_18 = arith.constant 0 : index
    %c0_19 = arith.constant 0 : index
    %30 = vector.load %arg7[%c0_18, %c0_19] : memref<56x16xbf16, #tpu.memory_space<vmem>>, vector<56x16xbf16>
    tpu.vector_store %arg7[%c0_18, %c0_19], %29 {strides = array<i32>} : memref<56x16xbf16, #tpu.memory_space<vmem>>, vector<56x16xbf16>,
    return
  }
  func.func @transform_0(%arg0: i32) -> (i32, i32) {
    %c0_i32 = arith.constant 0 : i32
    %c0_i32_0 = arith.constant 0 : i32
    return %arg0, %c0_i32 : i32, i32
  }
  func.func @transform_1(%arg0: i32) -> (i32, i32) {
    %c0_i32 = arith.constant 0 : i32
    %c0_i32_0 = arith.constant 0 : i32
    return %arg0, %c0_i32 : i32, i32
  }
  func.func @transform_2(%arg0: i32) -> (i32, i32) {
    %c0_i32 = arith.constant 0 : i32
    %c0_i32_0 = arith.constant 0 : i32
    return %arg0, %c0_i32 : i32, i32
  }
  func.func @transform_3(%arg0: i32) -> (i32, i32) {
    %c0_i32 = arith.constant 0 : i32
    %c0_i32_0 = arith.constant 0 : i32
    return %arg0, %c0_i32 : i32, i32
  }
  func.func @transform_4(%arg0: i32) -> (i32, i32) {
    %c0_i32 = arith.constant 0 : i32
    %c0_i32_0 = arith.constant 0 : i32
    %c0_i32_1 = arith.constant 0 : i32
    return %c0_i32, %c0_i32_0 : i32, i32
  }
  func.func @transform_5(%arg0: i32) -> (i32, i32) {
    %c0_i32 = arith.constant 0 : i32
    %c0_i32_0 = arith.constant 0 : i32
    %c0_i32_1 = arith.constant 0 : i32
    return %c0_i32, %c0_i32_0 : i32, i32
  }
  func.func @transform_6(%arg0: i32) -> (i32, i32) {
    %c0_i32 = arith.constant 0 : i32
    %c0_i32_0 = arith.constant 0 : i32
    return %arg0, %c0_i32 : i32, i32
  }
}

module attributes {stable_mosaic.version = 11 : i64} {
  func.func @_fc_stack_kernel(%arg0: i32, %arg1: memref<8x400xbf16, #tpu.memory_space<vmem>>, %arg2: memref<400x120xbf16, #tpu.memory_space<vmem>>, %arg3: memref<1x120xf32, #tpu.memory_space<vmem>>, %arg4: memref<120x84xbf16, #tpu.memory_space<vmem>>, %arg5: memref<1x84xf32, #tpu.memory_space<vmem>>, %arg6: memref<84x10xbf16, #tpu.memory_space<vmem>>, %arg7: memref<1x10xf32, #tpu.memory_space<vmem>>, %arg8: memref<8x10xf32, #tpu.memory_space<vmem>>) attributes {dimension_semantics = [#tpu.dimension_semantics<parallel>], iteration_bounds = array<i64: 1>, scalar_prefetch = 0 : i64, scratch_operands = 0 : i64, tpu.core_type = #tpu.core_type<tc>, window_params = [{transform_indices = @transform_0, window_bounds = array<i64: 8, 400>}, {pipeline_mode = #tpu.pipeline_mode<synchronous>, transform_indices = @transform_1, window_bounds = array<i64: 400, 120>}, {pipeline_mode = #tpu.pipeline_mode<synchronous>, transform_indices = @transform_2, window_bounds = array<i64: 1, 120>}, {pipeline_mode = #tpu.pipeline_mode<synchronous>, transform_indices = @transform_3, window_bounds = array<i64: 120, 84>}, {pipeline_mode = #tpu.pipeline_mode<synchronous>, transform_indices = @transform_4, window_bounds = array<i64: 1, 84>}, {pipeline_mode = #tpu.pipeline_mode<synchronous>, transform_indices = @transform_5, window_bounds = array<i64: 84, 10>}, {pipeline_mode = #tpu.pipeline_mode<synchronous>, transform_indices = @transform_6, window_bounds = array<i64: 1, 10>}, {transform_indices = @transform_7, window_bounds = array<i64: 8, 10>}]} {
    %c0 = arith.constant 0 : index
    %c0_0 = arith.constant 0 : index
    %0 = vector.load %arg1[%c0, %c0_0] : memref<8x400xbf16, #tpu.memory_space<vmem>>, vector<8x400xbf16>
    %c0_1 = arith.constant 0 : index
    %c0_2 = arith.constant 0 : index
    %1 = vector.load %arg2[%c0_1, %c0_2] : memref<400x120xbf16, #tpu.memory_space<vmem>>, vector<400x120xbf16>
    %cst = arith.constant dense<0.000000e+00> : vector<8x120xf32>
    %2 = tpu.matmul %0, %1, %cst {dimension_numbers = #tpu.dot_dimension_numbers<[1], [0], [0], [1], [0, 0, 1, 1], [], []>} : vector<8x400xbf16>, vector<400x120xbf16>, vector<8x120xf32> -> vector<8x120xf32>
    %c0_3 = arith.constant 0 : index
    %c0_4 = arith.constant 0 : index
    %3 = vector.load %arg3[%c0_3, %c0_4] : memref<1x120xf32, #tpu.memory_space<vmem>>, vector<1x120xf32>
    %4 = vector.broadcast %3 : vector<1x120xf32> to vector<8x120xf32>
    %5 = arith.addf %2, %4 : vector<8x120xf32>
    %cst_5 = arith.constant 0.000000e+00 : f32
    %6 = vector.broadcast %cst_5 : f32 to vector<8x120xf32>
    %7 = arith.maximumf %5, %6 : vector<8x120xf32>
    %8 = arith.truncf %7 : vector<8x120xf32> to vector<8x120xbf16>
    %c0_6 = arith.constant 0 : index
    %c0_7 = arith.constant 0 : index
    %9 = vector.load %arg4[%c0_6, %c0_7] : memref<120x84xbf16, #tpu.memory_space<vmem>>, vector<120x84xbf16>
    %cst_8 = arith.constant dense<0.000000e+00> : vector<8x84xf32>
    %10 = tpu.matmul %8, %9, %cst_8 {dimension_numbers = #tpu.dot_dimension_numbers<[1], [0], [0], [1], [0, 0, 1, 1], [], []>} : vector<8x120xbf16>, vector<120x84xbf16>, vector<8x84xf32> -> vector<8x84xf32>
    %c0_9 = arith.constant 0 : index
    %c0_10 = arith.constant 0 : index
    %11 = vector.load %arg5[%c0_9, %c0_10] : memref<1x84xf32, #tpu.memory_space<vmem>>, vector<1x84xf32>
    %12 = vector.broadcast %11 : vector<1x84xf32> to vector<8x84xf32>
    %13 = arith.addf %10, %12 : vector<8x84xf32>
    %cst_11 = arith.constant 0.000000e+00 : f32
    %14 = vector.broadcast %cst_11 : f32 to vector<8x84xf32>
    %15 = arith.maximumf %13, %14 : vector<8x84xf32>
    %16 = arith.truncf %15 : vector<8x84xf32> to vector<8x84xbf16>
    %c0_12 = arith.constant 0 : index
    %c0_13 = arith.constant 0 : index
    %17 = vector.load %arg6[%c0_12, %c0_13] : memref<84x10xbf16, #tpu.memory_space<vmem>>, vector<84x10xbf16>
    %cst_14 = arith.constant dense<0.000000e+00> : vector<8x10xf32>
    %18 = tpu.matmul %16, %17, %cst_14 {dimension_numbers = #tpu.dot_dimension_numbers<[1], [0], [0], [1], [0, 0, 1, 1], [], []>} : vector<8x84xbf16>, vector<84x10xbf16>, vector<8x10xf32> -> vector<8x10xf32>
    %c0_15 = arith.constant 0 : index
    %c0_16 = arith.constant 0 : index
    %19 = vector.load %arg7[%c0_15, %c0_16] : memref<1x10xf32, #tpu.memory_space<vmem>>, vector<1x10xf32>
    %20 = vector.broadcast %19 : vector<1x10xf32> to vector<8x10xf32>
    %21 = arith.addf %18, %20 : vector<8x10xf32>
    %c0_17 = arith.constant 0 : index
    %c0_18 = arith.constant 0 : index
    %22 = vector.load %arg8[%c0_17, %c0_18] : memref<8x10xf32, #tpu.memory_space<vmem>>, vector<8x10xf32>
    tpu.vector_store %arg8[%c0_17, %c0_18], %21 {strides = array<i32>} : memref<8x10xf32, #tpu.memory_space<vmem>>, vector<8x10xf32>,
    return
  }
  func.func @transform_0(%arg0: i32) -> (i32, i32) {
    %c0_i32 = arith.constant 0 : i32
    %c0_i32_0 = arith.constant 0 : i32
    return %arg0, %c0_i32 : i32, i32
  }
  func.func @transform_1(%arg0: i32) -> (i32, i32) {
    %c0_i32 = arith.constant 0 : i32
    %c0_i32_0 = arith.constant 0 : i32
    %c0_i32_1 = arith.constant 0 : i32
    return %c0_i32, %c0_i32_0 : i32, i32
  }
  func.func @transform_2(%arg0: i32) -> (i32, i32) {
    %c0_i32 = arith.constant 0 : i32
    %c0_i32_0 = arith.constant 0 : i32
    %c0_i32_1 = arith.constant 0 : i32
    return %c0_i32, %c0_i32_0 : i32, i32
  }
  func.func @transform_3(%arg0: i32) -> (i32, i32) {
    %c0_i32 = arith.constant 0 : i32
    %c0_i32_0 = arith.constant 0 : i32
    %c0_i32_1 = arith.constant 0 : i32
    return %c0_i32, %c0_i32_0 : i32, i32
  }
  func.func @transform_4(%arg0: i32) -> (i32, i32) {
    %c0_i32 = arith.constant 0 : i32
    %c0_i32_0 = arith.constant 0 : i32
    %c0_i32_1 = arith.constant 0 : i32
    return %c0_i32, %c0_i32_0 : i32, i32
  }
  func.func @transform_5(%arg0: i32) -> (i32, i32) {
    %c0_i32 = arith.constant 0 : i32
    %c0_i32_0 = arith.constant 0 : i32
    %c0_i32_1 = arith.constant 0 : i32
    return %c0_i32, %c0_i32_0 : i32, i32
  }
  func.func @transform_6(%arg0: i32) -> (i32, i32) {
    %c0_i32 = arith.constant 0 : i32
    %c0_i32_0 = arith.constant 0 : i32
    %c0_i32_1 = arith.constant 0 : i32
    return %c0_i32, %c0_i32_0 : i32, i32
  }
  func.func @transform_7(%arg0: i32) -> (i32, i32) {
    %c0_i32 = arith.constant 0 : i32
    %c0_i32_0 = arith.constant 0 : i32
    return %arg0, %c0_i32 : i32, i32
  }
}

</mosaic_0001>

<llo_original>
// kernel: net_forward.3
$region0: #{net_forward.3}
  #allocation0 [shape = 'u32[]', space=smem, size = 0x4, offset = 0x4, fixed_abs, tag = 'smem constant byte address 0x4 - core index']
  #allocation1 [shape = 'u32[144,128]{1,0:T(1,128)}', space=vmem, size = 0x12000, scoped, tag = 'internal scratch']
  %s0 = inlined_call_operand.vmem [shape: bf16[392,75], index: 0, kind: input, shape index: {}]
  %s1 = inlined_call_operand.vmem [shape: bf16[392,75], index: 1, kind: input, shape index: {}]
  %s2 = inlined_call_operand.vmem [shape: bf16[392,75], index: 2, kind: input, shape index: {}]
  %s3 = inlined_call_operand.vmem [shape: bf16[392,75], index: 3, kind: input, shape index: {}]
  %s4 = inlined_call_operand.vmem [shape: bf16[75,6], index: 4, kind: input, shape index: {}]
  %s5 = inlined_call_operand.vmem [shape: f32[1,6], index: 5, kind: input, shape index: {}]
  %s6 = inlined_call_operand.vmem [shape: bf16[392,6], index: 6, kind: output, shape index: {}]
  %s7 = sld [smem:[#allocation0]]
  $region34: #{net_forward.3} parent=0
    _
  %s9 = ssub.s32 1, %s7
  %s10 = scalar_select 0, %s9, %s7
  // Predicated region
  $region2: #{net_forward.3} parent=0 // pred_check
    _
  $region3: #{net_forward.3} parent=0 // pred_check_branch
    %12 = sbr.rel (0) target = $region5
  $region4: #{net_forward.3} parent=0 // pred_region
    _
  $region5: #{net_forward.3} parent=0 // pred_fallthru
    _
  // Predicated region
  $region6: #{net_forward.3} parent=0 // pred_check
    _
  $region7: #{net_forward.3} parent=0 // pred_check_branch
    %14 = sbr.rel (0) target = $region9
  $region8: #{net_forward.3} parent=0 // pred_region
    _
  $region9: #{net_forward.3} parent=0 // pred_fallthru
    _
  // Predicated region
  $region10: #{net_forward.3} parent=0 // pred_check
    _
  $region11: #{net_forward.3} parent=0 // pred_check_branch
    %16 = sbr.rel (0) target = $region13
  $region12: #{net_forward.3} parent=0 // pred_region
    _
  $region13: #{net_forward.3} parent=0 // pred_fallthru
    _
  // Predicated region
  $region14: #{net_forward.3} parent=0 // pred_check
    _
  $region15: #{net_forward.3} parent=0 // pred_check_branch
    %18 = sbr.rel (0) target = $region17
  $region16: #{net_forward.3} parent=0 // pred_region
    _
  $region17: #{net_forward.3} parent=0 // pred_fallthru
    _
  // Predicated region
  $region18: #{net_forward.3} parent=0 // pred_check
    _
  $region19: #{net_forward.3} parent=0 // pred_check_branch
    %20 = sbr.rel (0) target = $region21
  $region20: #{net_forward.3} parent=0 // pred_region
    _
  $region21: #{net_forward.3} parent=0 // pred_fallthru
    _
  // Predicated region
  $region22: #{net_forward.3} parent=0 // pred_check
    _
  $region23: #{net_forward.3} parent=0 // pred_check_branch
    %22 = sbr.rel (0) target = $region25
  $region24: #{net_forward.3} parent=0 // pred_region
    _
  $region25: #{net_forward.3} parent=0 // pred_fallthru
    _
  %v24 = vld [vmem:[%s4] sm:$0xf]
  %v25 = vld [vmem:[%s4 + $0x4] sm:$0xf]
  %v26 = vld [vmem:[%s4 + $0x8] sm:$0xf]
  %v27 = vld [vmem:[%s4 + $0xc] sm:$0xf]
  %v28 = vld [vmem:[%s4 + $0x10] sm:$0xf]
  %v29 = vld [vmem:[%s4 + $0x14] sm:$0xf]
  %v30 = vld [vmem:[%s4 + $0x18] sm:$0xf]
  %v31 = vld [vmem:[%s4 + $0x1c] sm:$0xf]
  %v32 = vld [vmem:[%s4 + $0x20] sm:$0xf]
  %v33 = vld [vmem:[%s4 + $0x24] sm:$0x3]
  %v34 = vld [vmem:[%s5] sm:$0x1]
  %v35 = vld [vmem:[%s0] sm:$0xf]
  %v36 = vld [vmem:[%s0 + $0x4] sm:$0xf]
  %v37 = vld [vmem:[%s0 + $0x8] sm:$0xf]
  %v38 = vld [vmem:[%s0 + $0xc] sm:$0xf]
  %v39 = vld [vmem:[%s0 + $0x10] sm:$0xf]
  %v40 = vld [vmem:[%s0 + $0x14] sm:$0xf]
  %v41 = vld [vmem:[%s0 + $0x18] sm:$0xf]
  %v42 = vld [vmem:[%s0 + $0x1c] sm:$0xf]
  %v43 = vld [vmem:[%s0 + $0x20] sm:$0xf]
  %v44 = vld [vmem:[%s0 + $0x24] sm:$0xf]
  %v45 = vld [vmem:[%s0 + $0x28] sm:$0xf]
  %v46 = vld [vmem:[%s0 + $0x2c] sm:$0xf]
  %v47 = vld [vmem:[%s0 + $0x30] sm:$0xf]
  %v48 = vld [vmem:[%s0 + $0x34] sm:$0xf]
  %v49 = vld [vmem:[%s0 + $0x38] sm:$0xf]
  %v50 = vld [vmem:[%s0 + $0x3c] sm:$0xf]
  %v51 = vld [vmem:[%s0 + $0x40] sm:$0xf]
  %v52 = vld [vmem:[%s0 + $0x44] sm:$0xf]
  %v53 = vld [vmem:[%s0 + $0x48] sm:$0xf]
  %v54 = vld [vmem:[%s0 + $0x4c] sm:$0xf]
  %v55 = vld [vmem:[%s0 + $0x50] sm:$0xf]
  %v56 = vld [vmem:[%s0 + $0x54] sm:$0xf]
  %v57 = vld [vmem:[%s0 + $0x58] sm:$0xf]
  %v58 = vld [vmem:[%s0 + $0x5c] sm:$0xf]
  %v59 = vld [vmem:[%s0 + $0x60] sm:$0xf]
  %v60 = vld [vmem:[%s0 + $0x64] sm:$0xf]
  %v61 = vld [vmem:[%s0 + $0x68] sm:$0xf]
  %v62 = vld [vmem:[%s0 + $0x6c] sm:$0xf]
  %v63 = vld [vmem:[%s0 + $0x70] sm:$0xf]
  %v64 = vld [vmem:[%s0 + $0x74] sm:$0xf]
  %v65 = vld [vmem:[%s0 + $0x78] sm:$0xf]
  %v66 = vld [vmem:[%s0 + $0x7c] sm:$0xf]
  %v67 = vld [vmem:[%s0 + $0x80] sm:$0xf]
  %v68 = vld [vmem:[%s0 + $0x84] sm:$0xf]
  %v69 = vld [vmem:[%s0 + $0x88] sm:$0xf]
  %v70 = vld [vmem:[%s0 + $0x8c] sm:$0xf]
  %v71 = vld [vmem:[%s0 + $0x90] sm:$0xf]
  %v72 = vld [vmem:[%s0 + $0x94] sm:$0xf]
  %v73 = vld [vmem:[%s0 + $0x98] sm:$0xf]
  %v74 = vld [vmem:[%s0 + $0x9c] sm:$0xf]
  %v75 = vld [vmem:[%s0 + $0xa0] sm:$0xf]
  %v76 = vld [vmem:[%s0 + $0xa4] sm:$0xf]
  %v77 = vld [vmem:[%s0 + $0xa8] sm:$0xf]
  %v78 = vld [vmem:[%s0 + $0xac] sm:$0xf]
  %v79 = vld [vmem:[%s0 + $0xb0] sm:$0xf]
  %v80 = vld [vmem:[%s0 + $0xb4] sm:$0xf]
  %v81 = vld [vmem:[%s0 + $0xb8] sm:$0xf]
  %v82 = vld [vmem:[%s0 + $0xbc] sm:$0xf]
  %v83 = vld [vmem:[%s0 + $0xc0] sm:$0xf]
  %v85 = vlaneseq
  %v86 = vshrl.u32 %v85, 7
  %v87 = vsub.s32 0, %v86
  %v88 = vrot.slane %v34, %v87
  %v139 = vunpack.c.l.b16 %v35
  %v140 = vunpack.c.l.b16 %v36
  %v141 = vunpack.c.l.b16 %v37
  %v142 = vunpack.c.l.b16 %v38
  %v143 = vunpack.c.l.b16 %v39
  %v144 = vunpack.c.l.b16 %v40
  %v145 = vunpack.c.l.b16 %v41
  %v146 = vunpack.c.l.b16 %v42
  %v147 = vunpack.c.l.b16 %v43
  %v148 = vunpack.c.l.b16 %v44
  %v149 = vunpack.c.l.b16 %v45
  %v150 = vunpack.c.l.b16 %v46
  %v151 = vunpack.c.l.b16 %v47
  %v152 = vunpack.c.l.b16 %v48
  %v153 = vunpack.c.l.b16 %v49
  %v154 = vunpack.c.l.b16 %v50
  %v155 = vunpack.c.l.b16 %v51
  %v156 = vunpack.c.l.b16 %v52
  %v157 = vunpack.c.l.b16 %v53
  %v158 = vunpack.c.l.b16 %v54
  %v159 = vunpack.c.l.b16 %v55
  %v160 = vunpack.c.l.b16 %v56
  %v161 = vunpack.c.l.b16 %v57
  %v162 = vunpack.c.l.b16 %v58
  %v163 = vunpack.c.l.b16 %v59
  %v164 = vunpack.c.l.b16 %v60
  %v165 = vunpack.c.l.b16 %v61
  %v166 = vunpack.c.l.b16 %v62
  %v167 = vunpack.c.l.b16 %v63
  %v168 = vunpack.c.l.b16 %v64
  %v169 = vunpack.c.l.b16 %v65
  %v170 = vunpack.c.l.b16 %v66
  %v171 = vunpack.c.l.b16 %v67
  %v172 = vunpack.c.l.b16 %v68
  %v173 = vunpack.c.l.b16 %v69
  %v174 = vunpack.c.l.b16 %v70
  %v175 = vunpack.c.l.b16 %v71
  %v176 = vunpack.c.l.b16 %v72
  %v177 = vunpack.c.l.b16 %v73
  %v178 = vunpack.c.l.b16 %v74
  %v179 = vunpack.c.l.b16 %v75
  %v180 = vunpack.c.l.b16 %v76
  %v181 = vunpack.c.l.b16 %v77
  %v182 = vunpack.c.l.b16 %v78
  %v183 = vunpack.c.l.b16 %v79
  %v184 = vunpack.c.l.b16 %v80
  %v185 = vunpack.c.l.b16 %v81
  %v186 = vunpack.c.l.b16 %v82
  %v187 = vunpack.c.l.b16 %v83
  %v188 = vpack.c.b16 %v140, %v139
  %v189 = vpack.c.b16 %v142, %v141
  %v190 = vpack.c.b16 %v144, %v143
  %v191 = vpack.c.b16 %v146, %v145
  %v192 = vpack.c.b16 %v148, %v147
  %v193 = vpack.c.b16 %v150, %v149
  %v194 = vpack.c.b16 %v152, %v151
  %v195 = vpack.c.b16 %v154, %v153
  %v196 = vpack.c.b16 %v156, %v155
  %v197 = vpack.c.b16 %v158, %v157
  %v198 = vpack.c.b16 %v160, %v159
  %v199 = vpack.c.b16 %v162, %v161
  %v200 = vpack.c.b16 %v164, %v163
  %v201 = vpack.c.b16 %v166, %v165
  %v202 = vpack.c.b16 %v168, %v167
  %v203 = vpack.c.b16 %v170, %v169
  %v204 = vpack.c.b16 %v172, %v171
  %v205 = vpack.c.b16 %v174, %v173
  %v206 = vpack.c.b16 %v176, %v175
  %v207 = vpack.c.b16 %v178, %v177
  %v208 = vpack.c.b16 %v180, %v179
  %v209 = vpack.c.b16 %v182, %v181
  %v210 = vpack.c.b16 %v184, %v183
  %v211 = vpack.c.b16 %v186, %v185
  %v212 = vpack.c.b16 %v187, %v187
  %v223 = vunpack.c.l.b16 %v24
  %v224 = vunpack.c.l.b16 %v25
  %v225 = vunpack.c.l.b16 %v26
  %v226 = vunpack.c.l.b16 %v27
  %v227 = vunpack.c.l.b16 %v28
  %v228 = vunpack.c.l.b16 %v29
  %v229 = vunpack.c.l.b16 %v30
  %v230 = vunpack.c.l.b16 %v31
  %v231 = vunpack.c.l.b16 %v32
  %v232 = vunpack.c.l.b16 %v33
  %v233 = vpack.c.b16 %v224, %v223
  %v234 = vpack.c.b16 %v226, %v225
  %v235 = vpack.c.b16 %v228, %v227
  %v236 = vpack.c.b16 %v230, %v229
  %v237 = vpack.c.b16 %v232, %v231
  %vm242 = vcmask 613376
  %v244 = vsel %vm242, %v188, 0
  %v247 = vsel %vm242, %v189, 0
  %v250 = vsel %vm242, %v190, 0
  %v253 = vsel %vm242, %v191, 0
  %v256 = vsel %vm242, %v192, 0
  %v259 = vsel %vm242, %v193, 0
  %v262 = vsel %vm242, %v194, 0
  %v265 = vsel %vm242, %v195, 0
  %v268 = vsel %vm242, %v196, 0
  %v271 = vsel %vm242, %v197, 0
  %v274 = vsel %vm242, %v198, 0
  %v277 = vsel %vm242, %v199, 0
  %v280 = vsel %vm242, %v200, 0
  %v283 = vsel %vm242, %v201, 0
  %v286 = vsel %vm242, %v202, 0
  %v289 = vsel %vm242, %v203, 0
  %v292 = vsel %vm242, %v204, 0
  %v295 = vsel %vm242, %v205, 0
  %v298 = vsel %vm242, %v206, 0
  %v301 = vsel %vm242, %v207, 0
  %v304 = vsel %vm242, %v208, 0
  %v307 = vsel %vm242, %v209, 0
  %v310 = vsel %vm242, %v210, 0
  %v313 = vsel %vm242, %v211, 0
  %v316 = vsel %vm242, %v212, 0
  %vm318 = vcmask 1044480
  %vm319 = vcmask 1045504
  %v320 = vsel %vm318, 4294967295, 65535
  %v321 = vsel %vm319, %v320, 0
  %v323 = vand.u32 %v237, %v321
  %325 = vmatprep.subr.bf16.mxu0 0
  %326 = vmatpush1.bf16.msra.mxu0 %v233
  %327 = vmatprep.subr.bf16.mxu0 0
  %328 = vmatpush1.bf16.msra.mxu0 %v234
  %329 = vmatprep.subr.bf16.mxu0 0
  %330 = vmatpush1.bf16.msra.mxu0 %v235
  %331 = vmatprep.subr.bf16.mxu0 0
  %332 = vmatpush1.bf16.msra.mxu0 %v236
  %333 = vmatprep.subr.bf16.mxu0 0
  %334 = vmatpush1.bf16.msra.mxu0 %v323
  %335 = vmatprep.subr.bf16.mxu0 0
  %336 = vmatpush1.bf16.msra.mxu0 0
  %337 = vmatprep.subr.bf16.mxu0 0
  %338 = vmatpush1.bf16.msra.mxu0 0
  %339 = vmatprep.subr.bf16.mxu0 0
  %340 = vmatpush1.bf16.msra.mxu0 0
  %341 = vmatprep.subr.bf16.mxu0 0
  %342 = vmatpush1.bf16.msra.mxu0 0
  %343 = vmatprep.subr.bf16.mxu0 0
  %344 = vmatpush1.bf16.msra.mxu0 0
  %345 = vmatprep.subr.bf16.mxu0 0
  %346 = vmatpush1.bf16.msra.mxu0 0
  %347 = vmatprep.subr.bf16.mxu0 0
  %348 = vmatpush1.bf16.msra.mxu0 0
  %349 = vmatprep.subr.bf16.mxu0 0
  %350 = vmatpush1.bf16.msra.mxu0 0
  %351 = vmatprep.subr.bf16.mxu0 0
  %352 = vmatpush1.bf16.msra.mxu0 0
  %353 = vmatprep.subr.bf16.mxu0 0
  %354 = vmatpush1.bf16.msra.mxu0 0
  %355 = vmatprep.subr.bf16.mxu0 0
  %356 = vmatpush1.bf16.msra.mxu0 0
  %357 = vmatprep.mubr.bf16.mxu0 0
  %358 = vmatmul.mubr.bf16.gmra.mrb[0].mxu0 %v244
  %v359 = vpop.f32.mrb[0].mxu0
  %v360 = vadd.f32 %v88, %v359
  %v361 = vpop.f32.mrb[0].mxu0
  %v362 = vpop.f32.mrb[0].mxu0
  %v363 = vadd.f32 %v88, %v362
  %v364 = vpop.f32.mrb[0].mxu0
  %365 = vmatprep.mubr.bf16.mxu0 0
  %366 = vmatmul.mubr.bf16.gmra.mrb[0].mxu0 %v247
  %v367 = vpop.f32.mrb[0].mxu0
  %v368 = vadd.f32 %v88, %v367
  %v369 = vpop.f32.mrb[0].mxu0
  %v370 = vpop.f32.mrb[0].mxu0
  %v371 = vadd.f32 %v88, %v370
  %v372 = vpop.f32.mrb[0].mxu0
  %373 = vmatprep.mubr.bf16.mxu0 0
  %374 = vmatmul.mubr.bf16.gmra.mrb[0].mxu0 %v250
  %v375 = vpop.f32.mrb[0].mxu0
  %v376 = vadd.f32 %v88, %v375
  %v377 = vpop.f32.mrb[0].mxu0
  %v378 = vpop.f32.mrb[0].mxu0
  %v379 = vadd.f32 %v88, %v378
  %v380 = vpop.f32.mrb[0].mxu0
  %381 = vmatprep.mubr.bf16.mxu0 0
  %382 = vmatmul.mubr.bf16.gmra.mrb[0].mxu0 %v253
  %v383 = vpop.f32.mrb[0].mxu0
  %v384 = vadd.f32 %v88, %v383
  %v385 = vpop.f32.mrb[0].mxu0
  %v386 = vpop.f32.mrb[0].mxu0
  %v387 = vadd.f32 %v88, %v386
  %v388 = vpop.f32.mrb[0].mxu0
  %389 = vmatprep.mubr.bf16.mxu0 0
  %390 = vmatmul.mubr.bf16.gmra.mrb[0].mxu0 %v256
  %v391 = vpop.f32.mrb[0].mxu0
  %v392 = vadd.f32 %v88, %v391
  %v393 = vpop.f32.mrb[0].mxu0
  %v394 = vpop.f32.mrb[0].mxu0
  %v395 = vadd.f32 %v88, %v394
  %v396 = vpop.f32.mrb[0].mxu0
  %397 = vmatprep.mubr.bf16.mxu0 0
  %398 = vmatmul.mubr.bf16.gmra.mrb[0].mxu0 %v259
  %v399 = vpop.f32.mrb[0].mxu0
  %v400 = vadd.f32 %v88, %v399
  %v401 = vpop.f32.mrb[0].mxu0
  %v402 = vpop.f32.mrb[0].mxu0
  %v403 = vadd.f32 %v88, %v402
  %v404 = vpop.f32.mrb[0].mxu0
  %405 = vmatprep.mubr.bf16.mxu0 0
  %406 = vmatmul.mubr.bf16.gmra.mrb[0].mxu0 %v262
  %v407 = vpop.f32.mrb[0].mxu0
  %v408 = vadd.f32 %v88, %v407
  %v409 = vpop.f32.mrb[0].mxu0
  %v410 = vpop.f32.mrb[0].mxu0
  %v411 = vadd.f32 %v88, %v410
  %v412 = vpop.f32.mrb[0].mxu0
  %413 = vmatprep.mubr.bf16.mxu0 0
  %414 = vmatmul.mubr.bf16.gmra.mrb[0].mxu0 %v265
  %v415 = vpop.f32.mrb[0].mxu0
  %v416 = vadd.f32 %v88, %v415
  %v417 = vpop.f32.mrb[0].mxu0
  %v418 = vpop.f32.mrb[0].mxu0
  %v419 = vadd.f32 %v88, %v418
  %v420 = vpop.f32.mrb[0].mxu0
  %421 = vmatprep.mubr.bf16.mxu0 0
  %422 = vmatmul.mubr.bf16.gmra.mrb[0].mxu0 %v268
  %v423 = vpop.f32.mrb[0].mxu0
  %v424 = vadd.f32 %v88, %v423
  %v425 = vpop.f32.mrb[0].mxu0
  %v426 = vpop.f32.mrb[0].mxu0
  %v427 = vadd.f32 %v88, %v426
  %v428 = vpop.f32.mrb[0].mxu0
  %429 = vmatprep.mubr.bf16.mxu0 0
  %430 = vmatmul.mubr.bf16.gmra.mrb[0].mxu0 %v271
  %v431 = vpop.f32.mrb[0].mxu0
  %v432 = vadd.f32 %v88, %v431
  %v433 = vpop.f32.mrb[0].mxu0
  %v434 = vpop.f32.mrb[0].mxu0
  %v435 = vadd.f32 %v88, %v434
  %v436 = vpop.f32.mrb[0].mxu0
  %437 = vmatprep.mubr.bf16.mxu0 0
  %438 = vmatmul.mubr.bf16.gmra.mrb[0].mxu0 %v274
  %v439 = vpop.f32.mrb[0].mxu0
  %v440 = vadd.f32 %v88, %v439
  %v441 = vpop.f32.mrb[0].mxu0
  %v442 = vpop.f32.mrb[0].mxu0
  %v443 = vadd.f32 %v88, %v442
  %v444 = vpop.f32.mrb[0].mxu0
  %445 = vmatprep.mubr.bf16.mxu0 0
  %446 = vmatmul.mubr.bf16.gmra.mrb[0].mxu0 %v277
  %v447 = vpop.f32.mrb[0].mxu0
  %v448 = vadd.f32 %v88, %v447
  %v449 = vpop.f32.mrb[0].mxu0
  %v450 = vpop.f32.mrb[0].mxu0
  %v451 = vadd.f32 %v88, %v450
  %v452 = vpop.f32.mrb[0].mxu0
  %453 = vmatprep.mubr.bf16.mxu0 0
  %454 = vmatmul.mubr.bf16.gmra.mrb[0].mxu0 %v280
  %v455 = vpop.f32.mrb[0].mxu0
  %v456 = vadd.f32 %v88, %v455
  %v457 = vpop.f32.mrb[0].mxu0
  %v458 = vpop.f32.mrb[0].mxu0
  %v459 = vadd.f32 %v88, %v458
  %v460 = vpop.f32.mrb[0].mxu0
  %461 = vmatprep.mubr.bf16.mxu0 0
  %462 = vmatmul.mubr.bf16.gmra.mrb[0].mxu0 %v283
  %v463 = vpop.f32.mrb[0].mxu0
  %v464 = vadd.f32 %v88, %v463
  %v465 = vpop.f32.mrb[0].mxu0
  %v466 = vpop.f32.mrb[0].mxu0
  %v467 = vadd.f32 %v88, %v466
  %v468 = vpop.f32.mrb[0].mxu0
  %469 = vmatprep.mubr.bf16.mxu0 0
  %470 = vmatmul.mubr.bf16.gmra.mrb[0].mxu0 %v286
  %v471 = vpop.f32.mrb[0].mxu0
  %v472 = vadd.f32 %v88, %v471
  %v473 = vpop.f32.mrb[0].mxu0
  %v474 = vpop.f32.mrb[0].mxu0
  %v475 = vadd.f32 %v88, %v474
  %v476 = vpop.f32.mrb[0].mxu0
  %477 = vmatprep.mubr.bf16.mxu0 0
  %478 = vmatmul.mubr.bf16.gmra.mrb[0].mxu0 %v289
  %v479 = vpop.f32.mrb[0].mxu0
  %v480 = vadd.f32 %v88, %v479
  %v481 = vpop.f32.mrb[0].mxu0
  %v482 = vpop.f32.mrb[0].mxu0
  %v483 = vadd.f32 %v88, %v482
  %v484 = vpop.f32.mrb[0].mxu0
  %485 = vmatprep.mubr.bf16.mxu0 0
  %486 = vmatmul.mubr.bf16.gmra.mrb[0].mxu0 %v292
  %v487 = vpop.f32.mrb[0].mxu0
  %v488 = vadd.f32 %v88, %v487
  %v489 = vpop.f32.mrb[0].mxu0
  %v490 = vpop.f32.mrb[0].mxu0
  %v491 = vadd.f32 %v88, %v490
  %v492 = vpop.f32.mrb[0].mxu0
  %493 = vmatprep.mubr.bf16.mxu0 0
  %494 = vmatmul.mubr.bf16.gmra.mrb[0].mxu0 %v295
  %v495 = vpop.f32.mrb[0].mxu0
  %v496 = vadd.f32 %v88, %v495
  %v497 = vpop.f32.mrb[0].mxu0
  %v498 = vpop.f32.mrb[0].mxu0
  %v499 = vadd.f32 %v88, %v498
  %v500 = vpop.f32.mrb[0].mxu0
  %501 = vmatprep.mubr.bf16.mxu0 0
  %502 = vmatmul.mubr.bf16.gmra.mrb[0].mxu0 %v298
  %v503 = vpop.f32.mrb[0].mxu0
  %v504 = vadd.f32 %v88, %v503
  %v505 = vpop.f32.mrb[0].mxu0
  %v506 = vpop.f32.mrb[0].mxu0
  %v507 = vadd.f32 %v88, %v506
  %v508 = vpop.f32.mrb[0].mxu0
  %509 = vmatprep.mubr.bf16.mxu0 0
  %510 = vmatmul.mubr.bf16.gmra.mrb[0].mxu0 %v301
  %v511 = vpop.f32.mrb[0].mxu0
  %v512 = vadd.f32 %v88, %v511
  %v513 = vpop.f32.mrb[0].mxu0
  %v514 = vpop.f32.mrb[0].mxu0
  %v515 = vadd.f32 %v88, %v514
  %v516 = vpop.f32.mrb[0].mxu0
  %517 = vmatprep.mubr.bf16.mxu0 0
  %518 = vmatmul.mubr.bf16.gmra.mrb[0].mxu0 %v304
  %v519 = vpop.f32.mrb[0].mxu0
  %v520 = vadd.f32 %v88, %v519
  %v521 = vpop.f32.mrb[0].mxu0
  %v522 = vpop.f32.mrb[0].mxu0
  %v523 = vadd.f32 %v88, %v522
  %v524 = vpop.f32.mrb[0].mxu0
  %525 = vmatprep.mubr.bf16.mxu0 0
  %526 = vmatmul.mubr.bf16.gmra.mrb[0].mxu0 %v307
  %v527 = vpop.f32.mrb[0].mxu0
  %v528 = vadd.f32 %v88, %v527
  %v529 = vpop.f32.mrb[0].mxu0
  %v530 = vpop.f32.mrb[0].mxu0
  %v531 = vadd.f32 %v88, %v530
  %v532 = vpop.f32.mrb[0].mxu0
  %533 = vmatprep.mubr.bf16.mxu0 0
  %534 = vmatmul.mubr.bf16.gmra.mrb[0].mxu0 %v310
  %v535 = vpop.f32.mrb[0].mxu0
  %v536 = vadd.f32 %v88, %v535
  %v537 = vpop.f32.mrb[0].mxu0
  %v538 = vpop.f32.mrb[0].mxu0
  %v539 = vadd.f32 %v88, %v538
  %v540 = vpop.f32.mrb[0].mxu0
  %541 = vmatprep.mubr.bf16.mxu0 0
  %542 = vmatmul.mubr.bf16.gmra.mrb[0].mxu0 %v313
  %v543 = vpop.f32.mrb[0].mxu0
  %v544 = vadd.f32 %v88, %v543
  %v545 = vpop.f32.mrb[0].mxu0
  %v546 = vpop.f32.mrb[0].mxu0
  %v547 = vadd.f32 %v88, %v546
  %v548 = vpop.f32.mrb[0].mxu0
  %549 = vmatprep.mubr.bf16.mxu0 0
  %550 = vmatmul.mubr.bf16.gmra.mrb[0].mxu0 %v316
  %v551 = vpop.f32.mrb[0].mxu0
  %v552 = vadd.f32 %v88, %v551
  %v553 = vpop.f32.mrb[0].mxu0
  %v554 = vpop.f32.mrb[0].mxu0
  %v555 = vpop.f32.mrb[0].mxu0
  %556 = vdwg.mxu0
  %v557 = vmax.f32 %v360, 0.0
  %v558 = vmax.f32 %v363, 0.0
  %v559 = vmax.f32 %v368, 0.0
  %v560 = vmax.f32 %v371, 0.0
  %v561 = vmax.f32 %v376, 0.0
  %v562 = vmax.f32 %v379, 0.0
  %v563 = vmax.f32 %v384, 0.0
  %v564 = vmax.f32 %v387, 0.0
  %v565 = vmax.f32 %v392, 0.0
  %v566 = vmax.f32 %v395, 0.0
  %v567 = vmax.f32 %v400, 0.0
  %v568 = vmax.f32 %v403, 0.0
  %v569 = vmax.f32 %v408, 0.0
  %v570 = vmax.f32 %v411, 0.0
  %v571 = vmax.f32 %v416, 0.0
  %v572 = vmax.f32 %v419, 0.0
  %v573 = vmax.f32 %v424, 0.0
  %v574 = vmax.f32 %v427, 0.0
  %v575 = vmax.f32 %v432, 0.0
  %v576 = vmax.f32 %v435, 0.0
  %v577 = vmax.f32 %v440, 0.0
  %v578 = vmax.f32 %v443, 0.0
  %v579 = vmax.f32 %v448, 0.0
  %v580 = vmax.f32 %v451, 0.0
  %v581 = vmax.f32 %v456, 0.0
  %v582 = vmax.f32 %v459, 0.0
  %v583 = vmax.f32 %v464, 0.0
  %v584 = vmax.f32 %v467, 0.0
  %v585 = vmax.f32 %v472, 0.0
  %v586 = vmax.f32 %v475, 0.0
  %v587 = vmax.f32 %v480, 0.0
  %v588 = vmax.f32 %v483, 0.0
  %v589 = vmax.f32 %v488, 0.0
  %v590 = vmax.f32 %v491, 0.0
  %v591 = vmax.f32 %v496, 0.0
  %v592 = vmax.f32 %v499, 0.0
  %v593 = vmax.f32 %v504, 0.0
  %v594 = vmax.f32 %v507, 0.0
  %v595 = vmax.f32 %v512, 0.0
  %v596 = vmax.f32 %v515, 0.0
  %v597 = vmax.f32 %v520, 0.0
  %v598 = vmax.f32 %v523, 0.0
  %v599 = vmax.f32 %v528, 0.0
  %v600 = vmax.f32 %v531, 0.0
  %v601 = vmax.f32 %v536, 0.0
  %v602 = vmax.f32 %v539, 0.0
  %v603 = vmax.f32 %v544, 0.0
  %v604 = vmax.f32 %v547, 0.0
  %v605 = vmax.f32 %v552, 0.0
  %v606 = vld [vmem:[%s1] sm:$0xf]
  %v607 = vld [vmem:[%s1 + $0x4] sm:$0xf]
  %v608 = vld [vmem:[%s1 + $0x8] sm:$0xf]
  %v609 = vld [vmem:[%s1 + $0xc] sm:$0xf]
  %v610 = vld [vmem:[%s1 + $0x10] sm:$0xf]
  %v611 = vld [vmem:[%s1 + $0x14] sm:$0xf]
  %v612 = vld [vmem:[%s1 + $0x18] sm:$0xf]
  %v613 = vld [vmem:[%s1 + $0x1c] sm:$0xf]
  %v614 = vld [vmem:[%s1 + $0x20] sm:$0xf]
  %v615 = vld [vmem:[%s1 + $0x24] sm:$0xf]
  %v616 = vld [vmem:[%s1 + $0x28] sm:$0xf]
  %v617 = vld [vmem:[%s1 + $0x2c] sm:$0xf]
  %v618 = vld [vmem:[%s1 + $0x30] sm:$0xf]
  %v619 = vld [vmem:[%s1 + $0x34] sm:$0xf]
  %v620 = vld [vmem:[%s1 + $0x38] sm:$0xf]
  %v621 = vld [vmem:[%s1 + $0x3c] sm:$0xf]
  %v622 = vld [vmem:[%s1 + $0x40] sm:$0xf]
  %v623 = vld [vmem:[%s1 + $0x44] sm:$0xf]
  %v624 = vld [vmem:[%s1 + $0x48] sm:$0xf]
  %v625 = vld [vmem:[%s1 + $0x4c] sm:$0xf]
  %v626 = vld [vmem:[%s1 + $0x50] sm:$0xf]
  %v627 = vld [vmem:[%s1 + $0x54] sm:$0xf]
  %v628 = vld [vmem:[%s1 + $0x58] sm:$0xf]
  %v629 = vld [vmem:[%s1 + $0x5c] sm:$0xf]
  %v630 = vld [vmem:[%s1 + $0x60] sm:$0xf]
  %v631 = vld [vmem:[%s1 + $0x64] sm:$0xf]
  %v632 = vld [vmem:[%s1 + $0x68] sm:$0xf]
  %v633 = vld [vmem:[%s1 + $0x6c] sm:$0xf]
  %v634 = vld [vmem:[%s1 + $0x70] sm:$0xf]
  %v635 = vld [vmem:[%s1 + $0x74] sm:$0xf]
  %v636 = vld [vmem:[%s1 + $0x78] sm:$0xf]
  %v637 = vld [vmem:[%s1 + $0x7c] sm:$0xf]
  %v638 = vld [vmem:[%s1 + $0x80] sm:$0xf]
  %v639 = vld [vmem:[%s1 + $0x84] sm:$0xf]
  %v640 = vld [vmem:[%s1 + $0x88] sm:$0xf]
  %v641 = vld [vmem:[%s1 + $0x8c] sm:$0xf]
  %v642 = vld [vmem:[%s1 + $0x90] sm:$0xf]
  %v643 = vld [vmem:[%s1 + $0x94] sm:$0xf]
  %v644 = vld [vmem:[%s1 + $0x98] sm:$0xf]
  %v645 = vld [vmem:[%s1 + $0x9c] sm:$0xf]
  %v646 = vld [vmem:[%s1 + $0xa0] sm:$0xf]
  %v647 = vld [vmem:[%s1 + $0xa4] sm:$0xf]
  %v648 = vld [vmem:[%s1 + $0xa8] sm:$0xf]
  %v649 = vld [vmem:[%s1 + $0xac] sm:$0xf]
  %v650 = vld [vmem:[%s1 + $0xb0] sm:$0xf]
  %v651 = vld [vmem:[%s1 + $0xb4] sm:$0xf]
  %v652 = vld [vmem:[%s1 + $0xb8] sm:$0xf]
  %v653 = vld [vmem:[%s1 + $0xbc] sm:$0xf]
  %v654 = vld [vmem:[%s1 + $0xc0] sm:$0xf]
  %v704 = vunpack.c.l.b16 %v606
  %v705 = vunpack.c.l.b16 %v607
  %v706 = vunpack.c.l.b16 %v608
  %v707 = vunpack.c.l.b16 %v609
  %v708 = vunpack.c.l.b16 %v610
  %v709 = vunpack.c.l.b16 %v611
  %v710 = vunpack.c.l.b16 %v612
  %v711 = vunpack.c.l.b16 %v613
  %v712 = vunpack.c.l.b16 %v614
  %v713 = vunpack.c.l.b16 %v615
  %v714 = vunpack.c.l.b16 %v616
  %v715 = vunpack.c.l.b16 %v617
  %v716 = vunpack.c.l.b16 %v618
  %v717 = vunpack.c.l.b16 %v619
  %v718 = vunpack.c.l.b16 %v620
  %v719 = vunpack.c.l.b16 %v621
  %v720 = vunpack.c.l.b16 %v622
  %v721 = vunpack.c.l.b16 %v623
  %v722 = vunpack.c.l.b16 %v624
  %v723 = vunpack.c.l.b16 %v625
  %v724 = vunpack.c.l.b16 %v626
  %v725 = vunpack.c.l.b16 %v627
  %v726 = vunpack.c.l.b16 %v628
  %v727 = vunpack.c.l.b16 %v629
  %v728 = vunpack.c.l.b16 %v630
  %v729 = vunpack.c.l.b16 %v631
  %v730 = vunpack.c.l.b16 %v632
  %v731 = vunpack.c.l.b16 %v633
  %v732 = vunpack.c.l.b16 %v634
  %v733 = vunpack.c.l.b16 %v635
  %v734 = vunpack.c.l.b16 %v636
  %v735 = vunpack.c.l.b16 %v637
  %v736 = vunpack.c.l.b16 %v638
  %v737 = vunpack.c.l.b16 %v639
  %v738 = vunpack.c.l.b16 %v640
  %v739 = vunpack.c.l.b16 %v641
  %v740 = vunpack.c.l.b16 %v642
  %v741 = vunpack.c.l.b16 %v643
  %v742 = vunpack.c.l.b16 %v644
  %v743 = vunpack.c.l.b16 %v645
  %v744 = vunpack.c.l.b16 %v646
  %v745 = vunpack.c.l.b16 %v647
  %v746 = vunpack.c.l.b16 %v648
  %v747 = vunpack.c.l.b16 %v649
  %v748 = vunpack.c.l.b16 %v650
  %v749 = vunpack.c.l.b16 %v651
  %v750 = vunpack.c.l.b16 %v652
  %v751 = vunpack.c.l.b16 %v653
  %v752 = vunpack.c.l.b16 %v654
  %v753 = vpack.c.b16 %v705, %v704
  %v754 = vpack.c.b16 %v707, %v706
  %v755 = vpack.c.b16 %v709, %v708
  %v756 = vpack.c.b16 %v711, %v710
  %v757 = vpack.c.b16 %v713, %v712
  %v758 = vpack.c.b16 %v715, %v714
  %v759 = vpack.c.b16 %v717, %v716
  %v760 = vpack.c.b16 %v719, %v718
  %v761 = vpack.c.b16 %v721, %v720
  %v762 = vpack.c.b16 %v723, %v722
  %v763 = vpack.c.b16 %v725, %v724
  %v764 = vpack.c.b16 %v727, %v726
  %v765 = vpack.c.b16 %v729, %v728
  %v766 = vpack.c.b16 %v731, %v730
  %v767 = vpack.c.b16 %v733, %v732
  %v768 = vpack.c.b16 %v735, %v734
  %v769 = vpack.c.b16 %v737, %v736
  %v770 = vpack.c.b16 %v739, %v738
  %v771 = vpack.c.b16 %v741, %v740
  %v772 = vpack.c.b16 %v743, %v742
  %v773 = vpack.c.b16 %v745, %v744
  %v774 = vpack.c.b16 %v747, %v746
  %v775 = vpack.c.b16 %v749, %v748
  %v776 = vpack.c.b16 %v751, %v750
  %v777 = vpack.c.b16 %v752, %v752
  %v779 = vsel %vm242, %v753, 0
  %v782 = vsel %vm242, %v754, 0
  %v785 = vsel %vm242, %v755, 0
  %v788 = vsel %vm242, %v756, 0
  %v791 = vsel %vm242, %v757, 0
  %v794 = vsel %vm242, %v758, 0
  %v797 = vsel %vm242, %v759, 0
  %v800 = vsel %vm242, %v760, 0
  %v803 = vsel %vm242, %v761, 0
  %v806 = vsel %vm242, %v762, 0
  %v809 = vsel %vm242, %v763, 0
  %v812 = vsel %vm242, %v764, 0
  %v815 = vsel %vm242, %v765, 0
  %v818 = vsel %vm242, %v766, 0
  %v821 = vsel %vm242, %v767, 0
  %v824 = vsel %vm242, %v768, 0
  %v827 = vsel %vm242, %v769, 0
  %v830 = vsel %vm242, %v770, 0
  %v833 = vsel %vm242, %v771, 0
  %v836 = vsel %vm242, %v772, 0
  %v839 = vsel %vm242, %v773, 0
  %v842 = vsel %vm242, %v774, 0
  %v845 = vsel %vm242, %v775, 0
  %v848 = vsel %vm242, %v776, 0
  %v851 = vsel %vm242, %v777, 0
  %853 = vmatprep.subr.bf16.mxu0 0
  %854 = vmatpush1.bf16.msra.mxu0 %v233
  %855 = vmatprep.subr.bf16.mxu0 0
  %856 = vmatpush1.bf16.msra.mxu0 %v234
  %857 = vmatprep.subr.bf16.mxu0 0
  %858 = vmatpush1.bf16.msra.mxu0 %v235
  %859 = vmatprep.subr.bf16.mxu0 0
  %860 = vmatpush1.bf16.msra.mxu0 %v236
  %861 = vmatprep.subr.bf16.mxu0 0
  %862 = vmatpush1.bf16.msra.mxu0 %v323
  %863 = vmatprep.subr.bf16.mxu0 0
  %864 = vmatpush1.bf16.msra.mxu0 0
  %865 = vmatprep.subr.bf16.mxu0 0
  %866 = vmatpush1.bf16.msra.mxu0 0
  %867 = vmatprep.subr.bf16.mxu0 0
  %868 = vmatpush1.bf16.msra.mxu0 0
  %869 = vmatprep.subr.bf16.mxu0 0
  %870 = vmatpush1.bf16.msra.mxu0 0
  %871 = vmatprep.subr.bf16.mxu0 0
  %872 = vmatpush1.bf16.msra.mxu0 0
  %873 = vmatprep.subr.bf16.mxu0 0
  %874 = vmatpush1.bf16.msra.mxu0 0
  %875 = vmatprep.subr.bf16.mxu0 0
  %876 = vmatpush1.bf16.msra.mxu0 0
  %877 = vmatprep.subr.bf16.mxu0 0
  %878 = vmatpush1.bf16.msra.mxu0 0
  %879 = vmatprep.subr.bf16.mxu0 0
  %880 = vmatpush1.bf16.msra.mxu0 0
  %881 = vmatprep.subr.bf16.mxu0 0
  %882 = vmatpush1.bf16.msra.mxu0 0
  %883 = vmatprep.subr.bf16.mxu0 0
  %884 = vmatpush1.bf16.msra.mxu0 0
  %885 = vmatprep.mubr.bf16.mxu0 0
  %886 = vmatmul.mubr.bf16.gmra.mrb[0].mxu0 %v779
  %v887 = vpop.f32.mrb[0].mxu0
  %v888 = vadd.f32 %v88, %v887
  %v889 = vpop.f32.mrb[0].mxu0
  %v890 = vpop.f32.mrb[0].mxu0
  %v891 = vadd.f32 %v88, %v890
  %v892 = vpop.f32.mrb[0].mxu0
  %893 = vmatprep.mubr.bf16.mxu0 0
  %894 = vmatmul.mubr.bf16.gmra.mrb[0].mxu0 %v782
  %v895 = vpop.f32.mrb[0].mxu0
  %v896 = vadd.f32 %v88, %v895
  %v897 = vpop.f32.mrb[0].mxu0
  %v898 = vpop.f32.mrb[0].mxu0
  %v899 = vadd.f32 %v88, %v898
  %v900 = vpop.f32.mrb[0].mxu0
  %901 = vmatprep.mubr.bf16.mxu0 0
  %902 = vmatmul.mubr.bf16.gmra.mrb[0].mxu0 %v785
  %v903 = vpop.f32.mrb[0].mxu0
  %v904 = vadd.f32 %v88, %v903
  %v905 = vpop.f32.mrb[0].mxu0
  %v906 = vpop.f32.mrb[0].mxu0
  %v907 = vadd.f32 %v88, %v906
  %v908 = vpop.f32.mrb[0].mxu0
  %909 = vmatprep.mubr.bf16.mxu0 0
  %910 = vmatmul.mubr.bf16.gmra.mrb[0].mxu0 %v788
  %v911 = vpop.f32.mrb[0].mxu0
  %v912 = vadd.f32 %v88, %v911
  %v913 = vpop.f32.mrb[0].mxu0
  %v914 = vpop.f32.mrb[0].mxu0
  %v915 = vadd.f32 %v88, %v914
  %v916 = vpop.f32.mrb[0].mxu0
  %917 = vmatprep.mubr.bf16.mxu0 0
  %918 = vmatmul.mubr.bf16.gmra.mrb[0].mxu0 %v791
  %v919 = vpop.f32.mrb[0].mxu0
  %v920 = vadd.f32 %v88, %v919
  %v921 = vpop.f32.mrb[0].mxu0
  %v922 = vpop.f32.mrb[0].mxu0
  %v923 = vadd.f32 %v88, %v922
  %v924 = vpop.f32.mrb[0].mxu0
  %925 = vmatprep.mubr.bf16.mxu0 0
  %926 = vmatmul.mubr.bf16.gmra.mrb[0].mxu0 %v794
  %v927 = vpop.f32.mrb[0].mxu0
  %v928 = vadd.f32 %v88, %v927
  %v929 = vpop.f32.mrb[0].mxu0
  %v930 = vpop.f32.mrb[0].mxu0
  %v931 = vadd.f32 %v88, %v930
  %v932 = vpop.f32.mrb[0].mxu0
  %933 = vmatprep.mubr.bf16.mxu0 0
  %934 = vmatmul.mubr.bf16.gmra.mrb[0].mxu0 %v797
  %v935 = vpop.f32.mrb[0].mxu0
  %v936 = vadd.f32 %v88, %v935
  %v937 = vpop.f32.mrb[0].mxu0
  %v938 = vpop.f32.mrb[0].mxu0
  %v939 = vadd.f32 %v88, %v938
  %v940 = vpop.f32.mrb[0].mxu0
  %941 = vmatprep.mubr.bf16.mxu0 0
  %942 = vmatmul.mubr.bf16.gmra.mrb[0].mxu0 %v800
  %v943 = vpop.f32.mrb[0].mxu0
  %v944 = vadd.f32 %v88, %v943
  %v945 = vpop.f32.mrb[0].mxu0
  %v946 = vpop.f32.mrb[0].mxu0
  %v947 = vadd.f32 %v88, %v946
  %v948 = vpop.f32.mrb[0].mxu0
  %949 = vmatprep.mubr.bf16.mxu0 0
  %950 = vmatmul.mubr.bf16.gmra.mrb[0].mxu0 %v803
  %v951 = vpop.f32.mrb[0].mxu0
  %v952 = vadd.f32 %v88, %v951
  %v953 = vpop.f32.mrb[0].mxu0
  %v954 = vpop.f32.mrb[0].mxu0
  %v955 = vadd.f32 %v88, %v954
  %v956 = vpop.f32.mrb[0].mxu0
  %957 = vmatprep.mubr.bf16.mxu0 0
  %958 = vmatmul.mubr.bf16.gmra.mrb[0].mxu0 %v806
  %v959 = vpop.f32.mrb[0].mxu0
  %v960 = vadd.f32 %v88, %v959
  %v961 = vpop.f32.mrb[0].mxu0
  %v962 = vpop.f32.mrb[0].mxu0
  %v963 = vadd.f32 %v88, %v962
  %v964 = vpop.f32.mrb[0].mxu0
  %965 = vmatprep.mubr.bf16.mxu0 0
  %966 = vmatmul.mubr.bf16.gmra.mrb[0].mxu0 %v809
  %v967 = vpop.f32.mrb[0].mxu0
  %v968 = vadd.f32 %v88, %v967
  %v969 = vpop.f32.mrb[0].mxu0
  %v970 = vpop.f32.mrb[0].mxu0
  %v971 = vadd.f32 %v88, %v970
  %v972 = vpop.f32.mrb[0].mxu0
  %973 = vmatprep.mubr.bf16.mxu0 0
  %974 = vmatmul.mubr.bf16.gmra.mrb[0].mxu0 %v812
  %v975 = vpop.f32.mrb[0].mxu0
  %v976 = vadd.f32 %v88, %v975
  %v977 = vpop.f32.mrb[0].mxu0
  %v978 = vpop.f32.mrb[0].mxu0
  %v979 = vadd.f32 %v88, %v978
  %v980 = vpop.f32.mrb[0].mxu0
  %981 = vmatprep.mubr.bf16.mxu0 0
  %982 = vmatmul.mubr.bf16.gmra.mrb[0].mxu0 %v815
  %v983 = vpop.f32.mrb[0].mxu0
  %v984 = vadd.f32 %v88, %v983
  %v985 = vpop.f32.mrb[0].mxu0
  %v986 = vpop.f32.mrb[0].mxu0
  %v987 = vadd.f32 %v88, %v986
  %v988 = vpop.f32.mrb[0].mxu0
  %989 = vmatprep.mubr.bf16.mxu0 0
  %990 = vmatmul.mubr.bf16.gmra.mrb[0].mxu0 %v818
  %v991 = vpop.f32.mrb[0].mxu0
  %v992 = vadd.f32 %v88, %v991
  %v993 = vpop.f32.mrb[0].mxu0
  %v994 = vpop.f32.mrb[0].mxu0
  %v995 = vadd.f32 %v88, %v994
  %v996 = vpop.f32.mrb[0].mxu0
  %997 = vmatprep.mubr.bf16.mxu0 0
  %998 = vmatmul.mubr.bf16.gmra.mrb[0].mxu0 %v821
  %v999 = vpop.f32.mrb[0].mxu0
  %v1000 = vadd.f32 %v88, %v999
  %v1001 = vpop.f32.mrb[0].mxu0
  %v1002 = vpop.f32.mrb[0].mxu0
  %v1003 = vadd.f32 %v88, %v1002
  %v1004 = vpop.f32.mrb[0].mxu0
  %1005 = vmatprep.mubr.bf16.mxu0 0
  %1006 = vmatmul.mubr.bf16.gmra.mrb[0].mxu0 %v824
  %v1007 = vpop.f32.mrb[0].mxu0
  %v1008 = vadd.f32 %v88, %v1007
  %v1009 = vpop.f32.mrb[0].mxu0
  %v1010 = vpop.f32.mrb[0].mxu0
  %v1011 = vadd.f32 %v88, %v1010
  %v1012 = vpop.f32.mrb[0].mxu0
  %1013 = vmatprep.mubr.bf16.mxu0 0
  %1014 = vmatmul.mubr.bf16.gmra.mrb[0].mxu0 %v827
  %v1015 = vpop.f32.mrb[0].mxu0
  %v1016 = vadd.f32 %v88, %v1015
  %v1017 = vpop.f32.mrb[0].mxu0
  %v1018 = vpop.f32.mrb[0].mxu0
  %v1019 = vadd.f32 %v88, %v1018
  %v1020 = vpop.f32.mrb[0].mxu0
  %1021 = vmatprep.mubr.bf16.mxu0 0
  %1022 = vmatmul.mubr.bf16.gmra.mrb[0].mxu0 %v830
  %v1023 = vpop.f32.mrb[0].mxu0
  %v1024 = vadd.f32 %v88, %v1023
  %v1025 = vpop.f32.mrb[0].mxu0
  %v1026 = vpop.f32.mrb[0].mxu0
  %v1027 = vadd.f32 %v88, %v1026
  %v1028 = vpop.f32.mrb[0].mxu0
  %1029 = vmatprep.mubr.bf16.mxu0 0
  %1030 = vmatmul.mubr.bf16.gmra.mrb[0].mxu0 %v833
  %v1031 = vpop.f32.mrb[0].mxu0
  %v1032 = vadd.f32 %v88, %v1031
  %v1033 = vpop.f32.mrb[0].mxu0
  %v1034 = vpop.f32.mrb[0].mxu0
  %v1035 = vadd.f32 %v88, %v1034
  %v1036 = vpop.f32.mrb[0].mxu0
  %1037 = vmatprep.mubr.bf16.mxu0 0
  %1038 = vmatmul.mubr.bf16.gmra.mrb[0].mxu0 %v836
  %v1039 = vpop.f32.mrb[0].mxu0
  %v1040 = vadd.f32 %v88, %v1039
  %v1041 = vpop.f32.mrb[0].mxu0
  %v1042 = vpop.f32.mrb[0].mxu0
  %v1043 = vadd.f32 %v88, %v1042
  %v1044 = vpop.f32.mrb[0].mxu0
  %1045 = vmatprep.mubr.bf16.mxu0 0
  %1046 = vmatmul.mubr.bf16.gmra.mrb[0].mxu0 %v839
  %v1047 = vpop.f32.mrb[0].mxu0
  %v1048 = vadd.f32 %v88, %v1047
  %v1049 = vpop.f32.mrb[0].mxu0
  %v1050 = vpop.f32.mrb[0].mxu0
  %v1051 = vadd.f32 %v88, %v1050
  %v1052 = vpop.f32.mrb[0].mxu0
  %1053 = vmatprep.mubr.bf16.mxu0 0
  %1054 = vmatmul.mubr.bf16.gmra.mrb[0].mxu0 %v842
  %v1055 = vpop.f32.mrb[0].mxu0
  %v1056 = vadd.f32 %v88, %v1055
  %v1057 = vpop.f32.mrb[0].mxu0
  %v1058 = vpop.f32.mrb[0].mxu0
  %v1059 = vadd.f32 %v88, %v1058
  %v1060 = vpop.f32.mrb[0].mxu0
  %1061 = vmatprep.mubr.bf16.mxu0 0
  %1062 = vmatmul.mubr.bf16.gmra.mrb[0].mxu0 %v845
  %v1063 = vpop.f32.mrb[0].mxu0
  %v1064 = vadd.f32 %v88, %v1063
  %v1065 = vpop.f32.mrb[0].mxu0
  %v1066 = vpop.f32.mrb[0].mxu0
  %v1067 = vadd.f32 %v88, %v1066
  %v1068 = vpop.f32.mrb[0].mxu0
  %1069 = vmatprep.mubr.bf16.mxu0 0
  %1070 = vmatmul.mubr.bf16.gmra.mrb[0].mxu0 %v848
  %v1071 = vpop.f32.mrb[0].mxu0
  %v1072 = vadd.f32 %v88, %v1071
  %v1073 = vpop.f32.mrb[0].mxu0
  %v1074 = vpop.f32.mrb[0].mxu0
  %v1075 = vadd.f32 %v88, %v1074
  %v1076 = vpop.f32.mrb[0].mxu0
  %1077 = vmatprep.mubr.bf16.mxu0 0
  %1078 = vmatmul.mubr.bf16.gmra.mrb[0].mxu0 %v851
  %v1079 = vpop.f32.mrb[0].mxu0
  %v1080 = vadd.f32 %v88, %v1079
  %v1081 = vpop.f32.mrb[0].mxu0
  %v1082 = vpop.f32.mrb[0].mxu0
  %v1083 = vpop.f32.mrb[0].mxu0
  %1084 = vdwg.mxu0
  %v1085 = vmax.f32 %v888, 0.0
  %v1086 = vmax.f32 %v891, 0.0
  %v1087 = vmax.f32 %v896, 0.0
  %v1088 = vmax.f32 %v899, 0.0
  %v1089 = vmax.f32 %v904, 0.0
  %v1090 = vmax.f32 %v907, 0.0
  %v1091 = vmax.f32 %v912, 0.0
  %v1092 = vmax.f32 %v915, 0.0
  %v1093 = vmax.f32 %v920, 0.0
  %v1094 = vmax.f32 %v923, 0.0
  %v1095 = vmax.f32 %v928, 0.0
  %v1096 = vmax.f32 %v931, 0.0
  %v1097 = vmax.f32 %v936, 0.0
  %v1098 = vmax.f32 %v939, 0.0
  %v1099 = vmax.f32 %v944, 0.0
  %v1100 = vmax.f32 %v947, 0.0
  %v1101 = vmax.f32 %v952, 0.0
  %v1102 = vmax.f32 %v955, 0.0
  %v1103 = vmax.f32 %v960, 0.0
  %v1104 = vmax.f32 %v963, 0.0
  %v1105 = vmax.f32 %v968, 0.0
  %v1106 = vmax.f32 %v971, 0.0
  %v1107 = vmax.f32 %v976, 0.0
  %v1108 = vmax.f32 %v979, 0.0
  %v1109 = vmax.f32 %v984, 0.0
  %v1110 = vmax.f32 %v987, 0.0
  %v1111 = vmax.f32 %v992, 0.0
  %v1112 = vmax.f32 %v995, 0.0
  %v1113 = vmax.f32 %v1000, 0.0
  %v1114 = vmax.f32 %v1003, 0.0
  %v1115 = vmax.f32 %v1008, 0.0
  %v1116 = vmax.f32 %v1011, 0.0
  %v1117 = vmax.f32 %v1016, 0.0
  %v1118 = vmax.f32 %v1019, 0.0
  %v1119 = vmax.f32 %v1024, 0.0
  %v1120 = vmax.f32 %v1027, 0.0
  %v1121 = vmax.f32 %v1032, 0.0
  %v1122 = vmax.f32 %v1035, 0.0
  %v1123 = vmax.f32 %v1040, 0.0
  %v1124 = vmax.f32 %v1043, 0.0
  %v1125 = vmax.f32 %v1048, 0.0
  %v1126 = vmax.f32 %v1051, 0.0
  %v1127 = vmax.f32 %v1056, 0.0
  %v1128 = vmax.f32 %v1059, 0.0
  %v1129 = vmax.f32 %v1064, 0.0
  %v1130 = vmax.f32 %v1067, 0.0
  %v1131 = vmax.f32 %v1072, 0.0
  %v1132 = vmax.f32 %v1075, 0.0
  %v1133 = vmax.f32 %v1080, 0.0
  %v1134 = vmax.f32 %v557, %v1085
  %v1135 = vmax.f32 %v558, %v1086
  %v1136 = vmax.f32 %v559, %v1087
  %v1137 = vmax.f32 %v560, %v1088
  %v1138 = vmax.f32 %v561, %v1089
  %v1139 = vmax.f32 %v562, %v1090
  %v1140 = vmax.f32 %v563, %v1091
  %v1141 = vmax.f32 %v564, %v1092
  %v1142 = vmax.f32 %v565, %v1093
  %v1143 = vmax.f32 %v566, %v1094
  %v1144 = vmax.f32 %v567, %v1095
  %v1145 = vmax.f32 %v568, %v1096
  %v1146 = vmax.f32 %v569, %v1097
  %v1147 = vmax.f32 %v570, %v1098
  %v1148 = vmax.f32 %v571, %v1099
  %v1149 = vmax.f32 %v572, %v1100
  %v1150 = vmax.f32 %v573, %v1101
  %v1151 = vmax.f32 %v574, %v1102
  %v1152 = vmax.f32 %v575, %v1103
  %v1153 = vmax.f32 %v576, %v1104
  %v1154 = vmax.f32 %v577, %v1105
  %v1155 = vmax.f32 %v578, %v1106
  %v1156 = vmax.f32 %v579, %v1107
  %v1157 = vmax.f32 %v580, %v1108
  %v1158 = vmax.f32 %v581, %v1109
  %v1159 = vmax.f32 %v582, %v1110
  %v1160 = vmax.f32 %v583, %v1111
  %v1161 = vmax.f32 %v584, %v1112
  %v1162 = vmax.f32 %v585, %v1113
  %v1163 = vmax.f32 %v586, %v1114
  %v1164 = vmax.f32 %v587, %v1115
  %v1165 = vmax.f32 %v588, %v1116
  %v1166 = vmax.f32 %v589, %v1117
  %v1167 = vmax.f32 %v590, %v1118
  %v1168 = vmax.f32 %v591, %v1119
  %v1169 = vmax.f32 %v592, %v1120
  %v1170 = vmax.f32 %v593, %v1121
  %v1171 = vmax.f32 %v594, %v1122
  %v1172 = vmax.f32 %v595, %v1123
  %v1173 = vmax.f32 %v596, %v1124
  %v1174 = vmax.f32 %v597, %v1125
  %v1175 = vmax.f32 %v598, %v1126
  %v1176 = vmax.f32 %v599, %v1127
  %v1177 = vmax.f32 %v600, %v1128
  %v1178 = vmax.f32 %v601, %v1129
  %v1179 = vmax.f32 %v602, %v1130
  %v1180 = vmax.f32 %v603, %v1131
  %v1181 = vmax.f32 %v604, %v1132
  %v1182 = vmax.f32 %v605, %v1133
  %v1183 = vld [vmem:[%s2] sm:$0xf]
  %v1184 = vld [vmem:[%s2 + $0x4] sm:$0xf]
  %v1185 = vld [vmem:[%s2 + $0x8] sm:$0xf]
  %v1186 = vld [vmem:[%s2 + $0xc] sm:$0xf]
  %v1187 = vld [vmem:[%s2 + $0x10] sm:$0xf]
  %v1188 = vld [vmem:[%s2 + $0x14] sm:$0xf]
  %v1189 = vld [vmem:[%s2 + $0x18] sm:$0xf]
  %v1190 = vld [vmem:[%s2 + $0x1c] sm:$0xf]
  %v1191 = vld [vmem:[%s2 + $0x20] sm:$0xf]
  %v1192 = vld [vmem:[%s2 + $0x24] sm:$0xf]
  %v1193 = vld [vmem:[%s2 + $0x28] sm:$0xf]
  %v1194 = vld [vmem:[%s2 + $0x2c] sm:$0xf]
  %v1195 = vld [vmem:[%s2 + $0x30] sm:$0xf]
  %v1196 = vld [vmem:[%s2 + $0x34] sm:$0xf]
  %v1197 = vld [vmem:[%s2 + $0x38] sm:$0xf]
  %v1198 = vld [vmem:[%s2 + $0x3c] sm:$0xf]
  %v1199 = vld [vmem:[%s2 + $0x40] sm:$0xf]
  %v1200 = vld [vmem:[%s2 + $0x44] sm:$0xf]
  %v1201 = vld [vmem:[%s2 + $0x48] sm:$0xf]
  %v1202 = vld [vmem:[%s2 + $0x4c] sm:$0xf]
  %v1203 = vld [vmem:[%s2 + $0x50] sm:$0xf]
  %v1204 = vld [vmem:[%s2 + $0x54] sm:$0xf]
  %v1205 = vld [vmem:[%s2 + $0x58] sm:$0xf]
  %v1206 = vld [vmem:[%s2 + $0x5c] sm:$0xf]
  %v1207 = vld [vmem:[%s2 + $0x60] sm:$0xf]
  %v1208 = vld [vmem:[%s2 + $0x64] sm:$0xf]
  %v1209 = vld [vmem:[%s2 + $0x68] sm:$0xf]
  %v1210 = vld [vmem:[%s2 + $0x6c] sm:$0xf]
  %v1211 = vld [vmem:[%s2 + $0x70] sm:$0xf]
  %v1212 = vld [vmem:[%s2 + $0x74] sm:$0xf]
  %v1213 = vld [vmem:[%s2 + $0x78] sm:$0xf]
  %v1214 = vld [vmem:[%s2 + $0x7c] sm:$0xf]
  %v1215 = vld [vmem:[%s2 + $0x80] sm:$0xf]
  %v1216 = vld [vmem:[%s2 + $0x84] sm:$0xf]
  %v1217 = vld [vmem:[%s2 + $0x88] sm:$0xf]
  %v1218 = vld [vmem:[%s2 + $0x8c] sm:$0xf]
  %v1219 = vld [vmem:[%s2 + $0x90] sm:$0xf]
  %v1220 = vld [vmem:[%s2 + $0x94] sm:$0xf]
  %v1221 = vld [vmem:[%s2 + $0x98] sm:$0xf]
  %v1222 = vld [vmem:[%s2 + $0x9c] sm:$0xf]
  %v1223 = vld [vmem:[%s2 + $0xa0] sm:$0xf]
  %v1224 = vld [vmem:[%s2 + $0xa4] sm:$0xf]
  %v1225 = vld [vmem:[%s2 + $0xa8] sm:$0xf]
  %v1226 = vld [vmem:[%s2 + $0xac] sm:$0xf]
  %v1227 = vld [vmem:[%s2 + $0xb0] sm:$0xf]
  %v1228 = vld [vmem:[%s2 + $0xb4] sm:$0xf]
  %v1229 = vld [vmem:[%s2 + $0xb8] sm:$0xf]
  %v1230 = vld [vmem:[%s2 + $0xbc] sm:$0xf]
  %v1231 = vld [vmem:[%s2 + $0xc0] sm:$0xf]
  %v1281 = vunpack.c.l.b16 %v1183
  %v1282 = vunpack.c.l.b16 %v1184
  %v1283 = vunpack.c.l.b16 %v1185
  %v1284 = vunpack.c.l.b16 %v1186
  %v1285 = vunpack.c.l.b16 %v1187
  %v1286 = vunpack.c.l.b16 %v1188
  %v1287 = vunpack.c.l.b16 %v1189
  %v1288 = vunpack.c.l.b16 %v1190
  %v1289 = vunpack.c.l.b16 %v1191
  %v1290 = vunpack.c.l.b16 %v1192
  %v1291 = vunpack.c.l.b16 %v1193
  %v1292 = vunpack.c.l.b16 %v1194
  %v1293 = vunpack.c.l.b16 %v1195
  %v1294 = vunpack.c.l.b16 %v1196
  %v1295 = vunpack.c.l.b16 %v1197
  %v1296 = vunpack.c.l.b16 %v1198
  %v1297 = vunpack.c.l.b16 %v1199
  %v1298 = vunpack.c.l.b16 %v1200
  %v1299 = vunpack.c.l.b16 %v1201
  %v1300 = vunpack.c.l.b16 %v1202
  %v1301 = vunpack.c.l.b16 %v1203
  %v1302 = vunpack.c.l.b16 %v1204
  %v1303 = vunpack.c.l.b16 %v1205
  %v1304 = vunpack.c.l.b16 %v1206
  %v1305 = vunpack.c.l.b16 %v1207
  %v1306 = vunpack.c.l.b16 %v1208
  %v1307 = vunpack.c.l.b16 %v1209
  %v1308 = vunpack.c.l.b16 %v1210
  %v1309 = vunpack.c.l.b16 %v1211
  %v1310 = vunpack.c.l.b16 %v1212
  %v1311 = vunpack.c.l.b16 %v1213
  %v1312 = vunpack.c.l.b16 %v1214
  %v1313 = vunpack.c.l.b16 %v1215
  %v1314 = vunpack.c.l.b16 %v1216
  %v1315 = vunpack.c.l.b16 %v1217
  %v1316 = vunpack.c.l.b16 %v1218
  %v1317 = vunpack.c.l.b16 %v1219
  %v1318 = vunpack.c.l.b16 %v1220
  %v1319 = vunpack.c.l.b16 %v1221
  %v1320 = vunpack.c.l.b16 %v1222
  %v1321 = vunpack.c.l.b16 %v1223
  %v1322 = vunpack.c.l.b16 %v1224
  %v1323 = vunpack.c.l.b16 %v1225
  %v1324 = vunpack.c.l.b16 %v1226
  %v1325 = vunpack.c.l.b16 %v1227
  %v1326 = vunpack.c.l.b16 %v1228
  %v1327 = vunpack.c.l.b16 %v1229
  %v1328 = vunpack.c.l.b16 %v1230
  %v1329 = vunpack.c.l.b16 %v1231
  %v1330 = vpack.c.b16 %v1282, %v1281
  %v1331 = vpack.c.b16 %v1284, %v1283
  %v1332 = vpack.c.b16 %v1286, %v1285
  %v1333 = vpack.c.b16 %v1288, %v1287
  %v1334 = vpack.c.b16 %v1290, %v1289
  %v1335 = vpack.c.b16 %v1292, %v1291
  %v1336 = vpack.c.b16 %v1294, %v1293
  %v1337 = vpack.c.b16 %v1296, %v1295
  %v1338 = vpack.c.b16 %v1298, %v1297
  %v1339 = vpack.c.b16 %v1300, %v1299
  %v1340 = vpack.c.b16 %v1302, %v1301
  %v1341 = vpack.c.b16 %v1304, %v1303
  %v1342 = vpack.c.b16 %v1306, %v1305
  %v1343 = vpack.c.b16 %v1308, %v1307
  %v1344 = vpack.c.b16 %v1310, %v1309
  %v1345 = vpack.c.b16 %v1312, %v1311
  %v1346 = vpack.c.b16 %v1314, %v1313
  %v1347 = vpack.c.b16 %v1316, %v1315
  %v1348 = vpack.c.b16 %v1318, %v1317
  %v1349 = vpack.c.b16 %v1320, %v1319
  %v1350 = vpack.c.b16 %v1322, %v1321
  %v1351 = vpack.c.b16 %v1324, %v1323
  %v1352 = vpack.c.b16 %v1326, %v1325
  %v1353 = vpack.c.b16 %v1328, %v1327
  %v1354 = vpack.c.b16 %v1329, %v1329
  %v1356 = vsel %vm242, %v1330, 0
  %v1359 = vsel %vm242, %v1331, 0
  %v1362 = vsel %vm242, %v1332, 0
  %v1365 = vsel %vm242, %v1333, 0
  %v1368 = vsel %vm242, %v1334, 0
  %v1371 = vsel %vm242, %v1335, 0
  %v1374 = vsel %vm242, %v1336, 0
  %v1377 = vsel %vm242, %v1337, 0
  %v1380 = vsel %vm242, %v1338, 0
  %v1383 = vsel %vm242, %v1339, 0
  %v1386 = vsel %vm242, %v1340, 0
  %v1389 = vsel %vm242, %v1341, 0
  %v1392 = vsel %vm242, %v1342, 0
  %v1395 = vsel %vm242, %v1343, 0
  %v1398 = vsel %vm242, %v1344, 0
  %v1401 = vsel %vm242, %v1345, 0
  %v1404 = vsel %vm242, %v1346, 0
  %v1407 = vsel %vm242, %v1347, 0
  %v1410 = vsel %vm242, %v1348, 0
  %v1413 = vsel %vm242, %v1349, 0
  %v1416 = vsel %vm242, %v1350, 0
  %v1419 = vsel %vm242, %v1351, 0
  %v1422 = vsel %vm242, %v1352, 0
  %v1425 = vsel %vm242, %v1353, 0
  %v1428 = vsel %vm242, %v1354, 0
  %1430 = vmatprep.subr.bf16.mxu0 0
  %1431 = vmatpush1.bf16.msra.mxu0 %v233
  %1432 = vmatprep.subr.bf16.mxu0 0
  %1433 = vmatpush1.bf16.msra.mxu0 %v234
  %1434 = vmatprep.subr.bf16.mxu0 0
  %1435 = vmatpush1.bf16.msra.mxu0 %v235
  %1436 = vmatprep.subr.bf16.mxu0 0
  %1437 = vmatpush1.bf16.msra.mxu0 %v236
  %1438 = vmatprep.subr.bf16.mxu0 0
  %1439 = vmatpush1.bf16.msra.mxu0 %v323
  %1440 = vmatprep.subr.bf16.mxu0 0
  %1441 = vmatpush1.bf16.msra.mxu0 0
  %1442 = vmatprep.subr.bf16.mxu0 0
  %1443 = vmatpush1.bf16.msra.mxu0 0
  %1444 = vmatprep.subr.bf16.mxu0 0
  %1445 = vmatpush1.bf16.msra.mxu0 0
  %1446 = vmatprep.subr.bf16.mxu0 0
  %1447 = vmatpush1.bf16.msra.mxu0 0
  %1448 = vmatprep.subr.bf16.mxu0 0
  %1449 = vmatpush1.bf16.msra.mxu0 0
  %1450 = vmatprep.subr.bf16.mxu0 0
  %1451 = vmatpush1.bf16.msra.mxu0 0
  %1452 = vmatprep.subr.bf16.mxu0 0
  %1453 = vmatpush1.bf16.msra.mxu0 0
  %1454 = vmatprep.subr.bf16.mxu0 0
  %1455 = vmatpush1.bf16.msra.mxu0 0
  %1456 = vmatprep.subr.bf16.mxu0 0
  %1457 = vmatpush1.bf16.msra.mxu0 0
  %1458 = vmatprep.subr.bf16.mxu0 0
  %1459 = vmatpush1.bf16.msra.mxu0 0
  %1460 = vmatprep.subr.bf16.mxu0 0
  %1461 = vmatpush1.bf16.msra.mxu0 0
  %1462 = vmatprep.mubr.bf16.mxu0 0
  %1463 = vmatmul.mubr.bf16.gmra.mrb[0].mxu0 %v1356
  %v1464 = vpop.f32.mrb[0].mxu0
  %v1465 = vadd.f32 %v88, %v1464
  %v1466 = vpop.f32.mrb[0].mxu0
  %v1467 = vpop.f32.mrb[0].mxu0
  %v1468 = vadd.f32 %v88, %v1467
  %v1469 = vpop.f32.mrb[0].mxu0
  %1470 = vmatprep.mubr.bf16.mxu0 0
  %1471 = vmatmul.mubr.bf16.gmra.mrb[0].mxu0 %v1359
  %v1472 = vpop.f32.mrb[0].mxu0
  %v1473 = vadd.f32 %v88, %v1472
  %v1474 = vpop.f32.mrb[0].mxu0
  %v1475 = vpop.f32.mrb[0].mxu0
  %v1476 = vadd.f32 %v88, %v1475
  %v1477 = vpop.f32.mrb[0].mxu0
  %1478 = vmatprep.mubr.bf16.mxu0 0
  %1479 = vmatmul.mubr.bf16.gmra.mrb[0].mxu0 %v1362
  %v1480 = vpop.f32.mrb[0].mxu0
  %v1481 = vadd.f32 %v88, %v1480
  %v1482 = vpop.f32.mrb[0].mxu0
  %v1483 = vpop.f32.mrb[0].mxu0
  %v1484 = vadd.f32 %v88, %v1483
  %v1485 = vpop.f32.mrb[0].mxu0
  %1486 = vmatprep.mubr.bf16.mxu0 0
  %1487 = vmatmul.mubr.bf16.gmra.mrb[0].mxu0 %v1365
  %v1488 = vpop.f32.mrb[0].mxu0
  %v1489 = vadd.f32 %v88, %v1488
  %v1490 = vpop.f32.mrb[0].mxu0
  %v1491 = vpop.f32.mrb[0].mxu0
  %v1492 = vadd.f32 %v88, %v1491
  %v1493 = vpop.f32.mrb[0].mxu0
  %1494 = vmatprep.mubr.bf16.mxu0 0
  %1495 = vmatmul.mubr.bf16.gmra.mrb[0].mxu0 %v1368
  %v1496 = vpop.f32.mrb[0].mxu0
  %v1497 = vadd.f32 %v88, %v1496
  %v1498 = vpop.f32.mrb[0].mxu0
  %v1499 = vpop.f32.mrb[0].mxu0
  %v1500 = vadd.f32 %v88, %v1499
  %v1501 = vpop.f32.mrb[0].mxu0
  %1502 = vmatprep.mubr.bf16.mxu0 0
  %1503 = vmatmul.mubr.bf16.gmra.mrb[0].mxu0 %v1371
  %v1504 = vpop.f32.mrb[0].mxu0
  %v1505 = vadd.f32 %v88, %v1504
  %v1506 = vpop.f32.mrb[0].mxu0
  %v1507 = vpop.f32.mrb[0].mxu0
  %v1508 = vadd.f32 %v88, %v1507
  %v1509 = vpop.f32.mrb[0].mxu0
  %1510 = vmatprep.mubr.bf16.mxu0 0
  %1511 = vmatmul.mubr.bf16.gmra.mrb[0].mxu0 %v1374
  %v1512 = vpop.f32.mrb[0].mxu0
  %v1513 = vadd.f32 %v88, %v1512
  %v1514 = vpop.f32.mrb[0].mxu0
  %v1515 = vpop.f32.mrb[0].mxu0
  %v1516 = vadd.f32 %v88, %v1515
  %v1517 = vpop.f32.mrb[0].mxu0
  %1518 = vmatprep.mubr.bf16.mxu0 0
  %1519 = vmatmul.mubr.bf16.gmra.mrb[0].mxu0 %v1377
  %v1520 = vpop.f32.mrb[0].mxu0
  %v1521 = vadd.f32 %v88, %v1520
  %v1522 = vpop.f32.mrb[0].mxu0
  %v1523 = vpop.f32.mrb[0].mxu0
  %v1524 = vadd.f32 %v88, %v1523
  %v1525 = vpop.f32.mrb[0].mxu0
  %1526 = vmatprep.mubr.bf16.mxu0 0
  %1527 = vmatmul.mubr.bf16.gmra.mrb[0].mxu0 %v1380
  %v1528 = vpop.f32.mrb[0].mxu0
  %v1529 = vadd.f32 %v88, %v1528
  %v1530 = vpop.f32.mrb[0].mxu0
  %v1531 = vpop.f32.mrb[0].mxu0
  %v1532 = vadd.f32 %v88, %v1531
  %v1533 = vpop.f32.mrb[0].mxu0
  %1534 = vmatprep.mubr.bf16.mxu0 0
  %1535 = vmatmul.mubr.bf16.gmra.mrb[0].mxu0 %v1383
  %v1536 = vpop.f32.mrb[0].mxu0
  %v1537 = vadd.f32 %v88, %v1536
  %v1538 = vpop.f32.mrb[0].mxu0
  %v1539 = vpop.f32.mrb[0].mxu0
  %v1540 = vadd.f32 %v88, %v1539
  %v1541 = vpop.f32.mrb[0].mxu0
  %1542 = vmatprep.mubr.bf16.mxu0 0
  %1543 = vmatmul.mubr.bf16.gmra.mrb[0].mxu0 %v1386
  %v1544 = vpop.f32.mrb[0].mxu0
  %v1545 = vadd.f32 %v88, %v1544
  %v1546 = vpop.f32.mrb[0].mxu0
  %v1547 = vpop.f32.mrb[0].mxu0
  %v1548 = vadd.f32 %v88, %v1547
  %v1549 = vpop.f32.mrb[0].mxu0
  %1550 = vmatprep.mubr.bf16.mxu0 0
  %1551 = vmatmul.mubr.bf16.gmra.mrb[0].mxu0 %v1389
  %v1552 = vpop.f32.mrb[0].mxu0
  %v1553 = vadd.f32 %v88, %v1552
  %v1554 = vpop.f32.mrb[0].mxu0
  %v1555 = vpop.f32.mrb[0].mxu0
  %v1556 = vadd.f32 %v88, %v1555
  %v1557 = vpop.f32.mrb[0].mxu0
  %1558 = vmatprep.mubr.bf16.mxu0 0
  %1559 = vmatmul.mubr.bf16.gmra.mrb[0].mxu0 %v1392
  %v1560 = vpop.f32.mrb[0].mxu0
  %v1561 = vadd.f32 %v88, %v1560
  %v1562 = vpop.f32.mrb[0].mxu0
  %v1563 = vpop.f32.mrb[0].mxu0
  %v1564 = vadd.f32 %v88, %v1563
  %v1565 = vpop.f32.mrb[0].mxu0
  %1566 = vmatprep.mubr.bf16.mxu0 0
  %1567 = vmatmul.mubr.bf16.gmra.mrb[0].mxu0 %v1395
  %v1568 = vpop.f32.mrb[0].mxu0
  %v1569 = vadd.f32 %v88, %v1568
  %v1570 = vpop.f32.mrb[0].mxu0
  %v1571 = vpop.f32.mrb[0].mxu0
  %v1572 = vadd.f32 %v88, %v1571
  %v1573 = vpop.f32.mrb[0].mxu0
  %1574 = vmatprep.mubr.bf16.mxu0 0
  %1575 = vmatmul.mubr.bf16.gmra.mrb[0].mxu0 %v1398
  %v1576 = vpop.f32.mrb[0].mxu0
  %v1577 = vadd.f32 %v88, %v1576
  %v1578 = vpop.f32.mrb[0].mxu0
  %v1579 = vpop.f32.mrb[0].mxu0
  %v1580 = vadd.f32 %v88, %v1579
  %v1581 = vpop.f32.mrb[0].mxu0
  %1582 = vmatprep.mubr.bf16.mxu0 0
  %1583 = vmatmul.mubr.bf16.gmra.mrb[0].mxu0 %v1401
  %v1584 = vpop.f32.mrb[0].mxu0
  %v1585 = vadd.f32 %v88, %v1584
  %v1586 = vpop.f32.mrb[0].mxu0
  %v1587 = vpop.f32.mrb[0].mxu0
  %v1588 = vadd.f32 %v88, %v1587
  %v1589 = vpop.f32.mrb[0].mxu0
  %1590 = vmatprep.mubr.bf16.mxu0 0
  %1591 = vmatmul.mubr.bf16.gmra.mrb[0].mxu0 %v1404
  %v1592 = vpop.f32.mrb[0].mxu0
  %v1593 = vadd.f32 %v88, %v1592
  %v1594 = vpop.f32.mrb[0].mxu0
  %v1595 = vpop.f32.mrb[0].mxu0
  %v1596 = vadd.f32 %v88, %v1595
  %v1597 = vpop.f32.mrb[0].mxu0
  %1598 = vmatprep.mubr.bf16.mxu0 0
  %1599 = vmatmul.mubr.bf16.gmra.mrb[0].mxu0 %v1407
  %v1600 = vpop.f32.mrb[0].mxu0
  %v1601 = vadd.f32 %v88, %v1600
  %v1602 = vpop.f32.mrb[0].mxu0
  %v1603 = vpop.f32.mrb[0].mxu0
  %v1604 = vadd.f32 %v88, %v1603
  %v1605 = vpop.f32.mrb[0].mxu0
  %1606 = vmatprep.mubr.bf16.mxu0 0
  %1607 = vmatmul.mubr.bf16.gmra.mrb[0].mxu0 %v1410
  %v1608 = vpop.f32.mrb[0].mxu0
  %v1609 = vadd.f32 %v88, %v1608
  %v1610 = vpop.f32.mrb[0].mxu0
  %v1611 = vpop.f32.mrb[0].mxu0
  %v1612 = vadd.f32 %v88, %v1611
  %v1613 = vpop.f32.mrb[0].mxu0
  %1614 = vmatprep.mubr.bf16.mxu0 0
  %1615 = vmatmul.mubr.bf16.gmra.mrb[0].mxu0 %v1413
  %v1616 = vpop.f32.mrb[0].mxu0
  %v1617 = vadd.f32 %v88, %v1616
  %v1618 = vpop.f32.mrb[0].mxu0
  %v1619 = vpop.f32.mrb[0].mxu0
  %v1620 = vadd.f32 %v88, %v1619
  %v1621 = vpop.f32.mrb[0].mxu0
  %1622 = vmatprep.mubr.bf16.mxu0 0
  %1623 = vmatmul.mubr.bf16.gmra.mrb[0].mxu0 %v1416
  %v1624 = vpop.f32.mrb[0].mxu0
  %v1625 = vadd.f32 %v88, %v1624
  %v1626 = vpop.f32.mrb[0].mxu0
  %v1627 = vpop.f32.mrb[0].mxu0
  %v1628 = vadd.f32 %v88, %v1627
  %v1629 = vpop.f32.mrb[0].mxu0
  %1630 = vmatprep.mubr.bf16.mxu0 0
  %1631 = vmatmul.mubr.bf16.gmra.mrb[0].mxu0 %v1419
  %v1632 = vpop.f32.mrb[0].mxu0
  %v1633 = vadd.f32 %v88, %v1632
  %v1634 = vpop.f32.mrb[0].mxu0
  %v1635 = vpop.f32.mrb[0].mxu0
  %v1636 = vadd.f32 %v88, %v1635
  %v1637 = vpop.f32.mrb[0].mxu0
  %1638 = vmatprep.mubr.bf16.mxu0 0
  %1639 = vmatmul.mubr.bf16.gmra.mrb[0].mxu0 %v1422
  %v1640 = vpop.f32.mrb[0].mxu0
  %v1641 = vadd.f32 %v88, %v1640
  %v1642 = vpop.f32.mrb[0].mxu0
  %v1643 = vpop.f32.mrb[0].mxu0
  %v1644 = vadd.f32 %v88, %v1643
  %v1645 = vpop.f32.mrb[0].mxu0
  %1646 = vmatprep.mubr.bf16.mxu0 0
  %1647 = vmatmul.mubr.bf16.gmra.mrb[0].mxu0 %v1425
  %v1648 = vpop.f32.mrb[0].mxu0
  %v1649 = vadd.f32 %v88, %v1648
  %v1650 = vpop.f32.mrb[0].mxu0
  %v1651 = vpop.f32.mrb[0].mxu0
  %v1652 = vadd.f32 %v88, %v1651
  %v1653 = vpop.f32.mrb[0].mxu0
  %1654 = vmatprep.mubr.bf16.mxu0 0
  %1655 = vmatmul.mubr.bf16.gmra.mrb[0].mxu0 %v1428
  %v1656 = vpop.f32.mrb[0].mxu0
  %v1657 = vadd.f32 %v88, %v1656
  %v1658 = vpop.f32.mrb[0].mxu0
  %v1659 = vpop.f32.mrb[0].mxu0
  %v1660 = vpop.f32.mrb[0].mxu0
  %1661 = vdwg.mxu0
  %v1662 = vmax.f32 %v1465, 0.0
  %v1663 = vmax.f32 %v1468, 0.0
  %v1664 = vmax.f32 %v1473, 0.0
  %v1665 = vmax.f32 %v1476, 0.0
  %v1666 = vmax.f32 %v1481, 0.0
  %v1667 = vmax.f32 %v1484, 0.0
  %v1668 = vmax.f32 %v1489, 0.0
  %v1669 = vmax.f32 %v1492, 0.0
  %v1670 = vmax.f32 %v1497, 0.0
  %v1671 = vmax.f32 %v1500, 0.0
  %v1672 = vmax.f32 %v1505, 0.0
  %v1673 = vmax.f32 %v1508, 0.0
  %v1674 = vmax.f32 %v1513, 0.0
  %v1675 = vmax.f32 %v1516, 0.0
  %v1676 = vmax.f32 %v1521, 0.0
  %v1677 = vmax.f32 %v1524, 0.0
  %v1678 = vmax.f32 %v1529, 0.0
  %v1679 = vmax.f32 %v1532, 0.0
  %v1680 = vmax.f32 %v1537, 0.0
  %v1681 = vmax.f32 %v1540, 0.0
  %v1682 = vmax.f32 %v1545, 0.0
  %v1683 = vmax.f32 %v1548, 0.0
  %v1684 = vmax.f32 %v1553, 0.0
  %v1685 = vmax.f32 %v1556, 0.0
  %v1686 = vmax.f32 %v1561, 0.0
  %v1687 = vmax.f32 %v1564, 0.0
  %v1688 = vmax.f32 %v1569, 0.0
  %v1689 = vmax.f32 %v1572, 0.0
  %v1690 = vmax.f32 %v1577, 0.0
  %v1691 = vmax.f32 %v1580, 0.0
  %v1692 = vmax.f32 %v1585, 0.0
  %v1693 = vmax.f32 %v1588, 0.0
  %v1694 = vmax.f32 %v1593, 0.0
  %v1695 = vmax.f32 %v1596, 0.0
  %v1696 = vmax.f32 %v1601, 0.0
  %v1697 = vmax.f32 %v1604, 0.0
  %v1698 = vmax.f32 %v1609, 0.0
  %v1699 = vmax.f32 %v1612, 0.0
  %v1700 = vmax.f32 %v1617, 0.0
  %v1701 = vmax.f32 %v1620, 0.0
  %v1702 = vmax.f32 %v1625, 0.0
  %v1703 = vmax.f32 %v1628, 0.0
  %v1704 = vmax.f32 %v1633, 0.0
  %v1705 = vmax.f32 %v1636, 0.0
  %v1706 = vmax.f32 %v1641, 0.0
  %v1707 = vmax.f32 %v1644, 0.0
  %v1708 = vmax.f32 %v1649, 0.0
  %v1709 = vmax.f32 %v1652, 0.0
  %v1710 = vmax.f32 %v1657, 0.0
  %v1711 = vld [vmem:[%s3] sm:$0xf]
  %v1712 = vld [vmem:[%s3 + $0x4] sm:$0xf]
  %v1713 = vld [vmem:[%s3 + $0x8] sm:$0xf]
  %v1714 = vld [vmem:[%s3 + $0xc] sm:$0xf]
  %v1715 = vld [vmem:[%s3 + $0x10] sm:$0xf]
  %v1716 = vld [vmem:[%s3 + $0x14] sm:$0xf]
  %v1717 = vld [vmem:[%s3 + $0x18] sm:$0xf]
  %v1718 = vld [vmem:[%s3 + $0x1c] sm:$0xf]
  %v1719 = vld [vmem:[%s3 + $0x20] sm:$0xf]
  %v1720 = vld [vmem:[%s3 + $0x24] sm:$0xf]
  %v1721 = vld [vmem:[%s3 + $0x28] sm:$0xf]
  %v1722 = vld [vmem:[%s3 + $0x2c] sm:$0xf]
  %v1723 = vld [vmem:[%s3 + $0x30] sm:$0xf]
  %v1724 = vld [vmem:[%s3 + $0x34] sm:$0xf]
  %v1725 = vld [vmem:[%s3 + $0x38] sm:$0xf]
  %v1726 = vld [vmem:[%s3 + $0x3c] sm:$0xf]
  %v1727 = vld [vmem:[%s3 + $0x40] sm:$0xf]
  %v1728 = vld [vmem:[%s3 + $0x44] sm:$0xf]
  %v1729 = vld [vmem:[%s3 + $0x48] sm:$0xf]
  %v1730 = vld [vmem:[%s3 + $0x4c] sm:$0xf]
  %v1731 = vld [vmem:[%s3 + $0x50] sm:$0xf]
  %v1732 = vld [vmem:[%s3 + $0x54] sm:$0xf]
  %v1733 = vld [vmem:[%s3 + $0x58] sm:$0xf]
  %v1734 = vld [vmem:[%s3 + $0x5c] sm:$0xf]
  %v1735 = vld [vmem:[%s3 + $0x60] sm:$0xf]
  %v1736 = vld [vmem:[%s3 + $0x64] sm:$0xf]
  %v1737 = vld [vmem:[%s3 + $0x68] sm:$0xf]
  %v1738 = vld [vmem:[%s3 + $0x6c] sm:$0xf]
  %v1739 = vld [vmem:[%s3 + $0x70] sm:$0xf]
  %v1740 = vld [vmem:[%s3 + $0x74] sm:$0xf]
  %v1741 = vld [vmem:[%s3 + $0x78] sm:$0xf]
  %v1742 = vld [vmem:[%s3 + $0x7c] sm:$0xf]
  %v1743 = vld [vmem:[%s3 + $0x80] sm:$0xf]
  %v1744 = vld [vmem:[%s3 + $0x84] sm:$0xf]
  %v1745 = vld [vmem:[%s3 + $0x88] sm:$0xf]
  %v1746 = vld [vmem:[%s3 + $0x8c] sm:$0xf]
  %v1747 = vld [vmem:[%s3 + $0x90] sm:$0xf]
  %v1748 = vld [vmem:[%s3 + $0x94] sm:$0xf]
  %v1749 = vld [vmem:[%s3 + $0x98] sm:$0xf]
  %v1750 = vld [vmem:[%s3 + $0x9c] sm:$0xf]
  %v1751 = vld [vmem:[%s3 + $0xa0] sm:$0xf]
  %v1752 = vld [vmem:[%s3 + $0xa4] sm:$0xf]
  %v1753 = vld [vmem:[%s3 + $0xa8] sm:$0xf]
  %v1754 = vld [vmem:[%s3 + $0xac] sm:$0xf]
  %v1755 = vld [vmem:[%s3 + $0xb0] sm:$0xf]
  %v1756 = vld [vmem:[%s3 + $0xb4] sm:$0xf]
  %v1757 = vld [vmem:[%s3 + $0xb8] sm:$0xf]
  %v1758 = vld [vmem:[%s3 + $0xbc] sm:$0xf]
  %v1759 = vld [vmem:[%s3 + $0xc0] sm:$0xf]
  %v1809 = vunpack.c.l.b16 %v1711
  %v1810 = vunpack.c.l.b16 %v1712
  %v1811 = vunpack.c.l.b16 %v1713
  %v1812 = vunpack.c.l.b16 %v1714
  %v1813 = vunpack.c.l.b16 %v1715
  %v1814 = vunpack.c.l.b16 %v1716
  %v1815 = vunpack.c.l.b16 %v1717
  %v1816 = vunpack.c.l.b16 %v1718
  %v1817 = vunpack.c.l.b16 %v1719
  %v1818 = vunpack.c.l.b16 %v1720
  %v1819 = vunpack.c.l.b16 %v1721
  %v1820 = vunpack.c.l.b16 %v1722
  %v1821 = vunpack.c.l.b16 %v1723
  %v1822 = vunpack.c.l.b16 %v1724
  %v1823 = vunpack.c.l.b16 %v1725
  %v1824 = vunpack.c.l.b16 %v1726
  %v1825 = vunpack.c.l.b16 %v1727
  %v1826 = vunpack.c.l.b16 %v1728
  %v1827 = vunpack.c.l.b16 %v1729
  %v1828 = vunpack.c.l.b16 %v1730
  %v1829 = vunpack.c.l.b16 %v1731
  %v1830 = vunpack.c.l.b16 %v1732
  %v1831 = vunpack.c.l.b16 %v1733
  %v1832 = vunpack.c.l.b16 %v1734
  %v1833 = vunpack.c.l.b16 %v1735
  %v1834 = vunpack.c.l.b16 %v1736
  %v1835 = vunpack.c.l.b16 %v1737
  %v1836 = vunpack.c.l.b16 %v1738
  %v1837 = vunpack.c.l.b16 %v1739
  %v1838 = vunpack.c.l.b16 %v1740
  %v1839 = vunpack.c.l.b16 %v1741
  %v1840 = vunpack.c.l.b16 %v1742
  %v1841 = vunpack.c.l.b16 %v1743
  %v1842 = vunpack.c.l.b16 %v1744
  %v1843 = vunpack.c.l.b16 %v1745
  %v1844 = vunpack.c.l.b16 %v1746
  %v1845 = vunpack.c.l.b16 %v1747
  %v1846 = vunpack.c.l.b16 %v1748
  %v1847 = vunpack.c.l.b16 %v1749
  %v1848 = vunpack.c.l.b16 %v1750
  %v1849 = vunpack.c.l.b16 %v1751
  %v1850 = vunpack.c.l.b16 %v1752
  %v1851 = vunpack.c.l.b16 %v1753
  %v1852 = vunpack.c.l.b16 %v1754
  %v1853 = vunpack.c.l.b16 %v1755
  %v1854 = vunpack.c.l.b16 %v1756
  %v1855 = vunpack.c.l.b16 %v1757
  %v1856 = vunpack.c.l.b16 %v1758
  %v1857 = vunpack.c.l.b16 %v1759
  %v1858 = vpack.c.b16 %v1810, %v1809
  %v1859 = vpack.c.b16 %v1812, %v1811
  %v1860 = vpack.c.b16 %v1814, %v1813
  %v1861 = vpack.c.b16 %v1816, %v1815
  %v1862 = vpack.c.b16 %v1818, %v1817
  %v1863 = vpack.c.b16 %v1820, %v1819
  %v1864 = vpack.c.b16 %v1822, %v1821
  %v1865 = vpack.c.b16 %v1824, %v1823
  %v1866 = vpack.c.b16 %v1826, %v1825
  %v1867 = vpack.c.b16 %v1828, %v1827
  %v1868 = vpack.c.b16 %v1830, %v1829
  %v1869 = vpack.c.b16 %v1832, %v1831
  %v1870 = vpack.c.b16 %v1834, %v1833
  %v1871 = vpack.c.b16 %v1836, %v1835
  %v1872 = vpack.c.b16 %v1838, %v1837
  %v1873 = vpack.c.b16 %v1840, %v1839
  %v1874 = vpack.c.b16 %v1842, %v1841
  %v1875 = vpack.c.b16 %v1844, %v1843
  %v1876 = vpack.c.b16 %v1846, %v1845
  %v1877 = vpack.c.b16 %v1848, %v1847
  %v1878 = vpack.c.b16 %v1850, %v1849
  %v1879 = vpack.c.b16 %v1852, %v1851
  %v1880 = vpack.c.b16 %v1854, %v1853
  %v1881 = vpack.c.b16 %v1856, %v1855
  %v1882 = vpack.c.b16 %v1857, %v1857
  %v1884 = vsel %vm242, %v1858, 0
  %v1887 = vsel %vm242, %v1859, 0
  %v1890 = vsel %vm242, %v1860, 0
  %v1893 = vsel %vm242, %v1861, 0
  %v1896 = vsel %vm242, %v1862, 0
  %v1899 = vsel %vm242, %v1863, 0
  %v1902 = vsel %vm242, %v1864, 0
  %v1905 = vsel %vm242, %v1865, 0
  %v1908 = vsel %vm242, %v1866, 0
  %v1911 = vsel %vm242, %v1867, 0
  %v1914 = vsel %vm242, %v1868, 0
  %v1917 = vsel %vm242, %v1869, 0
  %v1920 = vsel %vm242, %v1870, 0
  %v1923 = vsel %vm242, %v1871, 0
  %v1926 = vsel %vm242, %v1872, 0
  %v1929 = vsel %vm242, %v1873, 0
  %v1932 = vsel %vm242, %v1874, 0
  %v1935 = vsel %vm242, %v1875, 0
  %v1938 = vsel %vm242, %v1876, 0
  %v1941 = vsel %vm242, %v1877, 0
  %v1944 = vsel %vm242, %v1878, 0
  %v1947 = vsel %vm242, %v1879, 0
  %v1950 = vsel %vm242, %v1880, 0
  %v1953 = vsel %vm242, %v1881, 0
  %v1956 = vsel %vm242, %v1882, 0
  %1958 = vmatprep.subr.bf16.mxu0 0
  %1959 = vmatpush1.bf16.msra.mxu0 %v233
  %1960 = vmatprep.subr.bf16.mxu0 0
  %1961 = vmatpush1.bf16.msra.mxu0 %v234
  %1962 = vmatprep.subr.bf16.mxu0 0
  %1963 = vmatpush1.bf16.msra.mxu0 %v235
  %1964 = vmatprep.subr.bf16.mxu0 0
  %1965 = vmatpush1.bf16.msra.mxu0 %v236
  %1966 = vmatprep.subr.bf16.mxu0 0
  %1967 = vmatpush1.bf16.msra.mxu0 %v323
  %1968 = vmatprep.subr.bf16.mxu0 0
  %1969 = vmatpush1.bf16.msra.mxu0 0
  %1970 = vmatprep.subr.bf16.mxu0 0
  %1971 = vmatpush1.bf16.msra.mxu0 0
  %1972 = vmatprep.subr.bf16.mxu0 0
  %1973 = vmatpush1.bf16.msra.mxu0 0
  %1974 = vmatprep.subr.bf16.mxu0 0
  %1975 = vmatpush1.bf16.msra.mxu0 0
  %1976 = vmatprep.subr.bf16.mxu0 0
  %1977 = vmatpush1.bf16.msra.mxu0 0
  %1978 = vmatprep.subr.bf16.mxu0 0
  %1979 = vmatpush1.bf16.msra.mxu0 0
  %1980 = vmatprep.subr.bf16.mxu0 0
  %1981 = vmatpush1.bf16.msra.mxu0 0
  %1982 = vmatprep.subr.bf16.mxu0 0
  %1983 = vmatpush1.bf16.msra.mxu0 0
  %1984 = vmatprep.subr.bf16.mxu0 0
  %1985 = vmatpush1.bf16.msra.mxu0 0
  %1986 = vmatprep.subr.bf16.mxu0 0
  %1987 = vmatpush1.bf16.msra.mxu0 0
  %1988 = vmatprep.subr.bf16.mxu0 0
  %1989 = vmatpush1.bf16.msra.mxu0 0
  %1990 = vmatprep.mubr.bf16.mxu0 0
  %1991 = vmatmul.mubr.bf16.gmra.mrb[0].mxu0 %v1884
  %v1992 = vpop.f32.mrb[0].mxu0
  %v1993 = vadd.f32 %v88, %v1992
  %v1994 = vpop.f32.mrb[0].mxu0
  %v1995 = vpop.f32.mrb[0].mxu0
  %v1996 = vadd.f32 %v88, %v1995
  %v1997 = vpop.f32.mrb[0].mxu0
  %1998 = vmatprep.mubr.bf16.mxu0 0
  %1999 = vmatmul.mubr.bf16.gmra.mrb[0].mxu0 %v1887
  %v2000 = vpop.f32.mrb[0].mxu0
  %v2001 = vadd.f32 %v88, %v2000
  %v2002 = vpop.f32.mrb[0].mxu0
  %v2003 = vpop.f32.mrb[0].mxu0
  %v2004 = vadd.f32 %v88, %v2003
  %v2005 = vpop.f32.mrb[0].mxu0
  %2006 = vmatprep.mubr.bf16.mxu0 0
  %2007 = vmatmul.mubr.bf16.gmra.mrb[0].mxu0 %v1890
  %v2008 = vpop.f32.mrb[0].mxu0
  %v2009 = vadd.f32 %v88, %v2008
  %v2010 = vpop.f32.mrb[0].mxu0
  %v2011 = vpop.f32.mrb[0].mxu0
  %v2012 = vadd.f32 %v88, %v2011
  %v2013 = vpop.f32.mrb[0].mxu0
  %2014 = vmatprep.mubr.bf16.mxu0 0
  %2015 = vmatmul.mubr.bf16.gmra.mrb[0].mxu0 %v1893
  %v2016 = vpop.f32.mrb[0].mxu0
  %v2017 = vadd.f32 %v88, %v2016
  %v2018 = vpop.f32.mrb[0].mxu0
  %v2019 = vpop.f32.mrb[0].mxu0
  %v2020 = vadd.f32 %v88, %v2019
  %v2021 = vpop.f32.mrb[0].mxu0
  %2022 = vmatprep.mubr.bf16.mxu0 0
  %2023 = vmatmul.mubr.bf16.gmra.mrb[0].mxu0 %v1896
  %v2024 = vpop.f32.mrb[0].mxu0
  %v2025 = vadd.f32 %v88, %v2024
  %v2026 = vpop.f32.mrb[0].mxu0
  %v2027 = vpop.f32.mrb[0].mxu0
  %v2028 = vadd.f32 %v88, %v2027
  %v2029 = vpop.f32.mrb[0].mxu0
  %2030 = vmatprep.mubr.bf16.mxu0 0
  %2031 = vmatmul.mubr.bf16.gmra.mrb[0].mxu0 %v1899
  %v2032 = vpop.f32.mrb[0].mxu0
  %v2033 = vadd.f32 %v88, %v2032
  %v2034 = vpop.f32.mrb[0].mxu0
  %v2035 = vpop.f32.mrb[0].mxu0
  %v2036 = vadd.f32 %v88, %v2035
  %v2037 = vpop.f32.mrb[0].mxu0
  %2038 = vmatprep.mubr.bf16.mxu0 0
  %2039 = vmatmul.mubr.bf16.gmra.mrb[0].mxu0 %v1902
  %v2040 = vpop.f32.mrb[0].mxu0
  %v2041 = vadd.f32 %v88, %v2040
  %v2042 = vpop.f32.mrb[0].mxu0
  %v2043 = vpop.f32.mrb[0].mxu0
  %v2044 = vadd.f32 %v88, %v2043
  %v2045 = vpop.f32.mrb[0].mxu0
  %2046 = vmatprep.mubr.bf16.mxu0 0
  %2047 = vmatmul.mubr.bf16.gmra.mrb[0].mxu0 %v1905
  %v2048 = vpop.f32.mrb[0].mxu0
  %v2049 = vadd.f32 %v88, %v2048
  %v2050 = vpop.f32.mrb[0].mxu0
  %v2051 = vpop.f32.mrb[0].mxu0
  %v2052 = vadd.f32 %v88, %v2051
  %v2053 = vpop.f32.mrb[0].mxu0
  %2054 = vmatprep.mubr.bf16.mxu0 0
  %2055 = vmatmul.mubr.bf16.gmra.mrb[0].mxu0 %v1908
  %v2056 = vpop.f32.mrb[0].mxu0
  %v2057 = vadd.f32 %v88, %v2056
  %v2058 = vpop.f32.mrb[0].mxu0
  %v2059 = vpop.f32.mrb[0].mxu0
  %v2060 = vadd.f32 %v88, %v2059
  %v2061 = vpop.f32.mrb[0].mxu0
  %2062 = vmatprep.mubr.bf16.mxu0 0
  %2063 = vmatmul.mubr.bf16.gmra.mrb[0].mxu0 %v1911
  %v2064 = vpop.f32.mrb[0].mxu0
  %v2065 = vadd.f32 %v88, %v2064
  %v2066 = vpop.f32.mrb[0].mxu0
  %v2067 = vpop.f32.mrb[0].mxu0
  %v2068 = vadd.f32 %v88, %v2067
  %v2069 = vpop.f32.mrb[0].mxu0
  %2070 = vmatprep.mubr.bf16.mxu0 0
  %2071 = vmatmul.mubr.bf16.gmra.mrb[0].mxu0 %v1914
  %v2072 = vpop.f32.mrb[0].mxu0
  %v2073 = vadd.f32 %v88, %v2072
  %v2074 = vpop.f32.mrb[0].mxu0
  %v2075 = vpop.f32.mrb[0].mxu0
  %v2076 = vadd.f32 %v88, %v2075
  %v2077 = vpop.f32.mrb[0].mxu0
  %2078 = vmatprep.mubr.bf16.mxu0 0
  %2079 = vmatmul.mubr.bf16.gmra.mrb[0].mxu0 %v1917
  %v2080 = vpop.f32.mrb[0].mxu0
  %v2081 = vadd.f32 %v88, %v2080
  %v2082 = vpop.f32.mrb[0].mxu0
  %v2083 = vpop.f32.mrb[0].mxu0
  %v2084 = vadd.f32 %v88, %v2083
  %v2085 = vpop.f32.mrb[0].mxu0
  %2086 = vmatprep.mubr.bf16.mxu0 0
  %2087 = vmatmul.mubr.bf16.gmra.mrb[0].mxu0 %v1920
  %v2088 = vpop.f32.mrb[0].mxu0
  %v2089 = vadd.f32 %v88, %v2088
  %v2090 = vpop.f32.mrb[0].mxu0
  %v2091 = vpop.f32.mrb[0].mxu0
  %v2092 = vadd.f32 %v88, %v2091
  %v2093 = vpop.f32.mrb[0].mxu0
  %2094 = vmatprep.mubr.bf16.mxu0 0
  %2095 = vmatmul.mubr.bf16.gmra.mrb[0].mxu0 %v1923
  %v2096 = vpop.f32.mrb[0].mxu0
  %v2097 = vadd.f32 %v88, %v2096
  %v2098 = vpop.f32.mrb[0].mxu0
  %v2099 = vpop.f32.mrb[0].mxu0
  %v2100 = vadd.f32 %v88, %v2099
  %v2101 = vpop.f32.mrb[0].mxu0
  %2102 = vmatprep.mubr.bf16.mxu0 0
  %2103 = vmatmul.mubr.bf16.gmra.mrb[0].mxu0 %v1926
  %v2104 = vpop.f32.mrb[0].mxu0
  %v2105 = vadd.f32 %v88, %v2104
  %v2106 = vpop.f32.mrb[0].mxu0
  %v2107 = vpop.f32.mrb[0].mxu0
  %v2108 = vadd.f32 %v88, %v2107
  %v2109 = vpop.f32.mrb[0].mxu0
  %2110 = vmatprep.mubr.bf16.mxu0 0
  %2111 = vmatmul.mubr.bf16.gmra.mrb[0].mxu0 %v1929
  %v2112 = vpop.f32.mrb[0].mxu0
  %v2113 = vadd.f32 %v88, %v2112
  %v2114 = vpop.f32.mrb[0].mxu0
  %v2115 = vpop.f32.mrb[0].mxu0
  %v2116 = vadd.f32 %v88, %v2115
  %v2117 = vpop.f32.mrb[0].mxu0
  %2118 = vmatprep.mubr.bf16.mxu0 0
  %2119 = vmatmul.mubr.bf16.gmra.mrb[0].mxu0 %v1932
  %v2120 = vpop.f32.mrb[0].mxu0
  %v2121 = vadd.f32 %v88, %v2120
  %v2122 = vpop.f32.mrb[0].mxu0
  %v2123 = vpop.f32.mrb[0].mxu0
  %v2124 = vadd.f32 %v88, %v2123
  %v2125 = vpop.f32.mrb[0].mxu0
  %2126 = vmatprep.mubr.bf16.mxu0 0
  %2127 = vmatmul.mubr.bf16.gmra.mrb[0].mxu0 %v1935
  %v2128 = vpop.f32.mrb[0].mxu0
  %v2129 = vadd.f32 %v88, %v2128
  %v2130 = vpop.f32.mrb[0].mxu0
  %v2131 = vpop.f32.mrb[0].mxu0
  %v2132 = vadd.f32 %v88, %v2131
  %v2133 = vpop.f32.mrb[0].mxu0
  %2134 = vmatprep.mubr.bf16.mxu0 0
  %2135 = vmatmul.mubr.bf16.gmra.mrb[0].mxu0 %v1938
  %v2136 = vpop.f32.mrb[0].mxu0
  %v2137 = vadd.f32 %v88, %v2136
  %v2138 = vpop.f32.mrb[0].mxu0
  %v2139 = vpop.f32.mrb[0].mxu0
  %v2140 = vadd.f32 %v88, %v2139
  %v2141 = vpop.f32.mrb[0].mxu0
  %2142 = vmatprep.mubr.bf16.mxu0 0
  %2143 = vmatmul.mubr.bf16.gmra.mrb[0].mxu0 %v1941
  %v2144 = vpop.f32.mrb[0].mxu0
  %v2145 = vadd.f32 %v88, %v2144
  %v2146 = vpop.f32.mrb[0].mxu0
  %v2147 = vpop.f32.mrb[0].mxu0
  %v2148 = vadd.f32 %v88, %v2147
  %v2149 = vpop.f32.mrb[0].mxu0
  %2150 = vmatprep.mubr.bf16.mxu0 0
  %2151 = vmatmul.mubr.bf16.gmra.mrb[0].mxu0 %v1944
  %v2152 = vpop.f32.mrb[0].mxu0
  %v2153 = vadd.f32 %v88, %v2152
  %v2154 = vpop.f32.mrb[0].mxu0
  %v2155 = vpop.f32.mrb[0].mxu0
  %v2156 = vadd.f32 %v88, %v2155
  %v2157 = vpop.f32.mrb[0].mxu0
  %2158 = vmatprep.mubr.bf16.mxu0 0
  %2159 = vmatmul.mubr.bf16.gmra.mrb[0].mxu0 %v1947
  %v2160 = vpop.f32.mrb[0].mxu0
  %v2161 = vadd.f32 %v88, %v2160
  %v2162 = vpop.f32.mrb[0].mxu0
  %v2163 = vpop.f32.mrb[0].mxu0
  %v2164 = vadd.f32 %v88, %v2163
  %v2165 = vpop.f32.mrb[0].mxu0
  %2166 = vmatprep.mubr.bf16.mxu0 0
  %2167 = vmatmul.mubr.bf16.gmra.mrb[0].mxu0 %v1950
  %v2168 = vpop.f32.mrb[0].mxu0
  %v2169 = vadd.f32 %v88, %v2168
  %v2170 = vpop.f32.mrb[0].mxu0
  %v2171 = vpop.f32.mrb[0].mxu0
  %v2172 = vadd.f32 %v88, %v2171
  %v2173 = vpop.f32.mrb[0].mxu0
  %2174 = vmatprep.mubr.bf16.mxu0 0
  %2175 = vmatmul.mubr.bf16.gmra.mrb[0].mxu0 %v1953
  %v2176 = vpop.f32.mrb[0].mxu0
  %v2177 = vadd.f32 %v88, %v2176
  %v2178 = vpop.f32.mrb[0].mxu0
  %v2179 = vpop.f32.mrb[0].mxu0
  %v2180 = vadd.f32 %v88, %v2179
  %v2181 = vpop.f32.mrb[0].mxu0
  %2182 = vmatprep.mubr.bf16.mxu0 0
  %2183 = vmatmul.mubr.bf16.gmra.mrb[0].mxu0 %v1956
  %v2184 = vpop.f32.mrb[0].mxu0
  %v2185 = vadd.f32 %v88, %v2184
  %v2186 = vpop.f32.mrb[0].mxu0
  %v2187 = vpop.f32.mrb[0].mxu0
  %v2188 = vpop.f32.mrb[0].mxu0
  %2189 = vdwg.mxu0
  %v2190 = vmax.f32 %v1993, 0.0
  %v2191 = vmax.f32 %v1996, 0.0
  %v2192 = vmax.f32 %v2001, 0.0
  %v2193 = vmax.f32 %v2004, 0.0
  %v2194 = vmax.f32 %v2009, 0.0
  %v2195 = vmax.f32 %v2012, 0.0
  %v2196 = vmax.f32 %v2017, 0.0
  %v2197 = vmax.f32 %v2020, 0.0
  %v2198 = vmax.f32 %v2025, 0.0
  %v2199 = vmax.f32 %v2028, 0.0
  %v2200 = vmax.f32 %v2033, 0.0
  %v2201 = vmax.f32 %v2036, 0.0
  %v2202 = vmax.f32 %v2041, 0.0
  %v2203 = vmax.f32 %v2044, 0.0
  %v2204 = vmax.f32 %v2049, 0.0
  %v2205 = vmax.f32 %v2052, 0.0
  %v2206 = vmax.f32 %v2057, 0.0
  %v2207 = vmax.f32 %v2060, 0.0
  %v2208 = vmax.f32 %v2065, 0.0
  %v2209 = vmax.f32 %v2068, 0.0
  %v2210 = vmax.f32 %v2073, 0.0
  %v2211 = vmax.f32 %v2076, 0.0
  %v2212 = vmax.f32 %v2081, 0.0
  %v2213 = vmax.f32 %v2084, 0.0
  %v2214 = vmax.f32 %v2089, 0.0
  %v2215 = vmax.f32 %v2092, 0.0
  %v2216 = vmax.f32 %v2097, 0.0
  %v2217 = vmax.f32 %v2100, 0.0
  %v2218 = vmax.f32 %v2105, 0.0
  %v2219 = vmax.f32 %v2108, 0.0
  %v2220 = vmax.f32 %v2113, 0.0
  %v2221 = vmax.f32 %v2116, 0.0
  %v2222 = vmax.f32 %v2121, 0.0
  %v2223 = vmax.f32 %v2124, 0.0
  %v2224 = vmax.f32 %v2129, 0.0
  %v2225 = vmax.f32 %v2132, 0.0
  %v2226 = vmax.f32 %v2137, 0.0
  %v2227 = vmax.f32 %v2140, 0.0
  %v2228 = vmax.f32 %v2145, 0.0
  %v2229 = vmax.f32 %v2148, 0.0
  %v2230 = vmax.f32 %v2153, 0.0
  %v2231 = vmax.f32 %v2156, 0.0
  %v2232 = vmax.f32 %v2161, 0.0
  %v2233 = vmax.f32 %v2164, 0.0
  %v2234 = vmax.f32 %v2169, 0.0
  %v2235 = vmax.f32 %v2172, 0.0
  %v2236 = vmax.f32 %v2177, 0.0
  %v2237 = vmax.f32 %v2180, 0.0
  %v2238 = vmax.f32 %v2185, 0.0
  %v2239 = vmax.f32 %v1662, %v2190
  %v2240 = vmax.f32 %v1663, %v2191
  %v2241 = vmax.f32 %v1664, %v2192
  %v2242 = vmax.f32 %v1665, %v2193
  %v2243 = vmax.f32 %v1666, %v2194
  %v2244 = vmax.f32 %v1667, %v2195
  %v2245 = vmax.f32 %v1668, %v2196
  %v2246 = vmax.f32 %v1669, %v2197
  %v2247 = vmax.f32 %v1670, %v2198
  %v2248 = vmax.f32 %v1671, %v2199
  %v2249 = vmax.f32 %v1672, %v2200
  %v2250 = vmax.f32 %v1673, %v2201
  %v2251 = vmax.f32 %v1674, %v2202
  %v2252 = vmax.f32 %v1675, %v2203
  %v2253 = vmax.f32 %v1676, %v2204
  %v2254 = vmax.f32 %v1677, %v2205
  %v2255 = vmax.f32 %v1678, %v2206
  %v2256 = vmax.f32 %v1679, %v2207
  %v2257 = vmax.f32 %v1680, %v2208
  %v2258 = vmax.f32 %v1681, %v2209
  %v2259 = vmax.f32 %v1682, %v2210
  %v2260 = vmax.f32 %v1683, %v2211
  %v2261 = vmax.f32 %v1684, %v2212
  %v2262 = vmax.f32 %v1685, %v2213
  %v2263 = vmax.f32 %v1686, %v2214
  %v2264 = vmax.f32 %v1687, %v2215
  %v2265 = vmax.f32 %v1688, %v2216
  %v2266 = vmax.f32 %v1689, %v2217
  %v2267 = vmax.f32 %v1690, %v2218
  %v2268 = vmax.f32 %v1691, %v2219
  %v2269 = vmax.f32 %v1692, %v2220
  %v2270 = vmax.f32 %v1693, %v2221
  %v2271 = vmax.f32 %v1694, %v2222
  %v2272 = vmax.f32 %v1695, %v2223
  %v2273 = vmax.f32 %v1696, %v2224
  %v2274 = vmax.f32 %v1697, %v2225
  %v2275 = vmax.f32 %v1698, %v2226
  %v2276 = vmax.f32 %v1699, %v2227
  %v2277 = vmax.f32 %v1700, %v2228
  %v2278 = vmax.f32 %v1701, %v2229
  %v2279 = vmax.f32 %v1702, %v2230
  %v2280 = vmax.f32 %v1703, %v2231
  %v2281 = vmax.f32 %v1704, %v2232
  %v2282 = vmax.f32 %v1705, %v2233
  %v2283 = vmax.f32 %v1706, %v2234
  %v2284 = vmax.f32 %v1707, %v2235
  %v2285 = vmax.f32 %v1708, %v2236
  %v2286 = vmax.f32 %v1709, %v2237
  %v2287 = vmax.f32 %v1710, %v2238
  %v2288 = vmax.f32 %v1134, %v2239
  %v2289 = vmax.f32 %v1135, %v2240
  %v2290 = vmax.f32 %v1136, %v2241
  %v2291 = vmax.f32 %v1137, %v2242
  %v2292 = vmax.f32 %v1138, %v2243
  %v2293 = vmax.f32 %v1139, %v2244
  %v2294 = vmax.f32 %v1140, %v2245
  %v2295 = vmax.f32 %v1141, %v2246
  %v2296 = vmax.f32 %v1142, %v2247
  %v2297 = vmax.f32 %v1143, %v2248
  %v2298 = vmax.f32 %v1144, %v2249
  %v2299 = vmax.f32 %v1145, %v2250
  %v2300 = vmax.f32 %v1146, %v2251
  %v2301 = vmax.f32 %v1147, %v2252
  %v2302 = vmax.f32 %v1148, %v2253
  %v2303 = vmax.f32 %v1149, %v2254
  %v2304 = vmax.f32 %v1150, %v2255
  %v2305 = vmax.f32 %v1151, %v2256
  %v2306 = vmax.f32 %v1152, %v2257
  %v2307 = vmax.f32 %v1153, %v2258
  %v2308 = vmax.f32 %v1154, %v2259
  %v2309 = vmax.f32 %v1155, %v2260
  %v2310 = vmax.f32 %v1156, %v2261
  %v2311 = vmax.f32 %v1157, %v2262
  %v2312 = vmax.f32 %v1158, %v2263
  %v2313 = vmax.f32 %v1159, %v2264
  %v2314 = vmax.f32 %v1160, %v2265
  %v2315 = vmax.f32 %v1161, %v2266
  %v2316 = vmax.f32 %v1162, %v2267
  %v2317 = vmax.f32 %v1163, %v2268
  %v2318 = vmax.f32 %v1164, %v2269
  %v2319 = vmax.f32 %v1165, %v2270
  %v2320 = vmax.f32 %v1166, %v2271
  %v2321 = vmax.f32 %v1167, %v2272
  %v2322 = vmax.f32 %v1168, %v2273
  %v2323 = vmax.f32 %v1169, %v2274
  %v2324 = vmax.f32 %v1170, %v2275
  %v2325 = vmax.f32 %v1171, %v2276
  %v2326 = vmax.f32 %v1172, %v2277
  %v2327 = vmax.f32 %v1173, %v2278
  %v2328 = vmax.f32 %v1174, %v2279
  %v2329 = vmax.f32 %v1175, %v2280
  %v2330 = vmax.f32 %v1176, %v2281
  %v2331 = vmax.f32 %v1177, %v2282
  %v2332 = vmax.f32 %v1178, %v2283
  %v2333 = vmax.f32 %v1179, %v2284
  %v2334 = vmax.f32 %v1180, %v2285
  %v2335 = vmax.f32 %v1181, %v2286
  %v2336 = vmax.f32 %v1182, %v2287
  %v2337 = vpack.c.bf16 %v2289, %v2288
  %v2338 = vpack.c.bf16 %v2291, %v2290
  %v2339 = vpack.c.bf16 %v2293, %v2292
  %v2340 = vpack.c.bf16 %v2295, %v2294
  %v2341 = vpack.c.bf16 %v2297, %v2296
  %v2342 = vpack.c.bf16 %v2299, %v2298
  %v2343 = vpack.c.bf16 %v2301, %v2300
  %v2344 = vpack.c.bf16 %v2303, %v2302
  %v2345 = vpack.c.bf16 %v2305, %v2304
  %v2346 = vpack.c.bf16 %v2307, %v2306
  %v2347 = vpack.c.bf16 %v2309, %v2308
  %v2348 = vpack.c.bf16 %v2311, %v2310
  %v2349 = vpack.c.bf16 %v2313, %v2312
  %v2350 = vpack.c.bf16 %v2315, %v2314
  %v2351 = vpack.c.bf16 %v2317, %v2316
  %v2352 = vpack.c.bf16 %v2319, %v2318
  %v2353 = vpack.c.bf16 %v2321, %v2320
  %v2354 = vpack.c.bf16 %v2323, %v2322
  %v2355 = vpack.c.bf16 %v2325, %v2324
  %v2356 = vpack.c.bf16 %v2327, %v2326
  %v2357 = vpack.c.bf16 %v2329, %v2328
  %v2358 = vpack.c.bf16 %v2331, %v2330
  %v2359 = vpack.c.bf16 %v2333, %v2332
  %v2360 = vpack.c.bf16 %v2335, %v2334
  %v2361 = vpack.c.bf16 %v2336, %v2336
  %v2387 = vunpack.c.l.b16 %v2337
  %v2388 = vunpack.c.h.b16 %v2337
  %v2389 = vunpack.c.l.b16 %v2338
  %v2390 = vunpack.c.h.b16 %v2338
  %v2391 = vunpack.c.l.b16 %v2339
  %v2392 = vunpack.c.h.b16 %v2339
  %v2393 = vunpack.c.l.b16 %v2340
  %v2394 = vunpack.c.h.b16 %v2340
  %v2395 = vunpack.c.l.b16 %v2341
  %v2396 = vunpack.c.h.b16 %v2341
  %v2397 = vunpack.c.l.b16 %v2342
  %v2398 = vunpack.c.h.b16 %v2342
  %v2399 = vunpack.c.l.b16 %v2343
  %v2400 = vunpack.c.h.b16 %v2343
  %v2401 = vunpack.c.l.b16 %v2344
  %v2402 = vunpack.c.h.b16 %v2344
  %v2403 = vunpack.c.l.b16 %v2345
  %v2404 = vunpack.c.h.b16 %v2345
  %v2405 = vunpack.c.l.b16 %v2346
  %v2406 = vunpack.c.h.b16 %v2346
  %v2407 = vunpack.c.l.b16 %v2347
  %v2408 = vunpack.c.h.b16 %v2347
  %v2409 = vunpack.c.l.b16 %v2348
  %v2410 = vunpack.c.h.b16 %v2348
  %v2411 = vunpack.c.l.b16 %v2349
  %v2412 = vunpack.c.h.b16 %v2349
  %v2413 = vunpack.c.l.b16 %v2350
  %v2414 = vunpack.c.h.b16 %v2350
  %v2415 = vunpack.c.l.b16 %v2351
  %v2416 = vunpack.c.h.b16 %v2351
  %v2417 = vunpack.c.l.b16 %v2352
  %v2418 = vunpack.c.h.b16 %v2352
  %v2419 = vunpack.c.l.b16 %v2353
  %v2420 = vunpack.c.h.b16 %v2353
  %v2421 = vunpack.c.l.b16 %v2354
  %v2422 = vunpack.c.h.b16 %v2354
  %v2423 = vunpack.c.l.b16 %v2355
  %v2424 = vunpack.c.h.b16 %v2355
  %v2425 = vunpack.c.l.b16 %v2356
  %v2426 = vunpack.c.h.b16 %v2356
  %v2427 = vunpack.c.l.b16 %v2357
  %v2428 = vunpack.c.h.b16 %v2357
  %v2429 = vunpack.c.l.b16 %v2358
  %v2430 = vunpack.c.h.b16 %v2358
  %v2431 = vunpack.c.l.b16 %v2359
  %v2432 = vunpack.c.h.b16 %v2359
  %v2433 = vunpack.c.l.b16 %v2360
  %v2434 = vunpack.c.h.b16 %v2360
  %v2435 = vunpack.c.l.b16 %v2361
  %v2436 = vpack.c.b16 %v2387, %v2387
  %v2437 = vpack.c.b16 %v2388, %v2388
  %v2438 = vpack.c.b16 %v2389, %v2389
  %v2439 = vpack.c.b16 %v2390, %v2390
  %v2440 = vpack.c.b16 %v2391, %v2391
  %v2441 = vpack.c.b16 %v2392, %v2392
  %v2442 = vpack.c.b16 %v2393, %v2393
  %v2443 = vpack.c.b16 %v2394, %v2394
  %v2444 = vpack.c.b16 %v2395, %v2395
  %v2445 = vpack.c.b16 %v2396, %v2396
  %v2446 = vpack.c.b16 %v2397, %v2397
  %v2447 = vpack.c.b16 %v2398, %v2398
  %v2448 = vpack.c.b16 %v2399, %v2399
  %v2449 = vpack.c.b16 %v2400, %v2400
  %v2450 = vpack.c.b16 %v2401, %v2401
  %v2451 = vpack.c.b16 %v2402, %v2402
  %v2452 = vpack.c.b16 %v2403, %v2403
  %v2453 = vpack.c.b16 %v2404, %v2404
  %v2454 = vpack.c.b16 %v2405, %v2405
  %v2455 = vpack.c.b16 %v2406, %v2406
  %v2456 = vpack.c.b16 %v2407, %v2407
  %v2457 = vpack.c.b16 %v2408, %v2408
  %v2458 = vpack.c.b16 %v2409, %v2409
  %v2459 = vpack.c.b16 %v2410, %v2410
  %v2460 = vpack.c.b16 %v2411, %v2411
  %v2461 = vpack.c.b16 %v2412, %v2412
  %v2462 = vpack.c.b16 %v2413, %v2413
  %v2463 = vpack.c.b16 %v2414, %v2414
  %v2464 = vpack.c.b16 %v2415, %v2415
  %v2465 = vpack.c.b16 %v2416, %v2416
  %v2466 = vpack.c.b16 %v2417, %v2417
  %v2467 = vpack.c.b16 %v2418, %v2418
  %v2468 = vpack.c.b16 %v2419, %v2419
  %v2469 = vpack.c.b16 %v2420, %v2420
  %v2470 = vpack.c.b16 %v2421, %v2421
  %v2471 = vpack.c.b16 %v2422, %v2422
  %v2472 = vpack.c.b16 %v2423, %v2423
  %v2473 = vpack.c.b16 %v2424, %v2424
  %v2474 = vpack.c.b16 %v2425, %v2425
  %v2475 = vpack.c.b16 %v2426, %v2426
  %v2476 = vpack.c.b16 %v2427, %v2427
  %v2477 = vpack.c.b16 %v2428, %v2428
  %v2478 = vpack.c.b16 %v2429, %v2429
  %v2479 = vpack.c.b16 %v2430, %v2430
  %v2480 = vpack.c.b16 %v2431, %v2431
  %v2481 = vpack.c.b16 %v2432, %v2432
  %v2482 = vpack.c.b16 %v2433, %v2433
  %v2483 = vpack.c.b16 %v2434, %v2434
  %v2484 = vpack.c.b16 %v2435, %v2435
  %vm2534 = vcmask 44032
  %2535 = vst.msk [vmem:[%s6] sm:$0xf] %vm2534, %v2436
  %2536 = vst.msk [vmem:[%s6 + $0x4] sm:$0xf] %vm2534, %v2437
  %2537 = vst.msk [vmem:[%s6 + $0x8] sm:$0xf] %vm2534, %v2438
  %2538 = vst.msk [vmem:[%s6 + $0xc] sm:$0xf] %vm2534, %v2439
  %2539 = vst.msk [vmem:[%s6 + $0x10] sm:$0xf] %vm2534, %v2440
  %2540 = vst.msk [vmem:[%s6 + $0x14] sm:$0xf] %vm2534, %v2441
  %2541 = vst.msk [vmem:[%s6 + $0x18] sm:$0xf] %vm2534, %v2442
  %2542 = vst.msk [vmem:[%s6 + $0x1c] sm:$0xf] %vm2534, %v2443
  %2543 = vst.msk [vmem:[%s6 + $0x20] sm:$0xf] %vm2534, %v2444
  %2544 = vst.msk [vmem:[%s6 + $0x24] sm:$0xf] %vm2534, %v2445
  %2545 = vst.msk [vmem:[%s6 + $0x28] sm:$0xf] %vm2534, %v2446
  %2546 = vst.msk [vmem:[%s6 + $0x2c] sm:$0xf] %vm2534, %v2447
  %2547 = vst.msk [vmem:[%s6 + $0x30] sm:$0xf] %vm2534, %v2448
  %2548 = vst.msk [vmem:[%s6 + $0x34] sm:$0xf] %vm2534, %v2449
  %2549 = vst.msk [vmem:[%s6 + $0x38] sm:$0xf] %vm2534, %v2450
  %2550 = vst.msk [vmem:[%s6 + $0x3c] sm:$0xf] %vm2534, %v2451
  %2551 = vst.msk [vmem:[%s6 + $0x40] sm:$0xf] %vm2534, %v2452
  %2552 = vst.msk [vmem:[%s6 + $0x44] sm:$0xf] %vm2534, %v2453
  %2553 = vst.msk [vmem:[%s6 + $0x48] sm:$0xf] %vm2534, %v2454
  %2554 = vst.msk [vmem:[%s6 + $0x4c] sm:$0xf] %vm2534, %v2455
  %2555 = vst.msk [vmem:[%s6 + $0x50] sm:$0xf] %vm2534, %v2456
  %2556 = vst.msk [vmem:[%s6 + $0x54] sm:$0xf] %vm2534, %v2457
  %2557 = vst.msk [vmem:[%s6 + $0x58] sm:$0xf] %vm2534, %v2458
  %2558 = vst.msk [vmem:[%s6 + $0x5c] sm:$0xf] %vm2534, %v2459
  %2559 = vst.msk [vmem:[%s6 + $0x60] sm:$0xf] %vm2534, %v2460
  %2560 = vst.msk [vmem:[%s6 + $0x64] sm:$0xf] %vm2534, %v2461
  %2561 = vst.msk [vmem:[%s6 + $0x68] sm:$0xf] %vm2534, %v2462
  %2562 = vst.msk [vmem:[%s6 + $0x6c] sm:$0xf] %vm2534, %v2463
  %2563 = vst.msk [vmem:[%s6 + $0x70] sm:$0xf] %vm2534, %v2464
  %2564 = vst.msk [vmem:[%s6 + $0x74] sm:$0xf] %vm2534, %v2465
  %2565 = vst.msk [vmem:[%s6 + $0x78] sm:$0xf] %vm2534, %v2466
  %2566 = vst.msk [vmem:[%s6 + $0x7c] sm:$0xf] %vm2534, %v2467
  %2567 = vst.msk [vmem:[%s6 + $0x80] sm:$0xf] %vm2534, %v2468
  %2568 = vst.msk [vmem:[%s6 + $0x84] sm:$0xf] %vm2534, %v2469
  %2569 = vst.msk [vmem:[%s6 + $0x88] sm:$0xf] %vm2534, %v2470
  %2570 = vst.msk [vmem:[%s6 + $0x8c] sm:$0xf] %vm2534, %v2471
  %2571 = vst.msk [vmem:[%s6 + $0x90] sm:$0xf] %vm2534, %v2472
  %2572 = vst.msk [vmem:[%s6 + $0x94] sm:$0xf] %vm2534, %v2473
  %2573 = vst.msk [vmem:[%s6 + $0x98] sm:$0xf] %vm2534, %v2474
  %2574 = vst.msk [vmem:[%s6 + $0x9c] sm:$0xf] %vm2534, %v2475
  %2575 = vst.msk [vmem:[%s6 + $0xa0] sm:$0xf] %vm2534, %v2476
  %2576 = vst.msk [vmem:[%s6 + $0xa4] sm:$0xf] %vm2534, %v2477
  %2577 = vst.msk [vmem:[%s6 + $0xa8] sm:$0xf] %vm2534, %v2478
  %2578 = vst.msk [vmem:[%s6 + $0xac] sm:$0xf] %vm2534, %v2479
  %2579 = vst.msk [vmem:[%s6 + $0xb0] sm:$0xf] %vm2534, %v2480
  %2580 = vst.msk [vmem:[%s6 + $0xb4] sm:$0xf] %vm2534, %v2481
  %2581 = vst.msk [vmem:[%s6 + $0xb8] sm:$0xf] %vm2534, %v2482
  %2582 = vst.msk [vmem:[%s6 + $0xbc] sm:$0xf] %vm2534, %v2483
  %2583 = vst.msk [vmem:[%s6 + $0xc0] sm:$0xf] %vm2534, %v2484
  // Predicated region
  $region26: #{net_forward.3} parent=0 // pred_check
    _
  $region27: #{net_forward.3} parent=0 // pred_check_branch
    %2585 = sbr.rel (0) target = $region29
  $region28: #{net_forward.3} parent=0 // pred_region
    _
  $region29: #{net_forward.3} parent=0 // pred_fallthru
    _
  // Predicated region
  $region30: #{net_forward.3} parent=0 // pred_check
    _
  $region31: #{net_forward.3} parent=0 // pred_check_branch
    %2587 = sbr.rel (0) target = $region33
  $region32: #{net_forward.3} parent=0 // pred_region
    _
  $region33: #{net_forward.3} parent=0 // pred_fallthru
    _

// kernel: net_forward.4
$region0: #{net_forward.4}
  #allocation0 [shape = 'u32[]', space=smem, size = 0x4, offset = 0x4, fixed_abs, tag = 'smem constant byte address 0x4 - core index']
  #allocation1 [shape = 'u32[144,128]{1,0:T(1,128)}', space=vmem, size = 0x12000, scoped, tag = 'internal scratch']
  %s0 = inlined_call_operand.vmem [shape: bf16[56,150], index: 0, kind: input, shape index: {}]
  %s1 = inlined_call_operand.vmem [shape: bf16[56,150], index: 1, kind: input, shape index: {}]
  %s2 = inlined_call_operand.vmem [shape: bf16[56,150], index: 2, kind: input, shape index: {}]
  %s3 = inlined_call_operand.vmem [shape: bf16[56,150], index: 3, kind: input, shape index: {}]
  %s4 = inlined_call_operand.vmem [shape: bf16[150,16], index: 4, kind: input, shape index: {}]
  %s5 = inlined_call_operand.vmem [shape: f32[1,16], index: 5, kind: input, shape index: {}]
  %s6 = inlined_call_operand.vmem [shape: bf16[56,16], index: 6, kind: output, shape index: {}]
  %s7 = sld [smem:[#allocation0]]
  $region34: #{net_forward.4} parent=0
    _
  %s9 = ssub.s32 1, %s7
  %s10 = scalar_select 0, %s9, %s7
  // Predicated region
  $region2: #{net_forward.4} parent=0 // pred_check
    _
  $region3: #{net_forward.4} parent=0 // pred_check_branch
    %12 = sbr.rel (0) target = $region5
  $region4: #{net_forward.4} parent=0 // pred_region
    _
  $region5: #{net_forward.4} parent=0 // pred_fallthru
    _
  // Predicated region
  $region6: #{net_forward.4} parent=0 // pred_check
    _
  $region7: #{net_forward.4} parent=0 // pred_check_branch
    %14 = sbr.rel (0) target = $region9
  $region8: #{net_forward.4} parent=0 // pred_region
    _
  $region9: #{net_forward.4} parent=0 // pred_fallthru
    _
  // Predicated region
  $region10: #{net_forward.4} parent=0 // pred_check
    _
  $region11: #{net_forward.4} parent=0 // pred_check_branch
    %16 = sbr.rel (0) target = $region13
  $region12: #{net_forward.4} parent=0 // pred_region
    _
  $region13: #{net_forward.4} parent=0 // pred_fallthru
    _
  // Predicated region
  $region14: #{net_forward.4} parent=0 // pred_check
    _
  $region15: #{net_forward.4} parent=0 // pred_check_branch
    %18 = sbr.rel (0) target = $region17
  $region16: #{net_forward.4} parent=0 // pred_region
    _
  $region17: #{net_forward.4} parent=0 // pred_fallthru
    _
  // Predicated region
  $region18: #{net_forward.4} parent=0 // pred_check
    _
  $region19: #{net_forward.4} parent=0 // pred_check_branch
    %20 = sbr.rel (0) target = $region21
  $region20: #{net_forward.4} parent=0 // pred_region
    _
  $region21: #{net_forward.4} parent=0 // pred_fallthru
    _
  // Predicated region
  $region22: #{net_forward.4} parent=0 // pred_check
    _
  $region23: #{net_forward.4} parent=0 // pred_check_branch
    %22 = sbr.rel (0) target = $region25
  $region24: #{net_forward.4} parent=0 // pred_region
    _
  $region25: #{net_forward.4} parent=0 // pred_fallthru
    _
  %v24 = vld [vmem:[%s4] sm:$0xf]
  %v25 = vld [vmem:[%s4 + $0x4] sm:$0xf]
  %v26 = vld [vmem:[%s4 + $0x8] sm:$0xf]
  %v27 = vld [vmem:[%s4 + $0xc] sm:$0xf]
  %v28 = vld [vmem:[%s4 + $0x10] sm:$0xf]
  %v29 = vld [vmem:[%s4 + $0x14] sm:$0xf]
  %v30 = vld [vmem:[%s4 + $0x18] sm:$0xf]
  %v31 = vld [vmem:[%s4 + $0x1c] sm:$0xf]
  %v32 = vld [vmem:[%s4 + $0x20] sm:$0xf]
  %v33 = vld [vmem:[%s4 + $0x24] sm:$0xf]
  %v34 = vld [vmem:[%s4 + $0x28] sm:$0xf]
  %v35 = vld [vmem:[%s4 + $0x2c] sm:$0xf]
  %v36 = vld [vmem:[%s4 + $0x30] sm:$0xf]
  %v37 = vld [vmem:[%s4 + $0x34] sm:$0xf]
  %v38 = vld [vmem:[%s4 + $0x38] sm:$0xf]
  %v39 = vld [vmem:[%s4 + $0x3c] sm:$0xf]
  %v40 = vld [vmem:[%s4 + $0x40] sm:$0xf]
  %v41 = vld [vmem:[%s4 + $0x44] sm:$0xf]
  %v42 = vld [vmem:[%s4 + $0x48] sm:$0x7]
  %v43 = vld [vmem:[%s5] sm:$0x1]
  %v44 = vld [vmem:[%s0] sm:$0xff]
  %v45 = vld [vmem:[%s0 + $0x8] sm:$0xff]
  %v46 = vld [vmem:[%s0 + $0x10] sm:$0xff]
  %v47 = vld [vmem:[%s0 + $0x18] sm:$0xff]
  %v48 = vld [vmem:[%s0 + $0x20] sm:$0xff]
  %v49 = vld [vmem:[%s0 + $0x28] sm:$0xff]
  %v50 = vld [vmem:[%s0 + $0x30] sm:$0xff]
  %v52 = vlaneseq
  %v53 = vshrl.u32 %v52, 7
  %v54 = vsub.s32 0, %v53
  %v55 = vrot.slane %v43, %v54
  %v64 = vunpack.c.l.b16 %v44
  %v65 = vunpack.c.h.b16 %v44
  %v66 = vunpack.c.l.b16 %v45
  %v67 = vunpack.c.h.b16 %v45
  %v68 = vunpack.c.l.b16 %v46
  %v69 = vunpack.c.h.b16 %v46
  %v70 = vunpack.c.l.b16 %v47
  %v71 = vunpack.c.h.b16 %v47
  %v72 = vunpack.c.l.b16 %v48
  %v73 = vunpack.c.h.b16 %v48
  %v74 = vunpack.c.l.b16 %v49
  %v75 = vunpack.c.h.b16 %v49
  %v76 = vunpack.c.l.b16 %v50
  %v77 = vunpack.c.h.b16 %v50
  %v78 = vpack.c.b16 %v66, %v64
  %v79 = vpack.c.b16 %v67, %v65
  %v80 = vpack.c.b16 %v70, %v68
  %v81 = vpack.c.b16 %v71, %v69
  %v82 = vpack.c.b16 %v74, %v72
  %v83 = vpack.c.b16 %v75, %v73
  %v84 = vpack.c.b16 %v76, %v76
  %v85 = vpack.c.b16 %v77, %v77
  %v109 = vunpack.c.l.b16 %v24
  %v110 = vunpack.c.l.b16 %v25
  %v111 = vunpack.c.l.b16 %v26
  %v112 = vunpack.c.l.b16 %v27
  %v113 = vunpack.c.l.b16 %v28
  %v114 = vunpack.c.l.b16 %v29
  %v115 = vunpack.c.l.b16 %v30
  %v116 = vunpack.c.l.b16 %v31
  %v117 = vunpack.c.l.b16 %v32
  %v118 = vunpack.c.l.b16 %v33
  %v119 = vunpack.c.l.b16 %v34
  %v120 = vunpack.c.l.b16 %v35
  %v121 = vunpack.c.l.b16 %v36
  %v122 = vunpack.c.l.b16 %v37
  %v123 = vunpack.c.l.b16 %v38
  %v124 = vunpack.c.l.b16 %v39
  %v125 = vunpack.c.l.b16 %v40
  %v126 = vunpack.c.l.b16 %v41
  %v127 = vunpack.c.l.b16 %v42
  %v128 = vpack.c.b16 %v110, %v109
  %v129 = vpack.c.b16 %v112, %v111
  %v130 = vpack.c.b16 %v114, %v113
  %v131 = vpack.c.b16 %v116, %v115
  %v132 = vpack.c.b16 %v118, %v117
  %v133 = vpack.c.b16 %v120, %v119
  %v134 = vpack.c.b16 %v122, %v121
  %v135 = vpack.c.b16 %v124, %v123
  %v136 = vpack.c.b16 %v126, %v125
  %v137 = vpack.c.b16 %v127, %v127
  %vm147 = vcmask 179200
  %v149 = vsel %vm147, %v79, 0
  %v152 = vsel %vm147, %v81, 0
  %v155 = vsel %vm147, %v83, 0
  %v158 = vsel %vm147, %v85, 0
  %vm160 = vcmask 1042432
  %v162 = vsel %vm160, %v137, 0
  %164 = vmatprep.subr.bf16.mxu0 0
  %165 = vmatpush1.bf16.msra.mxu0 %v128
  %166 = vmatprep.subr.bf16.mxu0 0
  %167 = vmatpush1.bf16.msra.mxu0 %v129
  %168 = vmatprep.subr.bf16.mxu0 0
  %169 = vmatpush1.bf16.msra.mxu0 %v130
  %170 = vmatprep.subr.bf16.mxu0 0
  %171 = vmatpush1.bf16.msra.mxu0 %v131
  %172 = vmatprep.subr.bf16.mxu0 0
  %173 = vmatpush1.bf16.msra.mxu0 %v132
  %174 = vmatprep.subr.bf16.mxu0 0
  %175 = vmatpush1.bf16.msra.mxu0 %v133
  %176 = vmatprep.subr.bf16.mxu0 0
  %177 = vmatpush1.bf16.msra.mxu0 %v134
  %178 = vmatprep.subr.bf16.mxu0 0
  %179 = vmatpush1.bf16.msra.mxu0 %v135
  %180 = vmatprep.subr.bf16.mxu0 0
  %181 = vmatpush1.bf16.msra.mxu0 %v136
  %182 = vmatprep.subr.bf16.mxu0 0
  %183 = vmatpush1.bf16.msra.mxu0 %v162
  %184 = vmatprep.subr.bf16.mxu0 0
  %185 = vmatpush1.bf16.msra.mxu0 0
  %186 = vmatprep.subr.bf16.mxu0 0
  %187 = vmatpush1.bf16.msra.mxu0 0
  %188 = vmatprep.subr.bf16.mxu0 0
  %189 = vmatpush1.bf16.msra.mxu0 0
  %190 = vmatprep.subr.bf16.mxu0 0
  %191 = vmatpush1.bf16.msra.mxu0 0
  %192 = vmatprep.subr.bf16.mxu0 0
  %193 = vmatpush1.bf16.msra.mxu0 0
  %194 = vmatprep.subr.bf16.mxu0 0
  %195 = vmatpush1.bf16.msra.mxu0 0
  %196 = vmatprep.mubr.bf16.mxu0 %v149
  %197 = vmatmul.mubr.bf16.gmra.mrb[0].mxu0 %v78
  %v198 = vpop.f32.mrb[0].mxu0
  %v199 = vadd.f32 %v55, %v198
  %v200 = vpop.f32.mrb[0].mxu0
  %v201 = vpop.f32.mrb[0].mxu0
  %v202 = vadd.f32 %v55, %v201
  %v203 = vpop.f32.mrb[0].mxu0
  %204 = vmatprep.mubr.bf16.mxu0 %v152
  %205 = vmatmul.mubr.bf16.gmra.mrb[0].mxu0 %v80
  %v206 = vpop.f32.mrb[0].mxu0
  %v207 = vadd.f32 %v55, %v206
  %v208 = vpop.f32.mrb[0].mxu0
  %v209 = vpop.f32.mrb[0].mxu0
  %v210 = vadd.f32 %v55, %v209
  %v211 = vpop.f32.mrb[0].mxu0
  %212 = vmatprep.mubr.bf16.mxu0 %v155
  %213 = vmatmul.mubr.bf16.gmra.mrb[0].mxu0 %v82
  %v214 = vpop.f32.mrb[0].mxu0
  %v215 = vadd.f32 %v55, %v214
  %v216 = vpop.f32.mrb[0].mxu0
  %v217 = vpop.f32.mrb[0].mxu0
  %v218 = vadd.f32 %v55, %v217
  %v219 = vpop.f32.mrb[0].mxu0
  %220 = vmatprep.mubr.bf16.mxu0 %v158
  %221 = vmatmul.mubr.bf16.gmra.mrb[0].mxu0 %v84
  %v222 = vpop.f32.mrb[0].mxu0
  %v223 = vadd.f32 %v55, %v222
  %v224 = vpop.f32.mrb[0].mxu0
  %v225 = vpop.f32.mrb[0].mxu0
  %v226 = vpop.f32.mrb[0].mxu0
  %227 = vdwg.mxu0
  %v228 = vmax.f32 %v199, 0.0
  %v229 = vmax.f32 %v202, 0.0
  %v230 = vmax.f32 %v207, 0.0
  %v231 = vmax.f32 %v210, 0.0
  %v232 = vmax.f32 %v215, 0.0
  %v233 = vmax.f32 %v218, 0.0
  %v234 = vmax.f32 %v223, 0.0
  %v235 = vld [vmem:[%s1] sm:$0xff]
  %v236 = vld [vmem:[%s1 + $0x8] sm:$0xff]
  %v237 = vld [vmem:[%s1 + $0x10] sm:$0xff]
  %v238 = vld [vmem:[%s1 + $0x18] sm:$0xff]
  %v239 = vld [vmem:[%s1 + $0x20] sm:$0xff]
  %v240 = vld [vmem:[%s1 + $0x28] sm:$0xff]
  %v241 = vld [vmem:[%s1 + $0x30] sm:$0xff]
  %v249 = vunpack.c.l.b16 %v235
  %v250 = vunpack.c.h.b16 %v235
  %v251 = vunpack.c.l.b16 %v236
  %v252 = vunpack.c.h.b16 %v236
  %v253 = vunpack.c.l.b16 %v237
  %v254 = vunpack.c.h.b16 %v237
  %v255 = vunpack.c.l.b16 %v238
  %v256 = vunpack.c.h.b16 %v238
  %v257 = vunpack.c.l.b16 %v239
  %v258 = vunpack.c.h.b16 %v239
  %v259 = vunpack.c.l.b16 %v240
  %v260 = vunpack.c.h.b16 %v240
  %v261 = vunpack.c.l.b16 %v241
  %v262 = vunpack.c.h.b16 %v241
  %v263 = vpack.c.b16 %v251, %v249
  %v264 = vpack.c.b16 %v252, %v250
  %v265 = vpack.c.b16 %v255, %v253
  %v266 = vpack.c.b16 %v256, %v254
  %v267 = vpack.c.b16 %v259, %v257
  %v268 = vpack.c.b16 %v260, %v258
  %v269 = vpack.c.b16 %v261, %v261
  %v270 = vpack.c.b16 %v262, %v262
  %v276 = vsel %vm147, %v264, 0
  %v279 = vsel %vm147, %v266, 0
  %v282 = vsel %vm147, %v268, 0
  %v285 = vsel %vm147, %v270, 0
  %287 = vmatprep.subr.bf16.mxu0 0
  %288 = vmatpush1.bf16.msra.mxu0 %v128
  %289 = vmatprep.subr.bf16.mxu0 0
  %290 = vmatpush1.bf16.msra.mxu0 %v129
  %291 = vmatprep.subr.bf16.mxu0 0
  %292 = vmatpush1.bf16.msra.mxu0 %v130
  %293 = vmatprep.subr.bf16.mxu0 0
  %294 = vmatpush1.bf16.msra.mxu0 %v131
  %295 = vmatprep.subr.bf16.mxu0 0
  %296 = vmatpush1.bf16.msra.mxu0 %v132
  %297 = vmatprep.subr.bf16.mxu0 0
  %298 = vmatpush1.bf16.msra.mxu0 %v133
  %299 = vmatprep.subr.bf16.mxu0 0
  %300 = vmatpush1.bf16.msra.mxu0 %v134
  %301 = vmatprep.subr.bf16.mxu0 0
  %302 = vmatpush1.bf16.msra.mxu0 %v135
  %303 = vmatprep.subr.bf16.mxu0 0
  %304 = vmatpush1.bf16.msra.mxu0 %v136
  %305 = vmatprep.subr.bf16.mxu0 0
  %306 = vmatpush1.bf16.msra.mxu0 %v162
  %307 = vmatprep.subr.bf16.mxu0 0
  %308 = vmatpush1.bf16.msra.mxu0 0
  %309 = vmatprep.subr.bf16.mxu0 0
  %310 = vmatpush1.bf16.msra.mxu0 0
  %311 = vmatprep.subr.bf16.mxu0 0
  %312 = vmatpush1.bf16.msra.mxu0 0
  %313 = vmatprep.subr.bf16.mxu0 0
  %314 = vmatpush1.bf16.msra.mxu0 0
  %315 = vmatprep.subr.bf16.mxu0 0
  %316 = vmatpush1.bf16.msra.mxu0 0
  %317 = vmatprep.subr.bf16.mxu0 0
  %318 = vmatpush1.bf16.msra.mxu0 0
  %319 = vmatprep.mubr.bf16.mxu0 %v276
  %320 = vmatmul.mubr.bf16.gmra.mrb[0].mxu0 %v263
  %v321 = vpop.f32.mrb[0].mxu0
  %v322 = vadd.f32 %v55, %v321
  %v323 = vpop.f32.mrb[0].mxu0
  %v324 = vpop.f32.mrb[0].mxu0
  %v325 = vadd.f32 %v55, %v324
  %v326 = vpop.f32.mrb[0].mxu0
  %327 = vmatprep.mubr.bf16.mxu0 %v279
  %328 = vmatmul.mubr.bf16.gmra.mrb[0].mxu0 %v265
  %v329 = vpop.f32.mrb[0].mxu0
  %v330 = vadd.f32 %v55, %v329
  %v331 = vpop.f32.mrb[0].mxu0
  %v332 = vpop.f32.mrb[0].mxu0
  %v333 = vadd.f32 %v55, %v332
  %v334 = vpop.f32.mrb[0].mxu0
  %335 = vmatprep.mubr.bf16.mxu0 %v282
  %336 = vmatmul.mubr.bf16.gmra.mrb[0].mxu0 %v267
  %v337 = vpop.f32.mrb[0].mxu0
  %v338 = vadd.f32 %v55, %v337
  %v339 = vpop.f32.mrb[0].mxu0
  %v340 = vpop.f32.mrb[0].mxu0
  %v341 = vadd.f32 %v55, %v340
  %v342 = vpop.f32.mrb[0].mxu0
  %343 = vmatprep.mubr.bf16.mxu0 %v285
  %344 = vmatmul.mubr.bf16.gmra.mrb[0].mxu0 %v269
  %v345 = vpop.f32.mrb[0].mxu0
  %v346 = vadd.f32 %v55, %v345
  %v347 = vpop.f32.mrb[0].mxu0
  %v348 = vpop.f32.mrb[0].mxu0
  %v349 = vpop.f32.mrb[0].mxu0
  %350 = vdwg.mxu0
  %v351 = vmax.f32 %v322, 0.0
  %v352 = vmax.f32 %v325, 0.0
  %v353 = vmax.f32 %v330, 0.0
  %v354 = vmax.f32 %v333, 0.0
  %v355 = vmax.f32 %v338, 0.0
  %v356 = vmax.f32 %v341, 0.0
  %v357 = vmax.f32 %v346, 0.0
  %v358 = vmax.f32 %v228, %v351
  %v359 = vmax.f32 %v229, %v352
  %v360 = vmax.f32 %v230, %v353
  %v361 = vmax.f32 %v231, %v354
  %v362 = vmax.f32 %v232, %v355
  %v363 = vmax.f32 %v233, %v356
  %v364 = vmax.f32 %v234, %v357
  %v365 = vld [vmem:[%s2] sm:$0xff]
  %v366 = vld [vmem:[%s2 + $0x8] sm:$0xff]
  %v367 = vld [vmem:[%s2 + $0x10] sm:$0xff]
  %v368 = vld [vmem:[%s2 + $0x18] sm:$0xff]
  %v369 = vld [vmem:[%s2 + $0x20] sm:$0xff]
  %v370 = vld [vmem:[%s2 + $0x28] sm:$0xff]
  %v371 = vld [vmem:[%s2 + $0x30] sm:$0xff]
  %v379 = vunpack.c.l.b16 %v365
  %v380 = vunpack.c.h.b16 %v365
  %v381 = vunpack.c.l.b16 %v366
  %v382 = vunpack.c.h.b16 %v366
  %v383 = vunpack.c.l.b16 %v367
  %v384 = vunpack.c.h.b16 %v367
  %v385 = vunpack.c.l.b16 %v368
  %v386 = vunpack.c.h.b16 %v368
  %v387 = vunpack.c.l.b16 %v369
  %v388 = vunpack.c.h.b16 %v369
  %v389 = vunpack.c.l.b16 %v370
  %v390 = vunpack.c.h.b16 %v370
  %v391 = vunpack.c.l.b16 %v371
  %v392 = vunpack.c.h.b16 %v371
  %v393 = vpack.c.b16 %v381, %v379
  %v394 = vpack.c.b16 %v382, %v380
  %v395 = vpack.c.b16 %v385, %v383
  %v396 = vpack.c.b16 %v386, %v384
  %v397 = vpack.c.b16 %v389, %v387
  %v398 = vpack.c.b16 %v390, %v388
  %v399 = vpack.c.b16 %v391, %v391
  %v400 = vpack.c.b16 %v392, %v392
  %v406 = vsel %vm147, %v394, 0
  %v409 = vsel %vm147, %v396, 0
  %v412 = vsel %vm147, %v398, 0
  %v415 = vsel %vm147, %v400, 0
  %417 = vmatprep.subr.bf16.mxu0 0
  %418 = vmatpush1.bf16.msra.mxu0 %v128
  %419 = vmatprep.subr.bf16.mxu0 0
  %420 = vmatpush1.bf16.msra.mxu0 %v129
  %421 = vmatprep.subr.bf16.mxu0 0
  %422 = vmatpush1.bf16.msra.mxu0 %v130
  %423 = vmatprep.subr.bf16.mxu0 0
  %424 = vmatpush1.bf16.msra.mxu0 %v131
  %425 = vmatprep.subr.bf16.mxu0 0
  %426 = vmatpush1.bf16.msra.mxu0 %v132
  %427 = vmatprep.subr.bf16.mxu0 0
  %428 = vmatpush1.bf16.msra.mxu0 %v133
  %429 = vmatprep.subr.bf16.mxu0 0
  %430 = vmatpush1.bf16.msra.mxu0 %v134
  %431 = vmatprep.subr.bf16.mxu0 0
  %432 = vmatpush1.bf16.msra.mxu0 %v135
  %433 = vmatprep.subr.bf16.mxu0 0
  %434 = vmatpush1.bf16.msra.mxu0 %v136
  %435 = vmatprep.subr.bf16.mxu0 0
  %436 = vmatpush1.bf16.msra.mxu0 %v162
  %437 = vmatprep.subr.bf16.mxu0 0
  %438 = vmatpush1.bf16.msra.mxu0 0
  %439 = vmatprep.subr.bf16.mxu0 0
  %440 = vmatpush1.bf16.msra.mxu0 0
  %441 = vmatprep.subr.bf16.mxu0 0
  %442 = vmatpush1.bf16.msra.mxu0 0
  %443 = vmatprep.subr.bf16.mxu0 0
  %444 = vmatpush1.bf16.msra.mxu0 0
  %445 = vmatprep.subr.bf16.mxu0 0
  %446 = vmatpush1.bf16.msra.mxu0 0
  %447 = vmatprep.subr.bf16.mxu0 0
  %448 = vmatpush1.bf16.msra.mxu0 0
  %449 = vmatprep.mubr.bf16.mxu0 %v406
  %450 = vmatmul.mubr.bf16.gmra.mrb[0].mxu0 %v393
  %v451 = vpop.f32.mrb[0].mxu0
  %v452 = vadd.f32 %v55, %v451
  %v453 = vpop.f32.mrb[0].mxu0
  %v454 = vpop.f32.mrb[0].mxu0
  %v455 = vadd.f32 %v55, %v454
  %v456 = vpop.f32.mrb[0].mxu0
  %457 = vmatprep.mubr.bf16.mxu0 %v409
  %458 = vmatmul.mubr.bf16.gmra.mrb[0].mxu0 %v395
  %v459 = vpop.f32.mrb[0].mxu0
  %v460 = vadd.f32 %v55, %v459
  %v461 = vpop.f32.mrb[0].mxu0
  %v462 = vpop.f32.mrb[0].mxu0
  %v463 = vadd.f32 %v55, %v462
  %v464 = vpop.f32.mrb[0].mxu0
  %465 = vmatprep.mubr.bf16.mxu0 %v412
  %466 = vmatmul.mubr.bf16.gmra.mrb[0].mxu0 %v397
  %v467 = vpop.f32.mrb[0].mxu0
  %v468 = vadd.f32 %v55, %v467
  %v469 = vpop.f32.mrb[0].mxu0
  %v470 = vpop.f32.mrb[0].mxu0
  %v471 = vadd.f32 %v55, %v470
  %v472 = vpop.f32.mrb[0].mxu0
  %473 = vmatprep.mubr.bf16.mxu0 %v415
  %474 = vmatmul.mubr.bf16.gmra.mrb[0].mxu0 %v399
  %v475 = vpop.f32.mrb[0].mxu0
  %v476 = vadd.f32 %v55, %v475
  %v477 = vpop.f32.mrb[0].mxu0
  %v478 = vpop.f32.mrb[0].mxu0
  %v479 = vpop.f32.mrb[0].mxu0
  %480 = vdwg.mxu0
  %v481 = vmax.f32 %v452, 0.0
  %v482 = vmax.f32 %v455, 0.0
  %v483 = vmax.f32 %v460, 0.0
  %v484 = vmax.f32 %v463, 0.0
  %v485 = vmax.f32 %v468, 0.0
  %v486 = vmax.f32 %v471, 0.0
  %v487 = vmax.f32 %v476, 0.0
  %v488 = vld [vmem:[%s3] sm:$0xff]
  %v489 = vld [vmem:[%s3 + $0x8] sm:$0xff]
  %v490 = vld [vmem:[%s3 + $0x10] sm:$0xff]
  %v491 = vld [vmem:[%s3 + $0x18] sm:$0xff]
  %v492 = vld [vmem:[%s3 + $0x20] sm:$0xff]
  %v493 = vld [vmem:[%s3 + $0x28] sm:$0xff]
  %v494 = vld [vmem:[%s3 + $0x30] sm:$0xff]
  %v502 = vunpack.c.l.b16 %v488
  %v503 = vunpack.c.h.b16 %v488
  %v504 = vunpack.c.l.b16 %v489
  %v505 = vunpack.c.h.b16 %v489
  %v506 = vunpack.c.l.b16 %v490
  %v507 = vunpack.c.h.b16 %v490
  %v508 = vunpack.c.l.b16 %v491
  %v509 = vunpack.c.h.b16 %v491
  %v510 = vunpack.c.l.b16 %v492
  %v511 = vunpack.c.h.b16 %v492
  %v512 = vunpack.c.l.b16 %v493
  %v513 = vunpack.c.h.b16 %v493
  %v514 = vunpack.c.l.b16 %v494
  %v515 = vunpack.c.h.b16 %v494
  %v516 = vpack.c.b16 %v504, %v502
  %v517 = vpack.c.b16 %v505, %v503
  %v518 = vpack.c.b16 %v508, %v506
  %v519 = vpack.c.b16 %v509, %v507
  %v520 = vpack.c.b16 %v512, %v510
  %v521 = vpack.c.b16 %v513, %v511
  %v522 = vpack.c.b16 %v514, %v514
  %v523 = vpack.c.b16 %v515, %v515
  %v529 = vsel %vm147, %v517, 0
  %v532 = vsel %vm147, %v519, 0
  %v535 = vsel %vm147, %v521, 0
  %v538 = vsel %vm147, %v523, 0
  %540 = vmatprep.subr.bf16.mxu0 0
  %541 = vmatpush1.bf16.msra.mxu0 %v128
  %542 = vmatprep.subr.bf16.mxu0 0
  %543 = vmatpush1.bf16.msra.mxu0 %v129
  %544 = vmatprep.subr.bf16.mxu0 0
  %545 = vmatpush1.bf16.msra.mxu0 %v130
  %546 = vmatprep.subr.bf16.mxu0 0
  %547 = vmatpush1.bf16.msra.mxu0 %v131
  %548 = vmatprep.subr.bf16.mxu0 0
  %549 = vmatpush1.bf16.msra.mxu0 %v132
  %550 = vmatprep.subr.bf16.mxu0 0
  %551 = vmatpush1.bf16.msra.mxu0 %v133
  %552 = vmatprep.subr.bf16.mxu0 0
  %553 = vmatpush1.bf16.msra.mxu0 %v134
  %554 = vmatprep.subr.bf16.mxu0 0
  %555 = vmatpush1.bf16.msra.mxu0 %v135
  %556 = vmatprep.subr.bf16.mxu0 0
  %557 = vmatpush1.bf16.msra.mxu0 %v136
  %558 = vmatprep.subr.bf16.mxu0 0
  %559 = vmatpush1.bf16.msra.mxu0 %v162
  %560 = vmatprep.subr.bf16.mxu0 0
  %561 = vmatpush1.bf16.msra.mxu0 0
  %562 = vmatprep.subr.bf16.mxu0 0
  %563 = vmatpush1.bf16.msra.mxu0 0
  %564 = vmatprep.subr.bf16.mxu0 0
  %565 = vmatpush1.bf16.msra.mxu0 0
  %566 = vmatprep.subr.bf16.mxu0 0
  %567 = vmatpush1.bf16.msra.mxu0 0
  %568 = vmatprep.subr.bf16.mxu0 0
  %569 = vmatpush1.bf16.msra.mxu0 0
  %570 = vmatprep.subr.bf16.mxu0 0
  %571 = vmatpush1.bf16.msra.mxu0 0
  %572 = vmatprep.mubr.bf16.mxu0 %v529
  %573 = vmatmul.mubr.bf16.gmra.mrb[0].mxu0 %v516
  %v574 = vpop.f32.mrb[0].mxu0
  %v575 = vadd.f32 %v55, %v574
  %v576 = vpop.f32.mrb[0].mxu0
  %v577 = vpop.f32.mrb[0].mxu0
  %v578 = vadd.f32 %v55, %v577
  %v579 = vpop.f32.mrb[0].mxu0
  %580 = vmatprep.mubr.bf16.mxu0 %v532
  %581 = vmatmul.mubr.bf16.gmra.mrb[0].mxu0 %v518
  %v582 = vpop.f32.mrb[0].mxu0
  %v583 = vadd.f32 %v55, %v582
  %v584 = vpop.f32.mrb[0].mxu0
  %v585 = vpop.f32.mrb[0].mxu0
  %v586 = vadd.f32 %v55, %v585
  %v587 = vpop.f32.mrb[0].mxu0
  %588 = vmatprep.mubr.bf16.mxu0 %v535
  %589 = vmatmul.mubr.bf16.gmra.mrb[0].mxu0 %v520
  %v590 = vpop.f32.mrb[0].mxu0
  %v591 = vadd.f32 %v55, %v590
  %v592 = vpop.f32.mrb[0].mxu0
  %v593 = vpop.f32.mrb[0].mxu0
  %v594 = vadd.f32 %v55, %v593
  %v595 = vpop.f32.mrb[0].mxu0
  %596 = vmatprep.mubr.bf16.mxu0 %v538
  %597 = vmatmul.mubr.bf16.gmra.mrb[0].mxu0 %v522
  %v598 = vpop.f32.mrb[0].mxu0
  %v599 = vadd.f32 %v55, %v598
  %v600 = vpop.f32.mrb[0].mxu0
  %v601 = vpop.f32.mrb[0].mxu0
  %v602 = vpop.f32.mrb[0].mxu0
  %603 = vdwg.mxu0
  %v604 = vmax.f32 %v575, 0.0
  %v605 = vmax.f32 %v578, 0.0
  %v606 = vmax.f32 %v583, 0.0
  %v607 = vmax.f32 %v586, 0.0
  %v608 = vmax.f32 %v591, 0.0
  %v609 = vmax.f32 %v594, 0.0
  %v610 = vmax.f32 %v599, 0.0
  %v611 = vmax.f32 %v481, %v604
  %v612 = vmax.f32 %v482, %v605
  %v613 = vmax.f32 %v483, %v606
  %v614 = vmax.f32 %v484, %v607
  %v615 = vmax.f32 %v485, %v608
  %v616 = vmax.f32 %v486, %v609
  %v617 = vmax.f32 %v487, %v610
  %v618 = vmax.f32 %v358, %v611
  %v619 = vmax.f32 %v359, %v612
  %v620 = vmax.f32 %v360, %v613
  %v621 = vmax.f32 %v361, %v614
  %v622 = vmax.f32 %v362, %v615
  %v623 = vmax.f32 %v363, %v616
  %v624 = vmax.f32 %v364, %v617
  %v625 = vpack.c.bf16 %v619, %v618
  %v626 = vpack.c.bf16 %v621, %v620
  %v627 = vpack.c.bf16 %v623, %v622
  %v628 = vpack.c.bf16 %v624, %v624
  %v633 = vunpack.c.l.b16 %v625
  %v634 = vunpack.c.h.b16 %v625
  %v635 = vunpack.c.l.b16 %v626
  %v636 = vunpack.c.h.b16 %v626
  %v637 = vunpack.c.l.b16 %v627
  %v638 = vunpack.c.h.b16 %v627
  %v639 = vunpack.c.l.b16 %v628
  %v640 = vpack.c.b16 %v633, %v633
  %v641 = vpack.c.b16 %v634, %v634
  %v642 = vpack.c.b16 %v635, %v635
  %v643 = vpack.c.b16 %v636, %v636
  %v644 = vpack.c.b16 %v637, %v637
  %v645 = vpack.c.b16 %v638, %v638
  %v646 = vpack.c.b16 %v639, %v639
  %vm654 = vcmask 125952
  %655 = vst.msk [vmem:[%s6] sm:$0xf] %vm654, %v640
  %656 = vst.msk [vmem:[%s6 + $0x4] sm:$0xf] %vm654, %v641
  %657 = vst.msk [vmem:[%s6 + $0x8] sm:$0xf] %vm654, %v642
  %658 = vst.msk [vmem:[%s6 + $0xc] sm:$0xf] %vm654, %v643
  %659 = vst.msk [vmem:[%s6 + $0x10] sm:$0xf] %vm654, %v644
  %660 = vst.msk [vmem:[%s6 + $0x14] sm:$0xf] %vm654, %v645
  %661 = vst.msk [vmem:[%s6 + $0x18] sm:$0xf] %vm654, %v646
  // Predicated region
  $region26: #{net_forward.4} parent=0 // pred_check
    _
  $region27: #{net_forward.4} parent=0 // pred_check_branch
    %663 = sbr.rel (0) target = $region29
  $region28: #{net_forward.4} parent=0 // pred_region
    _
  $region29: #{net_forward.4} parent=0 // pred_fallthru
    _
  // Predicated region
  $region30: #{net_forward.4} parent=0 // pred_check
    _
  $region31: #{net_forward.4} parent=0 // pred_check_branch
    %665 = sbr.rel (0) target = $region33
  $region32: #{net_forward.4} parent=0 // pred_region
    _
  $region33: #{net_forward.4} parent=0 // pred_fallthru
    _

// kernel: net_forward.5
$region0: #{net_forward.5}
  #allocation0 [shape = 'u32[]', space=smem, size = 0x4, offset = 0x4, fixed_abs, tag = 'smem constant byte address 0x4 - core index']
  #allocation1 [shape = 'u32[144,128]{1,0:T(1,128)}', space=vmem, size = 0x12000, scoped, tag = 'internal scratch']
  %s0 = inlined_call_operand.vmem [shape: bf16[8,400], index: 0, kind: input, shape index: {}]
  %s1 = inlined_call_operand.vmem [shape: bf16[400,120], index: 1, kind: input, shape index: {}]
  %s2 = inlined_call_operand.vmem [shape: f32[1,120], index: 2, kind: input, shape index: {}]
  %s3 = inlined_call_operand.vmem [shape: bf16[120,84], index: 3, kind: input, shape index: {}]
  %s4 = inlined_call_operand.vmem [shape: f32[1,84], index: 4, kind: input, shape index: {}]
  %s5 = inlined_call_operand.vmem [shape: bf16[84,10], index: 5, kind: input, shape index: {}]
  %s6 = inlined_call_operand.vmem [shape: f32[1,10], index: 6, kind: input, shape index: {}]
  %s7 = inlined_call_operand.vmem [shape: f32[8,10], index: 7, kind: output, shape index: {}]
  %s8 = sld [smem:[#allocation0]]
  $region38: #{net_forward.5} parent=0
    _
  %s10 = ssub.s32 1, %s8
  %s11 = scalar_select 0, %s10, %s8
  // Predicated region
  $region2: #{net_forward.5} parent=0 // pred_check
    _
  $region3: #{net_forward.5} parent=0 // pred_check_branch
    %13 = sbr.rel (0) target = $region5
  $region4: #{net_forward.5} parent=0 // pred_region
    _
  $region5: #{net_forward.5} parent=0 // pred_fallthru
    _
  // Predicated region
  $region6: #{net_forward.5} parent=0 // pred_check
    _
  $region7: #{net_forward.5} parent=0 // pred_check_branch
    %15 = sbr.rel (0) target = $region9
  $region8: #{net_forward.5} parent=0 // pred_region
    _
  $region9: #{net_forward.5} parent=0 // pred_fallthru
    _
  // Predicated region
  $region10: #{net_forward.5} parent=0 // pred_check
    _
  $region11: #{net_forward.5} parent=0 // pred_check_branch
    %17 = sbr.rel (0) target = $region13
  $region12: #{net_forward.5} parent=0 // pred_region
    _
  $region13: #{net_forward.5} parent=0 // pred_fallthru
    _
  // Predicated region
  $region14: #{net_forward.5} parent=0 // pred_check
    _
  $region15: #{net_forward.5} parent=0 // pred_check_branch
    %19 = sbr.rel (0) target = $region17
  $region16: #{net_forward.5} parent=0 // pred_region
    _
  $region17: #{net_forward.5} parent=0 // pred_fallthru
    _
  // Predicated region
  $region18: #{net_forward.5} parent=0 // pred_check
    _
  $region19: #{net_forward.5} parent=0 // pred_check_branch
    %21 = sbr.rel (0) target = $region21
  $region20: #{net_forward.5} parent=0 // pred_region
    _
  $region21: #{net_forward.5} parent=0 // pred_fallthru
    _
  // Predicated region
  $region22: #{net_forward.5} parent=0 // pred_check
    _
  $region23: #{net_forward.5} parent=0 // pred_check_branch
    %23 = sbr.rel (0) target = $region25
  $region24: #{net_forward.5} parent=0 // pred_region
    _
  $region25: #{net_forward.5} parent=0 // pred_fallthru
    _
  // Predicated region
  $region26: #{net_forward.5} parent=0 // pred_check
    _
  $region27: #{net_forward.5} parent=0 // pred_check_branch
    %25 = sbr.rel (0) target = $region29
  $region28: #{net_forward.5} parent=0 // pred_region
    _
  $region29: #{net_forward.5} parent=0 // pred_fallthru
    _
  %v27 = vld [vmem:[%s0] sm:$0xff]
  %v28 = vld [vmem:[%s0 + $0x8] sm:$0xff]
  %v29 = vld [vmem:[%s1] sm:$0xf]
  %v30 = vld [vmem:[%s1 + $0x4] sm:$0xf]
  %v31 = vld [vmem:[%s1 + $0x8] sm:$0xf]
  %v32 = vld [vmem:[%s1 + $0xc] sm:$0xf]
  %v33 = vld [vmem:[%s1 + $0x10] sm:$0xf]
  %v34 = vld [vmem:[%s1 + $0x14] sm:$0xf]
  %v35 = vld [vmem:[%s1 + $0x18] sm:$0xf]
  %v36 = vld [vmem:[%s1 + $0x1c] sm:$0xf]
  %v37 = vld [vmem:[%s1 + $0x20] sm:$0xf]
  %v38 = vld [vmem:[%s1 + $0x24] sm:$0xf]
  %v39 = vld [vmem:[%s1 + $0x28] sm:$0xf]
  %v40 = vld [vmem:[%s1 + $0x2c] sm:$0xf]
  %v41 = vld [vmem:[%s1 + $0x30] sm:$0xf]
  %v42 = vld [vmem:[%s1 + $0x34] sm:$0xf]
  %v43 = vld [vmem:[%s1 + $0x38] sm:$0xf]
  %v44 = vld [vmem:[%s1 + $0x3c] sm:$0xf]
  %v45 = vld [vmem:[%s1 + $0x40] sm:$0xf]
  %v46 = vld [vmem:[%s1 + $0x44] sm:$0xf]
  %v47 = vld [vmem:[%s1 + $0x48] sm:$0xf]
  %v48 = vld [vmem:[%s1 + $0x4c] sm:$0xf]
  %v49 = vld [vmem:[%s1 + $0x50] sm:$0xf]
  %v50 = vld [vmem:[%s1 + $0x54] sm:$0xf]
  %v51 = vld [vmem:[%s1 + $0x58] sm:$0xf]
  %v52 = vld [vmem:[%s1 + $0x5c] sm:$0xf]
  %v53 = vld [vmem:[%s1 + $0x60] sm:$0xf]
  %v54 = vld [vmem:[%s1 + $0x64] sm:$0xf]
  %v55 = vld [vmem:[%s1 + $0x68] sm:$0xf]
  %v56 = vld [vmem:[%s1 + $0x6c] sm:$0xf]
  %v57 = vld [vmem:[%s1 + $0x70] sm:$0xf]
  %v58 = vld [vmem:[%s1 + $0x74] sm:$0xf]
  %v59 = vld [vmem:[%s1 + $0x78] sm:$0xf]
  %v60 = vld [vmem:[%s1 + $0x7c] sm:$0xf]
  %v61 = vld [vmem:[%s1 + $0x80] sm:$0xf]
  %v62 = vld [vmem:[%s1 + $0x84] sm:$0xf]
  %v63 = vld [vmem:[%s1 + $0x88] sm:$0xf]
  %v64 = vld [vmem:[%s1 + $0x8c] sm:$0xf]
  %v65 = vld [vmem:[%s1 + $0x90] sm:$0xf]
  %v66 = vld [vmem:[%s1 + $0x94] sm:$0xf]
  %v67 = vld [vmem:[%s1 + $0x98] sm:$0xf]
  %v68 = vld [vmem:[%s1 + $0x9c] sm:$0xf]
  %v69 = vld [vmem:[%s1 + $0xa0] sm:$0xf]
  %v70 = vld [vmem:[%s1 + $0xa4] sm:$0xf]
  %v71 = vld [vmem:[%s1 + $0xa8] sm:$0xf]
  %v72 = vld [vmem:[%s1 + $0xac] sm:$0xf]
  %v73 = vld [vmem:[%s1 + $0xb0] sm:$0xf]
  %v74 = vld [vmem:[%s1 + $0xb4] sm:$0xf]
  %v75 = vld [vmem:[%s1 + $0xb8] sm:$0xf]
  %v76 = vld [vmem:[%s1 + $0xbc] sm:$0xf]
  %v77 = vld [vmem:[%s1 + $0xc0] sm:$0xf]
  %v78 = vld [vmem:[%s1 + $0xc4] sm:$0xf]
  %v79 = vld [vmem:[%s2] sm:$0x1]
  %v81 = vlaneseq
  %v82 = vshrl.u32 %v81, 7
  %v83 = vsub.s32 0, %v82
  %v84 = vrot.slane %v79, %v83
  %v88 = vunpack.c.l.b16 %v27
  %v89 = vunpack.c.h.b16 %v27
  %v90 = vunpack.c.l.b16 %v28
  %v91 = vunpack.c.h.b16 %v28
  %v92 = vpack.c.b16 %v88, %v88
  %v93 = vpack.c.b16 %v89, %v89
  %v94 = vpack.c.b16 %v90, %v90
  %v95 = vpack.c.b16 %v91, %v91
  %v149 = vunpack.c.l.b16 %v29
  %v150 = vunpack.c.l.b16 %v30
  %v151 = vunpack.c.l.b16 %v31
  %v152 = vunpack.c.l.b16 %v32
  %v153 = vunpack.c.l.b16 %v33
  %v154 = vunpack.c.l.b16 %v34
  %v155 = vunpack.c.l.b16 %v35
  %v156 = vunpack.c.l.b16 %v36
  %v157 = vunpack.c.l.b16 %v37
  %v158 = vunpack.c.l.b16 %v38
  %v159 = vunpack.c.l.b16 %v39
  %v160 = vunpack.c.l.b16 %v40
  %v161 = vunpack.c.l.b16 %v41
  %v162 = vunpack.c.l.b16 %v42
  %v163 = vunpack.c.l.b16 %v43
  %v164 = vunpack.c.l.b16 %v44
  %v165 = vunpack.c.l.b16 %v45
  %v166 = vunpack.c.l.b16 %v46
  %v167 = vunpack.c.l.b16 %v47
  %v168 = vunpack.c.l.b16 %v48
  %v169 = vunpack.c.l.b16 %v49
  %v170 = vunpack.c.l.b16 %v50
  %v171 = vunpack.c.l.b16 %v51
  %v172 = vunpack.c.l.b16 %v52
  %v173 = vunpack.c.l.b16 %v53
  %v174 = vunpack.c.l.b16 %v54
  %v175 = vunpack.c.l.b16 %v55
  %v176 = vunpack.c.l.b16 %v56
  %v177 = vunpack.c.l.b16 %v57
  %v178 = vunpack.c.l.b16 %v58
  %v179 = vunpack.c.l.b16 %v59
  %v180 = vunpack.c.l.b16 %v60
  %v181 = vunpack.c.l.b16 %v61
  %v182 = vunpack.c.l.b16 %v62
  %v183 = vunpack.c.l.b16 %v63
  %v184 = vunpack.c.l.b16 %v64
  %v185 = vunpack.c.l.b16 %v65
  %v186 = vunpack.c.l.b16 %v66
  %v187 = vunpack.c.l.b16 %v67
  %v188 = vunpack.c.l.b16 %v68
  %v189 = vunpack.c.l.b16 %v69
  %v190 = vunpack.c.l.b16 %v70
  %v191 = vunpack.c.l.b16 %v71
  %v192 = vunpack.c.l.b16 %v72
  %v193 = vunpack.c.l.b16 %v73
  %v194 = vunpack.c.l.b16 %v74
  %v195 = vunpack.c.l.b16 %v75
  %v196 = vunpack.c.l.b16 %v76
  %v197 = vunpack.c.l.b16 %v77
  %v198 = vunpack.c.l.b16 %v78
  %v199 = vpack.c.b16 %v150, %v149
  %v200 = vpack.c.b16 %v152, %v151
  %v201 = vpack.c.b16 %v154, %v153
  %v202 = vpack.c.b16 %v156, %v155
  %v203 = vpack.c.b16 %v158, %v157
  %v204 = vpack.c.b16 %v160, %v159
  %v205 = vpack.c.b16 %v162, %v161
  %v206 = vpack.c.b16 %v164, %v163
  %v207 = vpack.c.b16 %v166, %v165
  %v208 = vpack.c.b16 %v168, %v167
  %v209 = vpack.c.b16 %v170, %v169
  %v210 = vpack.c.b16 %v172, %v171
  %v211 = vpack.c.b16 %v174, %v173
  %v212 = vpack.c.b16 %v176, %v175
  %v213 = vpack.c.b16 %v178, %v177
  %v214 = vpack.c.b16 %v180, %v179
  %v215 = vpack.c.b16 %v182, %v181
  %v216 = vpack.c.b16 %v184, %v183
  %v217 = vpack.c.b16 %v186, %v185
  %v218 = vpack.c.b16 %v188, %v187
  %v219 = vpack.c.b16 %v190, %v189
  %v220 = vpack.c.b16 %v192, %v191
  %v221 = vpack.c.b16 %v194, %v193
  %v222 = vpack.c.b16 %v196, %v195
  %v223 = vpack.c.b16 %v198, %v197
  %vm249 = vcmask 130048
  %v251 = vsel %vm249, %v95, 0
  %253 = vmatprep.subr.bf16.mxu0 0
  %254 = vmatpush1.bf16.msra.mxu0 %v199
  %255 = vmatprep.subr.bf16.mxu0 0
  %256 = vmatpush1.bf16.msra.mxu0 %v200
  %257 = vmatprep.subr.bf16.mxu0 0
  %258 = vmatpush1.bf16.msra.mxu0 %v201
  %259 = vmatprep.subr.bf16.mxu0 0
  %260 = vmatpush1.bf16.msra.mxu0 %v202
  %261 = vmatprep.subr.bf16.mxu0 0
  %262 = vmatpush1.bf16.msra.mxu0 %v203
  %263 = vmatprep.subr.bf16.mxu0 0
  %264 = vmatpush1.bf16.msra.mxu0 %v204
  %265 = vmatprep.subr.bf16.mxu0 0
  %266 = vmatpush1.bf16.msra.mxu0 %v205
  %267 = vmatprep.subr.bf16.mxu0 0
  %268 = vmatpush1.bf16.msra.mxu0 %v206
  %269 = vmatprep.subr.bf16.mxu0 0
  %270 = vmatpush1.bf16.msra.mxu0 %v207
  %271 = vmatprep.subr.bf16.mxu0 0
  %272 = vmatpush1.bf16.msra.mxu0 %v208
  %273 = vmatprep.subr.bf16.mxu0 0
  %274 = vmatpush1.bf16.msra.mxu0 %v209
  %275 = vmatprep.subr.bf16.mxu0 0
  %276 = vmatpush1.bf16.msra.mxu0 %v210
  %277 = vmatprep.subr.bf16.mxu0 0
  %278 = vmatpush1.bf16.msra.mxu0 %v211
  %279 = vmatprep.subr.bf16.mxu0 0
  %280 = vmatpush1.bf16.msra.mxu0 %v212
  %281 = vmatprep.subr.bf16.mxu0 0
  %282 = vmatpush1.bf16.msra.mxu0 %v213
  %283 = vmatprep.subr.bf16.mxu0 0
  %284 = vmatpush1.bf16.msra.mxu0 %v214
  %285 = vmatprep.mubr.bf16.mxu0 %v93
  %286 = vmatmul.mubr.bf16.gmra.mrb[0].mxu0 %v92
  %v287 = vpop.f32.mrb[0].mxu0
  %v288 = vadd.f32 %v84, %v287
  %v289 = vpop.f32.mrb[0].mxu0
  %v290 = vpop.f32.mrb[0].mxu0
  %v291 = vpop.f32.mrb[0].mxu0
  %292 = vdwg.mxu0
  %293 = vmatprep.subr.bf16.mxu0 0
  %294 = vmatpush1.bf16.msra.mxu0 %v215
  %295 = vmatprep.subr.bf16.mxu0 0
  %296 = vmatpush1.bf16.msra.mxu0 %v216
  %297 = vmatprep.subr.bf16.mxu0 0
  %298 = vmatpush1.bf16.msra.mxu0 %v217
  %299 = vmatprep.subr.bf16.mxu0 0
  %300 = vmatpush1.bf16.msra.mxu0 %v218
  %301 = vmatprep.subr.bf16.mxu0 0
  %302 = vmatpush1.bf16.msra.mxu0 %v219
  %303 = vmatprep.subr.bf16.mxu0 0
  %304 = vmatpush1.bf16.msra.mxu0 %v220
  %305 = vmatprep.subr.bf16.mxu0 0
  %306 = vmatpush1.bf16.msra.mxu0 %v221
  %307 = vmatprep.subr.bf16.mxu0 0
  %308 = vmatpush1.bf16.msra.mxu0 %v222
  %309 = vmatprep.subr.bf16.mxu0 0
  %310 = vmatpush1.bf16.msra.mxu0 %v223
  %311 = vmatprep.subr.bf16.mxu0 0
  %312 = vmatpush1.bf16.msra.mxu0 0
  %313 = vmatprep.subr.bf16.mxu0 0
  %314 = vmatpush1.bf16.msra.mxu0 0
  %315 = vmatprep.subr.bf16.mxu0 0
  %316 = vmatpush1.bf16.msra.mxu0 0
  %317 = vmatprep.subr.bf16.mxu0 0
  %318 = vmatpush1.bf16.msra.mxu0 0
  %319 = vmatprep.subr.bf16.mxu0 0
  %320 = vmatpush1.bf16.msra.mxu0 0
  %321 = vmatprep.subr.bf16.mxu0 0
  %322 = vmatpush1.bf16.msra.mxu0 0
  %323 = vmatprep.subr.bf16.mxu0 0
  %324 = vmatpush1.bf16.msra.mxu0 0
  %325 = vmatprep.mubr.bf16.mxu0 %v251
  %326 = vmatmul.mubr.bf16.gmra.mrb[0].mxu0 %v94
  %v327 = vpop.f32.mrb[0].mxu0
  %v328 = vadd.f32 %v288, %v327
  %v329 = vpop.f32.mrb[0].mxu0
  %v330 = vpop.f32.mrb[0].mxu0
  %v331 = vpop.f32.mrb[0].mxu0
  %332 = vdwg.mxu0
  %v333 = vmax.f32 %v328, 0.0
  %v334 = vpack.c.bf16 %v333, %v333
  %v335 = vld [vmem:[%s3] sm:$0xf]
  %v336 = vld [vmem:[%s3 + $0x4] sm:$0xf]
  %v337 = vld [vmem:[%s3 + $0x8] sm:$0xf]
  %v338 = vld [vmem:[%s3 + $0xc] sm:$0xf]
  %v339 = vld [vmem:[%s3 + $0x10] sm:$0xf]
  %v340 = vld [vmem:[%s3 + $0x14] sm:$0xf]
  %v341 = vld [vmem:[%s3 + $0x18] sm:$0xf]
  %v342 = vld [vmem:[%s3 + $0x1c] sm:$0xf]
  %v343 = vld [vmem:[%s3 + $0x20] sm:$0xf]
  %v344 = vld [vmem:[%s3 + $0x24] sm:$0xf]
  %v345 = vld [vmem:[%s3 + $0x28] sm:$0xf]
  %v346 = vld [vmem:[%s3 + $0x2c] sm:$0xf]
  %v347 = vld [vmem:[%s3 + $0x30] sm:$0xf]
  %v348 = vld [vmem:[%s3 + $0x34] sm:$0xf]
  %v349 = vld [vmem:[%s3 + $0x38] sm:$0xf]
  %v350 = vld [vmem:[%s4] sm:$0x1]
  %v352 = vlaneseq
  %v353 = vshrl.u32 %v352, 7
  %v354 = vsub.s32 0, %v353
  %v355 = vrot.slane %v350, %v354
  %v372 = vunpack.c.l.b16 %v335
  %v373 = vunpack.c.l.b16 %v336
  %v374 = vunpack.c.l.b16 %v337
  %v375 = vunpack.c.l.b16 %v338
  %v376 = vunpack.c.l.b16 %v339
  %v377 = vunpack.c.l.b16 %v340
  %v378 = vunpack.c.l.b16 %v341
  %v379 = vunpack.c.l.b16 %v342
  %v380 = vunpack.c.l.b16 %v343
  %v381 = vunpack.c.l.b16 %v344
  %v382 = vunpack.c.l.b16 %v345
  %v383 = vunpack.c.l.b16 %v346
  %v384 = vunpack.c.l.b16 %v347
  %v385 = vunpack.c.l.b16 %v348
  %v386 = vunpack.c.l.b16 %v349
  %v387 = vpack.c.b16 %v373, %v372
  %v388 = vpack.c.b16 %v375, %v374
  %v389 = vpack.c.b16 %v377, %v376
  %v390 = vpack.c.b16 %v379, %v378
  %v391 = vpack.c.b16 %v381, %v380
  %v392 = vpack.c.b16 %v383, %v382
  %v393 = vpack.c.b16 %v385, %v384
  %v394 = vpack.c.b16 %v386, %v386
  %vm402 = vcmask 982016
  %v404 = vsel %vm402, %v334, 0
  %vm406 = vcmask 1043456
  %v408 = vsel %vm406, %v394, 0
  %410 = vmatprep.subr.bf16.mxu0 0
  %411 = vmatpush1.bf16.msra.mxu0 %v387
  %412 = vmatprep.subr.bf16.mxu0 0
  %413 = vmatpush1.bf16.msra.mxu0 %v388
  %414 = vmatprep.subr.bf16.mxu0 0
  %415 = vmatpush1.bf16.msra.mxu0 %v389
  %416 = vmatprep.subr.bf16.mxu0 0
  %417 = vmatpush1.bf16.msra.mxu0 %v390
  %418 = vmatprep.subr.bf16.mxu0 0
  %419 = vmatpush1.bf16.msra.mxu0 %v391
  %420 = vmatprep.subr.bf16.mxu0 0
  %421 = vmatpush1.bf16.msra.mxu0 %v392
  %422 = vmatprep.subr.bf16.mxu0 0
  %423 = vmatpush1.bf16.msra.mxu0 %v393
  %424 = vmatprep.subr.bf16.mxu0 0
  %425 = vmatpush1.bf16.msra.mxu0 %v408
  %426 = vmatprep.subr.bf16.mxu0 0
  %427 = vmatpush1.bf16.msra.mxu0 0
  %428 = vmatprep.subr.bf16.mxu0 0
  %429 = vmatpush1.bf16.msra.mxu0 0
  %430 = vmatprep.subr.bf16.mxu0 0
  %431 = vmatpush1.bf16.msra.mxu0 0
  %432 = vmatprep.subr.bf16.mxu0 0
  %433 = vmatpush1.bf16.msra.mxu0 0
  %434 = vmatprep.subr.bf16.mxu0 0
  %435 = vmatpush1.bf16.msra.mxu0 0
  %436 = vmatprep.subr.bf16.mxu0 0
  %437 = vmatpush1.bf16.msra.mxu0 0
  %438 = vmatprep.subr.bf16.mxu0 0
  %439 = vmatpush1.bf16.msra.mxu0 0
  %440 = vmatprep.subr.bf16.mxu0 0
  %441 = vmatpush1.bf16.msra.mxu0 0
  %442 = vmatprep.mubr.bf16.mxu0 0
  %443 = vmatmul.mubr.bf16.gmra.mrb[0].mxu0 %v404
  %v444 = vpop.f32.mrb[0].mxu0
  %v445 = vadd.f32 %v355, %v444
  %v446 = vpop.f32.mrb[0].mxu0
  %v447 = vpop.f32.mrb[0].mxu0
  %v448 = vpop.f32.mrb[0].mxu0
  %449 = vdwg.mxu0
  %v450 = vmax.f32 %v445, 0.0
  %v451 = vpack.c.bf16 %v450, %v450
  %v452 = vld [vmem:[%s5] sm:$0xf]
  %v453 = vld [vmem:[%s5 + $0x4] sm:$0xf]
  %v454 = vld [vmem:[%s5 + $0x8] sm:$0xf]
  %v455 = vld [vmem:[%s5 + $0xc] sm:$0xf]
  %v456 = vld [vmem:[%s5 + $0x10] sm:$0xf]
  %v457 = vld [vmem:[%s5 + $0x14] sm:$0xf]
  %v458 = vld [vmem:[%s5 + $0x18] sm:$0xf]
  %v459 = vld [vmem:[%s5 + $0x1c] sm:$0xf]
  %v460 = vld [vmem:[%s5 + $0x20] sm:$0xf]
  %v461 = vld [vmem:[%s5 + $0x24] sm:$0xf]
  %v462 = vld [vmem:[%s5 + $0x28] sm:$0x3]
  %v463 = vld [vmem:[%s6] sm:$0x1]
  %v465 = vlaneseq
  %v466 = vshrl.u32 %v465, 7
  %v467 = vsub.s32 0, %v466
  %v468 = vrot.slane %v463, %v467
  %v481 = vunpack.c.l.b16 %v452
  %v482 = vunpack.c.l.b16 %v453
  %v483 = vunpack.c.l.b16 %v454
  %v484 = vunpack.c.l.b16 %v455
  %v485 = vunpack.c.l.b16 %v456
  %v486 = vunpack.c.l.b16 %v457
  %v487 = vunpack.c.l.b16 %v458
  %v488 = vunpack.c.l.b16 %v459
  %v489 = vunpack.c.l.b16 %v460
  %v490 = vunpack.c.l.b16 %v461
  %v491 = vunpack.c.l.b16 %v462
  %v492 = vpack.c.b16 %v482, %v481
  %v493 = vpack.c.b16 %v484, %v483
  %v494 = vpack.c.b16 %v486, %v485
  %v495 = vpack.c.b16 %v488, %v487
  %v496 = vpack.c.b16 %v490, %v489
  %v497 = vpack.c.b16 %v491, %v491
  %vm503 = vcmask 687104
  %v505 = vsel %vm503, %v451, 0
  %vm507 = vcmask 1041408
  %v509 = vsel %vm507, %v497, 0
  %511 = vmatprep.subr.bf16.mxu0 0
  %512 = vmatpush1.bf16.msra.mxu0 %v492
  %513 = vmatprep.subr.bf16.mxu0 0
  %514 = vmatpush1.bf16.msra.mxu0 %v493
  %515 = vmatprep.subr.bf16.mxu0 0
  %516 = vmatpush1.bf16.msra.mxu0 %v494
  %517 = vmatprep.subr.bf16.mxu0 0
  %518 = vmatpush1.bf16.msra.mxu0 %v495
  %519 = vmatprep.subr.bf16.mxu0 0
  %520 = vmatpush1.bf16.msra.mxu0 %v496
  %521 = vmatprep.subr.bf16.mxu0 0
  %522 = vmatpush1.bf16.msra.mxu0 %v509
  %523 = vmatprep.subr.bf16.mxu0 0
  %524 = vmatpush1.bf16.msra.mxu0 0
  %525 = vmatprep.subr.bf16.mxu0 0
  %526 = vmatpush1.bf16.msra.mxu0 0
  %527 = vmatprep.subr.bf16.mxu0 0
  %528 = vmatpush1.bf16.msra.mxu0 0
  %529 = vmatprep.subr.bf16.mxu0 0
  %530 = vmatpush1.bf16.msra.mxu0 0
  %531 = vmatprep.subr.bf16.mxu0 0
  %532 = vmatpush1.bf16.msra.mxu0 0
  %533 = vmatprep.subr.bf16.mxu0 0
  %534 = vmatpush1.bf16.msra.mxu0 0
  %535 = vmatprep.subr.bf16.mxu0 0
  %536 = vmatpush1.bf16.msra.mxu0 0
  %537 = vmatprep.subr.bf16.mxu0 0
  %538 = vmatpush1.bf16.msra.mxu0 0
  %539 = vmatprep.subr.bf16.mxu0 0
  %540 = vmatpush1.bf16.msra.mxu0 0
  %541 = vmatprep.subr.bf16.mxu0 0
  %542 = vmatpush1.bf16.msra.mxu0 0
  %543 = vmatprep.mubr.bf16.mxu0 0
  %544 = vmatmul.mubr.bf16.gmra.mrb[0].mxu0 %v505
  %v545 = vpop.f32.mrb[0].mxu0
  %v546 = vadd.f32 %v468, %v545
  %v547 = vpop.f32.mrb[0].mxu0
  %v548 = vpop.f32.mrb[0].mxu0
  %v549 = vpop.f32.mrb[0].mxu0
  %550 = vdwg.mxu0
  %vm551 = vcmask 80896
  %552 = vst.msk [vmem:[%s7] sm:$0xff] %vm551, %v546
  // Predicated region
  $region30: #{net_forward.5} parent=0 // pred_check
    _
  $region31: #{net_forward.5} parent=0 // pred_check_branch
    %554 = sbr.rel (0) target = $region33
  $region32: #{net_forward.5} parent=0 // pred_region
    _
  $region33: #{net_forward.5} parent=0 // pred_fallthru
    _
  // Predicated region
  $region34: #{net_forward.5} parent=0 // pred_check
    _
  $region35: #{net_forward.5} parent=0 // pred_check_branch
    %556 = sbr.rel (0) target = $region37
  $region36: #{net_forward.5} parent=0 // pred_region
    _
  $region37: #{net_forward.5} parent=0 // pred_fallthru
    _

</llo_original>
